<compile_context>
chip_gen: v7x
topology: tpu7x:2x2x1
jax: 0.10.0
libtpu: 0.0.40
codegen_flags: <defaults>
</compile_context>

<pallas_src>
import functools
import math

import jax
import jax.numpy as jnp
from jax import lax
from jax.experimental import pallas as pl
from jax.experimental.pallas import tpu as pltpu


def _round_up(x, m):
    return (x + m - 1) // m * m


@functools.partial(jax.jit, static_argnames=("use_bias", "padding"))
def conv2d_pallas(x, kernel, bias, use_bias=True, padding="SAME"):
    """x: (N, C, H, W); kernel: (OC, C, KH, KW); bias: (OC,). Returns NCHW."""
    N, C, H, W = x.shape
    OC, _, KH, KW = kernel.shape
    itemsize = jnp.dtype(x.dtype).itemsize

    # --- the module's custom SAME padding rule (then a stride-1 valid conv) --
    if padding == "SAME":
        pad_l = KW // 2
        pad_r = (KW - (1 if KW % 2 == 0 else 0)) // 2
        pad_t = KH // 2
        pad_b = (KH - (1 if KH % 2 == 0 else 0)) // 2
    elif padding == "VALID":
        pad_l = pad_r = pad_t = pad_b = 0
    else:
        raise ValueError(f"unknown padding {padding!r}")

    Hp = H + pad_t + pad_b
    Wp = W + pad_l + pad_r
    Ho = Hp - KH + 1
    Wo = Wp - KW + 1

    # --- tiling --------------------------------------------------------------
    # Output columns padded to a multiple of 8 so the in-kernel
    # (TH, Wo_pad, C) -> (TH*Wo_pad, C) collapse is sublane-aligned.
    Wo_pad = _round_up(Wo, 8)
    # Rows per output tile: TH*Wo_pad must be a multiple of 128 whenever there
    # is more than one row tile (lane-dense, unmasked output stores).
    th_unit = 128 // math.gcd(Wo_pad, 128)          # <= 16 since Wo_pad % 8 == 0
    if th_unit >= Ho:
        TH = Ho                                      # single row tile
    else:
        target = max(th_unit, (2048 // Wo_pad) // th_unit * th_unit)
        TH = min(target, _round_up(Ho, th_unit))
    Ho_pad = _round_up(Ho, TH)
    TM = TH * Wo_pad
    M_pad = Ho_pad * Wo_pad

    C_pad = _round_up(C, 8)                          # contraction dim: pad to 8 only
    OC_pad = _round_up(OC, 128)
    TN = 256 if OC_pad % 256 == 0 else 128           # always divides OC_pad

    # --- pad + NHWC: the only wrapper passes over the input -----------------
    extra_b = (Ho_pad + KH - 1) - Hp                  # ragged last row tile stays in-bounds
    extra_r = (Wo_pad + KW - 1) - Wp                  # Wo -> Wo_pad extra columns
    xp = jnp.pad(x, ((0, 0), (0, C_pad - C),
                     (pad_t, pad_b + extra_b), (pad_l, pad_r + extra_r)))
    Hp_pad = Hp + extra_b
    Wp_pad = Wp + extra_r
    x_nhwc = jnp.transpose(xp, (0, 2, 3, 1))          # (N, Hp_pad, Wp_pad, C_pad)

    # Weights per tap: (OC, C, KH, KW) -> (KH*KW, C_pad, OC_pad)
    w_taps = jnp.transpose(kernel, (2, 3, 1, 0)).reshape(KH * KW, C, OC)
    w_taps = jnp.pad(w_taps, ((0, 0), (0, C_pad - C), (0, OC_pad - OC)))

    b_vec = bias if use_bias else jnp.zeros_like(bias)
    b_row = jnp.pad(b_vec, (0, OC_pad - OC)).reshape(1, OC_pad)

    grid = (N, OC_pad // TN, Ho_pad // TH)            # (batch, OC tile, row tile)

    def kernel_fn(x_ref, w_ref, b_ref, o_ref):
        # x_ref: (1, Hp_pad, Wp_pad, C_pad)  full padded image, resident per n
        # w_ref: (KH*KW, C_pad, TN)          per-tap weights for this OC tile
        # b_ref: (1, TN)
        # o_ref: (1, TN, TM)                 NCHW output tile (flattened rows)
        i = pl.program_id(2)
        row0 = pl.multiple_of(i * TH, TH)
        acc = jnp.zeros((TM, TN), jnp.float32)
        for dy in range(KH):
            rows = x_ref[0, pl.ds(row0 + dy, TH), :, :]        # (TH, Wp_pad, C_pad)
            for dx in range(KW):
                tap = rows[:, dx:dx + Wo_pad, :].reshape(TM, C_pad)
                acc = acc + jnp.dot(tap, w_ref[dy * KW + dx],
                                    preferred_element_type=jnp.float32)
        acc = acc + b_ref[...].astype(jnp.float32)
        o_ref[0] = acc.astype(o_ref.dtype).T                   # (TN, TM) -> NCHW

    # VMEM budget: resident image + weight/bias/output blocks (double-buffered)
    # plus the f32 accumulator working set; clamp to [32 MiB, 64 MiB]
    # (v7x has 64 MiB physical per core, v5e/v6e have 128 MiB).
    x_blk = Hp_pad * _round_up(Wp_pad, 8) * _round_up(C_pad, 128) * itemsize
    w_blk = KH * KW * C_pad * TN * itemsize
    o_blk = TN * TM * itemsize
    acc_b = TM * max(TN, 128) * 4
    vmem_need = 2 * (x_blk + w_blk + o_blk + 8 * TN * itemsize) + 4 * acc_b + (2 << 20)
    vmem_limit = int(min(max(vmem_need, 32 * 1024 * 1024), 64 * 1024 * 1024))

    cost = pl.CostEstimate(
        flops=2 * N * Ho * Wo * KH * KW * C * OC,
        transcendentals=0,
        bytes_accessed=int((N * Hp_pad * Wp_pad * C_pad
                            + KH * KW * C_pad * OC_pad
                            + OC_pad
                            + N * OC_pad * M_pad) * itemsize),
    )

    out_padded = pl.pallas_call(
        kernel_fn,
        out_shape=jax.ShapeDtypeStruct((N, OC_pad, M_pad), x.dtype),
        grid=grid,
        in_specs=[
            # Full image per batch element: block index depends only on n, so
            # the image is DMA'd once and stays resident across the OC / row
            # sweeps (no HBM im2col, input read ~once).
            pl.BlockSpec((1, Hp_pad, Wp_pad, C_pad), lambda n, j, i: (n, 0, 0, 0)),
            # Weight tile changes only with the OC tile (outside the row axis),
            # so the weight tensor is streamed at most once per image.
            pl.BlockSpec((KH * KW, C_pad, TN), lambda n, j, i: (0, 0, j)),
            pl.BlockSpec((1, TN), lambda n, j, i: (0, j)),
        ],
        out_specs=pl.BlockSpec((1, TN, TM), lambda n, j, i: (n, j, i)),
        compiler_params=pltpu.CompilerParams(
            dimension_semantics=("parallel", "parallel", "parallel"),
            vmem_limit_bytes=vmem_limit),
        cost_estimate=cost,
    )(x_nhwc, w_taps, b_row)

    # (N, OC_pad, Ho_pad*Wo_pad) -> NCHW, stripping channel / spatial padding.
    out = out_padded.reshape(N, OC_pad, Ho_pad, Wo_pad)[:, :OC, :Ho, :Wo]
    return out


class Conv2dPallas:
    """Mirror of the PyTorch Conv2d module, with deterministic init."""

    def __init__(self, in_channels, out_channels, kernel_size,
                 use_bias=True, padding="SAME", key=None):
        key = jax.random.PRNGKey(0) if key is None else key
        self.kernel = 0.05 * jax.random.normal(
            key, (out_channels, in_channels, kernel_size[0], kernel_size[1]),
            dtype=jnp.float32)
        self.bias = jnp.zeros((out_channels,), jnp.float32)
        self.use_bias = use_bias
        self.padding = padding

    def __call__(self, x):
        # PyTorch forward adds the bias unless use_bias is None.
        return conv2d_pallas(x, self.kernel, self.bias,
                             use_bias=self.use_bias is not None,
                             padding=self.padding)


def _same_pads(KH, KW):
    pad_l = KW // 2
    pad_r = (KW - (1 if KW % 2 == 0 else 0)) // 2
    pad_t = KH // 2
    pad_b = (KH - (1 if KH % 2 == 0 else 0)) // 2
    return pad_t, pad_b, pad_l, pad_r


def _reference(x, kernel, bias, KH, KW):
    pad_t, pad_b, pad_l, pad_r = _same_pads(KH, KW)
    ref = lax.conv_general_dilated(
        x, kernel, window_strides=(1, 1),
        padding=((pad_t, pad_b), (pad_l, pad_r)),
        dimension_numbers=("NCHW", "OIHW", "NCHW"),
        precision=lax.Precision.HIGHEST)
    if bias is not None:
        ref = ref + bias[None, :, None, None]
    return ref


if __name__ == "__main__":
    key = jax.random.PRNGKey(0)
    k_x, k_w, k_x2, k_w2 = jax.random.split(key, 4)

    # --- primary check: module-sized shapes ---------------------------------
    N, C, H, W = 2, 4, 16, 16
    OC, KH, KW = 8, 3, 3
    x = jax.random.normal(k_x, (N, C, H, W), dtype=jnp.float32)

    mod = Conv2dPallas(C, OC, (KH, KW), use_bias=True, padding="SAME", key=k_w)
    out = jax.block_until_ready(mod(x))
    assert out.shape == (N, OC, H, W), out.shape
    ref = _reference(x, mod.kernel, mod.bias, KH, KW)
    assert jnp.allclose(out, ref, atol=2e-4, rtol=2e-4), "mismatch vs reference"

    # use_bias=None path (bias omitted, per the PyTorch forward).
    mod_nb = Conv2dPallas(C, OC, (KH, KW), use_bias=None, padding="SAME", key=k_w)
    out_nb = jax.block_until_ready(mod_nb(x))
    ref_nb = _reference(x, mod_nb.kernel, None, KH, KW)
    assert jnp.allclose(out_nb, ref_nb, atol=2e-4, rtol=2e-4), "mismatch (no bias)"

    # --- secondary check: exercises multiple OC tiles (OC_pad=384, TN=128),
    # multiple + ragged row tiles, and the Wo->Wo_pad column padding ----------
    N2, C2, H2, W2 = 2, 3, 60, 60
    OC2 = 300
    x2 = jax.random.normal(k_x2, (N2, C2, H2, W2), dtype=jnp.float32)
    mod2 = Conv2dPallas(C2, OC2, (KH, KW), use_bias=True, padding="SAME", key=k_w2)
    out2 = jax.block_until_ready(mod2(x2))
    assert out2.shape == (N2, OC2, H2, W2), out2.shape
    ref2 = _reference(x2, mod2.kernel, mod2.bias, KH, KW)
    assert jnp.allclose(out2, ref2, atol=2e-4, rtol=2e-4), "mismatch (tiled case)"

    print("KERNEL_OK")
</pallas_src>

<mosaic_0001>
module attributes {stable_mosaic.version = 11 : i64} {
  func.func @kernel_fn(%arg0: i32, %arg1: i32, %arg2: i32, %arg3: memref<1x18x18x8xf32, #tpu.memory_space<vmem>>, %arg4: memref<9x8x128xf32, #tpu.memory_space<vmem>>, %arg5: memref<1x128xf32, #tpu.memory_space<vmem>>, %arg6: memref<1x128x256xf32, #tpu.memory_space<vmem>>) attributes {dimension_semantics = [#tpu.dimension_semantics<parallel>, #tpu.dimension_semantics<parallel>, #tpu.dimension_semantics<parallel>], iteration_bounds = array<i64: 2, 1, 1>, scalar_prefetch = 0 : i64, scratch_operands = 0 : i64, tpu.core_type = #tpu.core_type<tc>, window_params = [{transform_indices = @transform_0, window_bounds = array<i64: 1, 18, 18, 8>}, {transform_indices = @transform_1, window_bounds = array<i64: 9, 8, 128>}, {transform_indices = @transform_2, window_bounds = array<i64: 1, 128>}, {transform_indices = @transform_3, window_bounds = array<i64: 1, 128, 256>}]} {
    %c16_i32 = arith.constant 16 : i32
    %0 = arith.muli %arg2, %c16_i32 : i32
    %1 = tpu.assume_multiple %0, 16 : i32
    %cst = arith.constant 0.000000e+00 : f32
    %2 = vector.broadcast %cst : f32 to vector<256x128xf32>
    %c0_i32 = arith.constant 0 : i32
    %3 = arith.addi %1, %c0_i32 : i32
    %c0 = arith.constant 0 : index
    %4 = arith.index_cast %3 : i32 to index
    %c0_0 = arith.constant 0 : index
    %c0_1 = arith.constant 0 : index
    %5 = vector.load %arg3[%c0, %4, %c0_0, %c0_1] : memref<1x18x18x8xf32, #tpu.memory_space<vmem>>, vector<1x16x18x8xf32>
    %6 = vector.shape_cast %5 : vector<1x16x18x8xf32> to vector<16x18x8xf32>
    %7 = vector.extract_strided_slice %6 {offsets = [0, 0, 0], sizes = [16, 16, 8], strides = [1, 1, 1]} : vector<16x18x8xf32> to vector<16x16x8xf32>
    %8 = vector.shape_cast %7 : vector<16x16x8xf32> to vector<256x8xf32>
    %c0_2 = arith.constant 0 : index
    %c0_3 = arith.constant 0 : index
    %c0_4 = arith.constant 0 : index
    %9 = vector.load %arg4[%c0_2, %c0_3, %c0_4] : memref<9x8x128xf32, #tpu.memory_space<vmem>>, vector<1x8x128xf32>
    %10 = vector.shape_cast %9 : vector<1x8x128xf32> to vector<8x128xf32>
    %cst_5 = arith.constant dense<0.000000e+00> : vector<256x128xf32>
    %11 = tpu.matmul %8, %10, %cst_5 {dimension_numbers = #tpu.dot_dimension_numbers<[1], [0], [0], [1], [0, 0, 1, 1], [], []>} : vector<256x8xf32>, vector<8x128xf32>, vector<256x128xf32> -> vector<256x128xf32>
    %12 = arith.addf %2, %11 : vector<256x128xf32>
    %13 = vector.extract_strided_slice %6 {offsets = [0, 1, 0], sizes = [16, 16, 8], strides = [1, 1, 1]} : vector<16x18x8xf32> to vector<16x16x8xf32>
    %14 = vector.shape_cast %13 : vector<16x16x8xf32> to vector<256x8xf32>
    %c1 = arith.constant 1 : index
    %c0_6 = arith.constant 0 : index
    %c0_7 = arith.constant 0 : index
    %15 = vector.load %arg4[%c1, %c0_6, %c0_7] : memref<9x8x128xf32, #tpu.memory_space<vmem>>, vector<1x8x128xf32>
    %16 = vector.shape_cast %15 : vector<1x8x128xf32> to vector<8x128xf32>
    %cst_8 = arith.constant dense<0.000000e+00> : vector<256x128xf32>
    %17 = tpu.matmul %14, %16, %cst_8 {dimension_numbers = #tpu.dot_dimension_numbers<[1], [0], [0], [1], [0, 0, 1, 1], [], []>} : vector<256x8xf32>, vector<8x128xf32>, vector<256x128xf32> -> vector<256x128xf32>
    %18 = arith.addf %12, %17 : vector<256x128xf32>
    %19 = vector.extract_strided_slice %6 {offsets = [0, 2, 0], sizes = [16, 16, 8], strides = [1, 1, 1]} : vector<16x18x8xf32> to vector<16x16x8xf32>
    %20 = vector.shape_cast %19 : vector<16x16x8xf32> to vector<256x8xf32>
    %c2 = arith.constant 2 : index
    %c0_9 = arith.constant 0 : index
    %c0_10 = arith.constant 0 : index
    %21 = vector.load %arg4[%c2, %c0_9, %c0_10] : memref<9x8x128xf32, #tpu.memory_space<vmem>>, vector<1x8x128xf32>
    %22 = vector.shape_cast %21 : vector<1x8x128xf32> to vector<8x128xf32>
    %cst_11 = arith.constant dense<0.000000e+00> : vector<256x128xf32>
    %23 = tpu.matmul %20, %22, %cst_11 {dimension_numbers = #tpu.dot_dimension_numbers<[1], [0], [0], [1], [0, 0, 1, 1], [], []>} : vector<256x8xf32>, vector<8x128xf32>, vector<256x128xf32> -> vector<256x128xf32>
    %24 = arith.addf %18, %23 : vector<256x128xf32>
    %c1_i32 = arith.constant 1 : i32
    %25 = arith.addi %1, %c1_i32 : i32
    %c0_12 = arith.constant 0 : index
    %26 = arith.index_cast %25 : i32 to index
    %c0_13 = arith.constant 0 : index
    %c0_14 = arith.constant 0 : index
    %27 = vector.load %arg3[%c0_12, %26, %c0_13, %c0_14] : memref<1x18x18x8xf32, #tpu.memory_space<vmem>>, vector<1x16x18x8xf32>
    %28 = vector.shape_cast %27 : vector<1x16x18x8xf32> to vector<16x18x8xf32>
    %29 = vector.extract_strided_slice %28 {offsets = [0, 0, 0], sizes = [16, 16, 8], strides = [1, 1, 1]} : vector<16x18x8xf32> to vector<16x16x8xf32>
    %30 = vector.shape_cast %29 : vector<16x16x8xf32> to vector<256x8xf32>
    %c3 = arith.constant 3 : index
    %c0_15 = arith.constant 0 : index
    %c0_16 = arith.constant 0 : index
    %31 = vector.load %arg4[%c3, %c0_15, %c0_16] : memref<9x8x128xf32, #tpu.memory_space<vmem>>, vector<1x8x128xf32>
    %32 = vector.shape_cast %31 : vector<1x8x128xf32> to vector<8x128xf32>
    %cst_17 = arith.constant dense<0.000000e+00> : vector<256x128xf32>
    %33 = tpu.matmul %30, %32, %cst_17 {dimension_numbers = #tpu.dot_dimension_numbers<[1], [0], [0], [1], [0, 0, 1, 1], [], []>} : vector<256x8xf32>, vector<8x128xf32>, vector<256x128xf32> -> vector<256x128xf32>
    %34 = arith.addf %24, %33 : vector<256x128xf32>
    %35 = vector.extract_strided_slice %28 {offsets = [0, 1, 0], sizes = [16, 16, 8], strides = [1, 1, 1]} : vector<16x18x8xf32> to vector<16x16x8xf32>
    %36 = vector.shape_cast %35 : vector<16x16x8xf32> to vector<256x8xf32>
    %c4 = arith.constant 4 : index
    %c0_18 = arith.constant 0 : index
    %c0_19 = arith.constant 0 : index
    %37 = vector.load %arg4[%c4, %c0_18, %c0_19] : memref<9x8x128xf32, #tpu.memory_space<vmem>>, vector<1x8x128xf32>
    %38 = vector.shape_cast %37 : vector<1x8x128xf32> to vector<8x128xf32>
    %cst_20 = arith.constant dense<0.000000e+00> : vector<256x128xf32>
    %39 = tpu.matmul %36, %38, %cst_20 {dimension_numbers = #tpu.dot_dimension_numbers<[1], [0], [0], [1], [0, 0, 1, 1], [], []>} : vector<256x8xf32>, vector<8x128xf32>, vector<256x128xf32> -> vector<256x128xf32>
    %40 = arith.addf %34, %39 : vector<256x128xf32>
    %41 = vector.extract_strided_slice %28 {offsets = [0, 2, 0], sizes = [16, 16, 8], strides = [1, 1, 1]} : vector<16x18x8xf32> to vector<16x16x8xf32>
    %42 = vector.shape_cast %41 : vector<16x16x8xf32> to vector<256x8xf32>
    %c5 = arith.constant 5 : index
    %c0_21 = arith.constant 0 : index
    %c0_22 = arith.constant 0 : index
    %43 = vector.load %arg4[%c5, %c0_21, %c0_22] : memref<9x8x128xf32, #tpu.memory_space<vmem>>, vector<1x8x128xf32>
    %44 = vector.shape_cast %43 : vector<1x8x128xf32> to vector<8x128xf32>
    %cst_23 = arith.constant dense<0.000000e+00> : vector<256x128xf32>
    %45 = tpu.matmul %42, %44, %cst_23 {dimension_numbers = #tpu.dot_dimension_numbers<[1], [0], [0], [1], [0, 0, 1, 1], [], []>} : vector<256x8xf32>, vector<8x128xf32>, vector<256x128xf32> -> vector<256x128xf32>
    %46 = arith.addf %40, %45 : vector<256x128xf32>
    %c2_i32 = arith.constant 2 : i32
    %47 = arith.addi %1, %c2_i32 : i32
    %c0_24 = arith.constant 0 : index
    %48 = arith.index_cast %47 : i32 to index
    %c0_25 = arith.constant 0 : index
    %c0_26 = arith.constant 0 : index
    %49 = vector.load %arg3[%c0_24, %48, %c0_25, %c0_26] : memref<1x18x18x8xf32, #tpu.memory_space<vmem>>, vector<1x16x18x8xf32>
    %50 = vector.shape_cast %49 : vector<1x16x18x8xf32> to vector<16x18x8xf32>
    %51 = vector.extract_strided_slice %50 {offsets = [0, 0, 0], sizes = [16, 16, 8], strides = [1, 1, 1]} : vector<16x18x8xf32> to vector<16x16x8xf32>
    %52 = vector.shape_cast %51 : vector<16x16x8xf32> to vector<256x8xf32>
    %c6 = arith.constant 6 : index
    %c0_27 = arith.constant 0 : index
    %c0_28 = arith.constant 0 : index
    %53 = vector.load %arg4[%c6, %c0_27, %c0_28] : memref<9x8x128xf32, #tpu.memory_space<vmem>>, vector<1x8x128xf32>
    %54 = vector.shape_cast %53 : vector<1x8x128xf32> to vector<8x128xf32>
    %cst_29 = arith.constant dense<0.000000e+00> : vector<256x128xf32>
    %55 = tpu.matmul %52, %54, %cst_29 {dimension_numbers = #tpu.dot_dimension_numbers<[1], [0], [0], [1], [0, 0, 1, 1], [], []>} : vector<256x8xf32>, vector<8x128xf32>, vector<256x128xf32> -> vector<256x128xf32>
    %56 = arith.addf %46, %55 : vector<256x128xf32>
    %57 = vector.extract_strided_slice %50 {offsets = [0, 1, 0], sizes = [16, 16, 8], strides = [1, 1, 1]} : vector<16x18x8xf32> to vector<16x16x8xf32>
    %58 = vector.shape_cast %57 : vector<16x16x8xf32> to vector<256x8xf32>
    %c7 = arith.constant 7 : index
    %c0_30 = arith.constant 0 : index
    %c0_31 = arith.constant 0 : index
    %59 = vector.load %arg4[%c7, %c0_30, %c0_31] : memref<9x8x128xf32, #tpu.memory_space<vmem>>, vector<1x8x128xf32>
    %60 = vector.shape_cast %59 : vector<1x8x128xf32> to vector<8x128xf32>
    %cst_32 = arith.constant dense<0.000000e+00> : vector<256x128xf32>
    %61 = tpu.matmul %58, %60, %cst_32 {dimension_numbers = #tpu.dot_dimension_numbers<[1], [0], [0], [1], [0, 0, 1, 1], [], []>} : vector<256x8xf32>, vector<8x128xf32>, vector<256x128xf32> -> vector<256x128xf32>
    %62 = arith.addf %56, %61 : vector<256x128xf32>
    %63 = vector.extract_strided_slice %50 {offsets = [0, 2, 0], sizes = [16, 16, 8], strides = [1, 1, 1]} : vector<16x18x8xf32> to vector<16x16x8xf32>
    %64 = vector.shape_cast %63 : vector<16x16x8xf32> to vector<256x8xf32>
    %c8 = arith.constant 8 : index
    %c0_33 = arith.constant 0 : index
    %c0_34 = arith.constant 0 : index
    %65 = vector.load %arg4[%c8, %c0_33, %c0_34] : memref<9x8x128xf32, #tpu.memory_space<vmem>>, vector<1x8x128xf32>
    %66 = vector.shape_cast %65 : vector<1x8x128xf32> to vector<8x128xf32>
    %cst_35 = arith.constant dense<0.000000e+00> : vector<256x128xf32>
    %67 = tpu.matmul %64, %66, %cst_35 {dimension_numbers = #tpu.dot_dimension_numbers<[1], [0], [0], [1], [0, 0, 1, 1], [], []>} : vector<256x8xf32>, vector<8x128xf32>, vector<256x128xf32> -> vector<256x128xf32>
    %68 = arith.addf %62, %67 : vector<256x128xf32>
    %c0_36 = arith.constant 0 : index
    %c0_37 = arith.constant 0 : index
    %69 = vector.load %arg5[%c0_36, %c0_37] : memref<1x128xf32, #tpu.memory_space<vmem>>, vector<1x128xf32>
    %70 = vector.broadcast %69 : vector<1x128xf32> to vector<256x128xf32>
    %71 = arith.addf %68, %70 : vector<256x128xf32>
    %72 = tpu.transpose %71, [1, 0] : vector<256x128xf32> -> vector<128x256xf32>
    %c0_38 = arith.constant 0 : index
    %c0_39 = arith.constant 0 : index
    %c0_40 = arith.constant 0 : index
    %73 = vector.load %arg6[%c0_38, %c0_39, %c0_40] : memref<1x128x256xf32, #tpu.memory_space<vmem>>, vector<1x128x256xf32>
    %74 = vector.shape_cast %73 : vector<1x128x256xf32> to vector<128x256xf32>
    %75 = vector.shape_cast %72 : vector<128x256xf32> to vector<1x128x256xf32>
    tpu.vector_store %arg6[%c0_38, %c0_39, %c0_40], %75 {strides = array<i32>} : memref<1x128x256xf32, #tpu.memory_space<vmem>>, vector<1x128x256xf32>,
    return
  }
  func.func @transform_0(%arg0: i32, %arg1: i32, %arg2: i32) -> (i32, i32, i32, i32) {
    %c0_i32 = arith.constant 0 : i32
    %c0_i32_0 = arith.constant 0 : i32
    %c0_i32_1 = arith.constant 0 : i32
    %c0_i32_2 = arith.constant 0 : i32
    return %arg0, %c0_i32, %c0_i32_0, %c0_i32_1 : i32, i32, i32, i32
  }
  func.func @transform_1(%arg0: i32, %arg1: i32, %arg2: i32) -> (i32, i32, i32) {
    %c0_i32 = arith.constant 0 : i32
    %c0_i32_0 = arith.constant 0 : i32
    %c0_i32_1 = arith.constant 0 : i32
    return %c0_i32, %c0_i32_0, %arg1 : i32, i32, i32
  }
  func.func @transform_2(%arg0: i32, %arg1: i32, %arg2: i32) -> (i32, i32) {
    %c0_i32 = arith.constant 0 : i32
    %c0_i32_0 = arith.constant 0 : i32
    return %c0_i32, %arg1 : i32, i32
  }
  func.func @transform_3(%arg0: i32, %arg1: i32, %arg2: i32) -> (i32, i32, i32) {
    %c0_i32 = arith.constant 0 : i32
    return %arg0, %arg1, %arg2 : i32, i32, i32
  }
}

</mosaic_0001>

<llo_original>
// kernel: conv2d_pallas.1
$region0: #{conv2d_pallas.1}
  #allocation0 [shape = 'u32[]', space=smem, size = 0x4, offset = 0x4, fixed_abs, tag = 'smem constant byte address 0x4 - core index']
  #allocation1 [shape = 'u32[144,128]{1,0:T(1,128)}', space=vmem, size = 0x12000, scoped, tag = 'internal scratch']
  %s0 = inlined_call_operand.vmem [shape: f32[2,18,18,8], index: 0, kind: input, shape index: {}]
  %s1 = inlined_call_operand.vmem [shape: f32[9,8,128], index: 1, kind: input, shape index: {}]
  %s2 = inlined_call_operand.vmem [shape: f32[1,128], index: 2, kind: input, shape index: {}]
  %s3 = inlined_call_operand.vmem [shape: f32[2,128,256], index: 3, kind: output, shape index: {}]
  %s4 = sld [smem:[#allocation0]]
  $region45: #{conv2d_pallas.1} parent=0
    _
  %s6 = ssub.s32 1, %s4
  %s7 = scalar_select 0, %s6, %s4
  loop: start=0, step=1, limit=4
  $region2: #{conv2d_pallas.1} parent=0 // loop_pre_header
    _
  $region3: #{conv2d_pallas.1} parent=0 // loop_header
    %s9 = sphi 0, %s13
    %p10 = scmp.ge.s32.totalorder %s9, 4
    %s16 = sphi 0, %s35
    %s17 = sphi 0, %s31
    %s18 = sphi 0, %s27
    %s19 = sphi 0, %s16
    %s20 = sphi 0, %s17
    %s21 = sphi 0, %s18
    %s22 = sphi 0, %s19
    %s23 = sphi 0, %s20
    %s24 = sphi 0, %s21
    %s38 = sphi 0, %s40
    %s41 = sphi 0, %s38
    %s42 = sphi 0, %s41
    %s58 = sphi 0, %s42
    %s64 = sphi 0, %s66
    %s67 = sphi 0, %s64
    %s68 = sphi 0, %s67
    %s84 = sphi 0, %s68
    %s90 = sphi 0, %s92
    %s93 = sphi 0, %s90
    %s94 = sphi 0, %s93
    %s110 = sphi 0, %s94
    %s120 = sphi 0, %s122
    %s123 = sphi 0, %s120
    %s124 = sphi 0, %s123
    %s140 = sphi 0, %s124
  $region4: #{conv2d_pallas.1} parent=0 // loop_header_branch
    %12 = sbr.rel (%p10) target = $region8
  $region5: #{conv2d_pallas.1} parent=0 // loop_body
    %s14 = ssub.s32 %s9, 1
    %s15 = ssub.s32 %s9, 2
    %s25 = sadd.s32 1, %s18
    %p26 = scmp.ge.s32.totalorder %s25, 1
    %s27 = scalar_select %p26, 0, %s25
    %s28 = sadd.s32 1, %s17
    %s29 = scalar_select %p26, %s28, %s17
    %p30 = scmp.ge.s32.totalorder %s29, 1
    %s31 = scalar_select %p30, 0, %s29
    %s32 = sadd.s32 1, %s16
    %s33 = scalar_select %p30, %s32, %s16
    %p34 = scmp.ge.s32.totalorder %s33, 2
    %s35 = scalar_select %p34, 0, %s33
    %s36 = ssub.s32 %s16, %s35
    %p37 = scmp.eq.s32.totalorder %s36, 0
    %s39 = sadd.s32 %s38, 1
    %s40 = scalar_select %p37, %s38, %s39
    %p43 = pneg %p37
    %p44 = scmp.eq.s32.totalorder %s9, 1
    %p45 = por %p43, %p44
    %p46 = scmp.ne.s32.totalorder %s38, %s41
    %p47 = scmp.eq.s32.totalorder %s9, 0
    %p48 = por %p46, %p47
    %p49 = scmp.ne.s32.totalorder %s38, %s41
    %p50 = scmp.eq.s32.totalorder %s14, 1
    %p51 = por %p49, %p50
    %p52 = scmp.ne.s32.totalorder %s41, %s42
    %p53 = scmp.eq.s32.totalorder %s14, 0
    %p54 = por %p52, %p53
    %p55 = scmp.ne.s32.totalorder %s41, %s42
    %p56 = scmp.eq.s32.totalorder %s15, 1
    %p57 = por %p55, %p56
    %p59 = scmp.ne.s32.totalorder %s42, %s58
    %p60 = scmp.eq.s32.totalorder %s15, 0
    %p61 = por %p59, %p60
    %s62 = ssub.s32 %s17, %s31
    %p63 = scmp.eq.s32.totalorder %s62, 0
    %s65 = sadd.s32 %s64, 1
    %s66 = scalar_select %p63, %s64, %s65
    %p69 = pneg %p63
    %p70 = scmp.eq.s32.totalorder %s9, 1
    %p71 = por %p69, %p70
    %p72 = scmp.ne.s32.totalorder %s64, %s67
    %p73 = scmp.eq.s32.totalorder %s9, 0
    %p74 = por %p72, %p73
    %p75 = scmp.ne.s32.totalorder %s64, %s67
    %p76 = scmp.eq.s32.totalorder %s14, 1
    %p77 = por %p75, %p76
    %p78 = scmp.ne.s32.totalorder %s67, %s68
    %p79 = scmp.eq.s32.totalorder %s14, 0
    %p80 = por %p78, %p79
    %p81 = scmp.ne.s32.totalorder %s67, %s68
    %p82 = scmp.eq.s32.totalorder %s15, 1
    %p83 = por %p81, %p82
    %p85 = scmp.ne.s32.totalorder %s68, %s84
    %p86 = scmp.eq.s32.totalorder %s15, 0
    %p87 = por %p85, %p86
    %s88 = ssub.s32 %s17, %s31
    %p89 = scmp.eq.s32.totalorder %s88, 0
    %s91 = sadd.s32 %s90, 1
    %s92 = scalar_select %p89, %s90, %s91
    %p95 = pneg %p89
    %p96 = scmp.eq.s32.totalorder %s9, 1
    %p97 = por %p95, %p96
    %p98 = scmp.ne.s32.totalorder %s90, %s93
    %p99 = scmp.eq.s32.totalorder %s9, 0
    %p100 = por %p98, %p99
    %p101 = scmp.ne.s32.totalorder %s90, %s93
    %p102 = scmp.eq.s32.totalorder %s14, 1
    %p103 = por %p101, %p102
    %p104 = scmp.ne.s32.totalorder %s93, %s94
    %p105 = scmp.eq.s32.totalorder %s14, 0
    %p106 = por %p104, %p105
    %p107 = scmp.ne.s32.totalorder %s93, %s94
    %p108 = scmp.eq.s32.totalorder %s15, 1
    %p109 = por %p107, %p108
    %p111 = scmp.ne.s32.totalorder %s94, %s110
    %p112 = scmp.eq.s32.totalorder %s15, 0
    %p113 = por %p111, %p112
    %s114 = ssub.s32 %s16, %s35
    %s115 = ssub.s32 %s17, %s31
    %s116 = sor.u32 %s114, %s115
    %s117 = ssub.s32 %s18, %s27
    %s118 = sor.u32 %s116, %s117
    %p119 = scmp.eq.s32.totalorder %s118, 0
    %s121 = sadd.s32 %s120, 1
    %s122 = scalar_select %p119, %s120, %s121
    %p125 = pneg %p119
    %p126 = scmp.eq.s32.totalorder %s9, 1
    %p127 = por %p125, %p126
    %p128 = scmp.ne.s32.totalorder %s120, %s123
    %p129 = scmp.eq.s32.totalorder %s9, 0
    %p130 = por %p128, %p129
    %p131 = scmp.ne.s32.totalorder %s120, %s123
    %p132 = scmp.eq.s32.totalorder %s14, 1
    %p133 = por %p131, %p132
    %p134 = scmp.ne.s32.totalorder %s123, %s124
    %p135 = scmp.eq.s32.totalorder %s14, 0
    %p136 = por %p134, %p135
    %p137 = scmp.ne.s32.totalorder %s123, %s124
    %p138 = scmp.eq.s32.totalorder %s15, 1
    %p139 = por %p137, %p138
    %p141 = scmp.ne.s32.totalorder %s124, %s140
    %p142 = scmp.eq.s32.totalorder %s15, 0
    %p143 = por %p141, %p142
    %p144 = scmp.le.s32.totalorder 1, %s9
    %p145 = scmp.lt.s32.totalorder %s9, 3
    %p146 = pnand %p144, %p145
    %p147 = pneg %p146
    // Predicated region
    $region9: #{conv2d_pallas.1} parent=5 // pred_check
      _
    $region10: #{conv2d_pallas.1} parent=5 // pred_check_branch
      %149 = sbr.rel (%p146) target = $region12
    $region11: #{conv2d_pallas.1} parent=5 // pred_region
      %s150 = ssub.s32 %s9, 1
      // Predicated region
      $region13: #{conv2d_pallas.1} parent=11 // pred_check
        %p151 = pneg %p80
      $region14: #{conv2d_pallas.1} parent=11 // pred_check_branch
        %153 = sbr.rel (%p151) target = $region16
      $region15: #{conv2d_pallas.1} parent=11 // pred_region
        %p154 = scmp.lt.s32.totalorder %s20, 0
        %s155 = scalar_select %p154, %s20, 0
        %s156 = smul.addr %s155, 8
        %s157 = scalar_lea.vmem %s1, %s156
      $region16: #{conv2d_pallas.1} parent=11 // pred_fallthru
        _
      // Predicated region
      $region17: #{conv2d_pallas.1} parent=11 // pred_check
        %p158 = pneg %p106
      $region18: #{conv2d_pallas.1} parent=11 // pred_check_branch
        %160 = sbr.rel (%p158) target = $region20
      $region19: #{conv2d_pallas.1} parent=11 // pred_region
        %p161 = scmp.lt.s32.totalorder %s20, 0
        %s162 = scalar_select %p161, %s20, 0
        %s163 = scalar_lea.vmem %s2, %s162
      $region20: #{conv2d_pallas.1} parent=11 // pred_fallthru
        _
    $region12: #{conv2d_pallas.1} parent=5 // pred_fallthru
      _
    %p164 = scmp.lt.s32.totalorder %s9, 2
    // Predicated region
    $region21: #{conv2d_pallas.1} parent=5 // pred_check
      %p165 = pneg %p164
    $region22: #{conv2d_pallas.1} parent=5 // pred_check_branch
      %167 = sbr.rel (%p165) target = $region24
    $region23: #{conv2d_pallas.1} parent=5 // pred_region
      // Predicated region
      $region25: #{conv2d_pallas.1} parent=23 // pred_check
        %p168 = pneg %p48
      $region26: #{conv2d_pallas.1} parent=23 // pred_check_branch
        %170 = sbr.rel (%p168) target = $region28
      $region27: #{conv2d_pallas.1} parent=23 // pred_region
        %p171 = scmp.lt.s32.totalorder %s16, 1
        %s172 = scalar_select %p171, %s16, 1
        %s173 = smul.addr %s172, 54
        %s174 = smul.addr %s173, 8
        %s175 = scalar_lea.vmem %s0, %s174
      $region28: #{conv2d_pallas.1} parent=23 // pred_fallthru
        _
    $region24: #{conv2d_pallas.1} parent=5 // pred_fallthru
      _
    %p176 = scmp.le.s32.totalorder 1, %s9
    %p177 = scmp.lt.s32.totalorder %s9, 3
    %p178 = pnand %p176, %p177
    %p179 = pneg %p178
    // Predicated region
    $region29: #{conv2d_pallas.1} parent=5 // pred_check
      _
    $region30: #{conv2d_pallas.1} parent=5 // pred_check_branch
      %181 = sbr.rel (%p178) target = $region32
    $region31: #{conv2d_pallas.1} parent=5 // pred_region
      %s182 = ssub.s32 %s9, 1
      %p183 = scmp.lt.s32.totalorder %s19, 1
      %s184 = scalar_select %p183, %s19, 1
      %s185 = smul.addr %s184, 54
      %s186 = smul.addr %s185, 8
      %s187 = scalar_lea.vmem %s0, %s186
      %p188 = pneg %p54
      %p189 = pneg %p51
      %p190 = scmp.lt.s32.totalorder %s20, 0
      %s191 = scalar_select %p190, %s20, 0
      %s192 = smul.addr %s191, 8
      %s193 = scalar_lea.vmem %s1, %s192
      %p194 = pneg %p80
      %p195 = pneg %p77
      %p196 = scmp.lt.s32.totalorder %s20, 0
      %s197 = scalar_select %p196, %s20, 0
      %s198 = scalar_lea.vmem %s2, %s197
      %p199 = pneg %p106
      %p200 = pneg %p103
      %p201 = pneg %p136
      %p202 = pneg %p133
      %s203 = smul.u32 16, %s20
      %s204 = smul.u32 2, %s21
      %p205 = scmp.lt.s32.totalorder %s19, 1
      %s206 = scalar_select %p205, %s19, 1
      %p207 = scmp.lt.s32.totalorder %s203, 15
      %s208 = scalar_select %p207, %s203, 15
      %p209 = scmp.lt.s32.totalorder %s204, 1
      %s210 = scalar_select %p209, %s204, 1
      %s211 = smul.addr %s208, 2
      %s212 = sadd.s32 %s210, %s211
      %s213 = smul.addr %s206, 32
      %s214 = sadd.s32 %s212, %s213
      %s215 = smul.addr %s214, 8
      %s216 = scalar_lea.vmem %s3, %s215
      %p217 = scmp.lt.s32.totalorder %s19, 1
      %s218 = scalar_select %p217, %s19, 1
      %s219 = smul.addr %s218, 54
      %s220 = smul.addr %s219, 8
      %s221 = scalar_lea.vmem %s0, %s220
      %p222 = scmp.lt.s32.totalorder %s20, 0
      %s223 = scalar_select %p222, %s20, 0
      %s224 = smul.addr %s223, 8
      %s225 = scalar_lea.vmem %s1, %s224
      %p226 = scmp.lt.s32.totalorder %s20, 0
      %s227 = scalar_select %p226, %s20, 0
      %s228 = scalar_lea.vmem %s2, %s227
      %s229 = smul.u32 16, %s20
      %s230 = smul.u32 2, %s21
      %p231 = scmp.lt.s32.totalorder %s19, 1
      %s232 = scalar_select %p231, %s19, 1
      %p233 = scmp.lt.s32.totalorder %s229, 15
      %s234 = scalar_select %p233, %s229, 15
      %p235 = scmp.lt.s32.totalorder %s230, 1
      %s236 = scalar_select %p235, %s230, 1
      %s237 = smul.addr %s234, 2
      %s238 = sadd.s32 %s236, %s237
      %s239 = smul.addr %s232, 32
      %s240 = sadd.s32 %s238, %s239
      %s241 = smul.addr %s240, 8
      %s242 = scalar_lea.vmem %s3, %s241
      %s243 = smul.u32 16, %s20
      %s244 = smul.u32 2, %s21
      %s245 = smul.u32 %s21, 16
      %s246 = smul.u32 %s245, 24
      %s247 = scalar_lea.vmem %s221, %s246
      %v248 = vld [vmem:[%s247] sm:$0xff]
      %v249 = vld [vmem:[%s247 + $0x8] sm:$0xff]
      %v250 = vld [vmem:[%s247 + $0x10] sm:$0x3]
      %v251 = vld [vmem:[%s247 + $0x18] sm:$0xff]
      %v252 = vld [vmem:[%s247 + $0x20] sm:$0xff]
      %v253 = vld [vmem:[%s247 + $0x28] sm:$0x3]
      %v254 = vld [vmem:[%s247 + $0x30] sm:$0xff]
      %v255 = vld [vmem:[%s247 + $0x38] sm:$0xff]
      %v256 = vld [vmem:[%s247 + $0x40] sm:$0x3]
      %v257 = vld [vmem:[%s247 + $0x48] sm:$0xff]
      %v258 = vld [vmem:[%s247 + $0x50] sm:$0xff]
      %v259 = vld [vmem:[%s247 + $0x58] sm:$0x3]
      %v260 = vld [vmem:[%s247 + $0x60] sm:$0xff]
      %v261 = vld [vmem:[%s247 + $0x68] sm:$0xff]
      %v262 = vld [vmem:[%s247 + $0x70] sm:$0x3]
      %v263 = vld [vmem:[%s247 + $0x78] sm:$0xff]
      %v264 = vld [vmem:[%s247 + $0x80] sm:$0xff]
      %v265 = vld [vmem:[%s247 + $0x88] sm:$0x3]
      %v266 = vld [vmem:[%s247 + $0x90] sm:$0xff]
      %v267 = vld [vmem:[%s247 + $0x98] sm:$0xff]
      %v268 = vld [vmem:[%s247 + $0xa0] sm:$0x3]
      %v269 = vld [vmem:[%s247 + $0xa8] sm:$0xff]
      %v270 = vld [vmem:[%s247 + $0xb0] sm:$0xff]
      %v271 = vld [vmem:[%s247 + $0xb8] sm:$0x3]
      %v272 = vld [vmem:[%s247 + $0xc0] sm:$0xff]
      %v273 = vld [vmem:[%s247 + $0xc8] sm:$0xff]
      %v274 = vld [vmem:[%s247 + $0xd0] sm:$0x3]
      %v275 = vld [vmem:[%s247 + $0xd8] sm:$0xff]
      %v276 = vld [vmem:[%s247 + $0xe0] sm:$0xff]
      %v277 = vld [vmem:[%s247 + $0xe8] sm:$0x3]
      %v278 = vld [vmem:[%s247 + $0xf0] sm:$0xff]
      %v279 = vld [vmem:[%s247 + $0xf8] sm:$0xff]
      %v280 = vld [vmem:[%s247 + $0x100] sm:$0x3]
      %v281 = vld [vmem:[%s247 + $0x108] sm:$0xff]
      %v282 = vld [vmem:[%s247 + $0x110] sm:$0xff]
      %v283 = vld [vmem:[%s247 + $0x118] sm:$0x3]
      %v284 = vld [vmem:[%s247 + $0x120] sm:$0xff]
      %v285 = vld [vmem:[%s247 + $0x128] sm:$0xff]
      %v286 = vld [vmem:[%s247 + $0x130] sm:$0x3]
      %v287 = vld [vmem:[%s247 + $0x138] sm:$0xff]
      %v288 = vld [vmem:[%s247 + $0x140] sm:$0xff]
      %v289 = vld [vmem:[%s247 + $0x148] sm:$0x3]
      %v290 = vld [vmem:[%s247 + $0x150] sm:$0xff]
      %v291 = vld [vmem:[%s247 + $0x158] sm:$0xff]
      %v292 = vld [vmem:[%s247 + $0x160] sm:$0x3]
      %v293 = vld [vmem:[%s247 + $0x168] sm:$0xff]
      %v294 = vld [vmem:[%s247 + $0x170] sm:$0xff]
      %v295 = vld [vmem:[%s247 + $0x178] sm:$0x3]
      %v296 = vld [vmem:[%s225] sm:$0xff]
      %vm345 = vcmask 1046528
      %v346 = vrot.slane %v248, 1
      %v347 = vrot.slane %v249, 1
      %v348 = vsel %vm345, %v346, %v347
      %v349 = vrot.slane %v250, 1
      %v350 = vsel %vm345, %v347, %v349
      %v351 = vrot.slane %v251, 1
      %v352 = vrot.slane %v252, 1
      %v353 = vsel %vm345, %v351, %v352
      %v354 = vrot.slane %v253, 1
      %v355 = vsel %vm345, %v352, %v354
      %v356 = vrot.slane %v254, 1
      %v357 = vrot.slane %v255, 1
      %v358 = vsel %vm345, %v356, %v357
      %v359 = vrot.slane %v256, 1
      %v360 = vsel %vm345, %v357, %v359
      %v361 = vrot.slane %v257, 1
      %v362 = vrot.slane %v258, 1
      %v363 = vsel %vm345, %v361, %v362
      %v364 = vrot.slane %v259, 1
      %v365 = vsel %vm345, %v362, %v364
      %v366 = vrot.slane %v260, 1
      %v367 = vrot.slane %v261, 1
      %v368 = vsel %vm345, %v366, %v367
      %v369 = vrot.slane %v262, 1
      %v370 = vsel %vm345, %v367, %v369
      %v371 = vrot.slane %v263, 1
      %v372 = vrot.slane %v264, 1
      %v373 = vsel %vm345, %v371, %v372
      %v374 = vrot.slane %v265, 1
      %v375 = vsel %vm345, %v372, %v374
      %v376 = vrot.slane %v266, 1
      %v377 = vrot.slane %v267, 1
      %v378 = vsel %vm345, %v376, %v377
      %v379 = vrot.slane %v268, 1
      %v380 = vsel %vm345, %v377, %v379
      %v381 = vrot.slane %v269, 1
      %v382 = vrot.slane %v270, 1
      %v383 = vsel %vm345, %v381, %v382
      %v384 = vrot.slane %v271, 1
      %v385 = vsel %vm345, %v382, %v384
      %v386 = vrot.slane %v272, 1
      %v387 = vrot.slane %v273, 1
      %v388 = vsel %vm345, %v386, %v387
      %v389 = vrot.slane %v274, 1
      %v390 = vsel %vm345, %v387, %v389
      %v391 = vrot.slane %v275, 1
      %v392 = vrot.slane %v276, 1
      %v393 = vsel %vm345, %v391, %v392
      %v394 = vrot.slane %v277, 1
      %v395 = vsel %vm345, %v392, %v394
      %v396 = vrot.slane %v278, 1
      %v397 = vrot.slane %v279, 1
      %v398 = vsel %vm345, %v396, %v397
      %v399 = vrot.slane %v280, 1
      %v400 = vsel %vm345, %v397, %v399
      %v401 = vrot.slane %v281, 1
      %v402 = vrot.slane %v282, 1
      %v403 = vsel %vm345, %v401, %v402
      %v404 = vrot.slane %v283, 1
      %v405 = vsel %vm345, %v402, %v404
      %v406 = vrot.slane %v284, 1
      %v407 = vrot.slane %v285, 1
      %v408 = vsel %vm345, %v406, %v407
      %v409 = vrot.slane %v286, 1
      %v410 = vsel %vm345, %v407, %v409
      %v411 = vrot.slane %v287, 1
      %v412 = vrot.slane %v288, 1
      %v413 = vsel %vm345, %v411, %v412
      %v414 = vrot.slane %v289, 1
      %v415 = vsel %vm345, %v412, %v414
      %v416 = vrot.slane %v290, 1
      %v417 = vrot.slane %v291, 1
      %v418 = vsel %vm345, %v416, %v417
      %v419 = vrot.slane %v292, 1
      %v420 = vsel %vm345, %v417, %v419
      %v421 = vrot.slane %v293, 1
      %v422 = vrot.slane %v294, 1
      %v423 = vsel %vm345, %v421, %v422
      %v424 = vrot.slane %v295, 1
      %v425 = vsel %vm345, %v422, %v424
      %s426 = scalar_lea.vmem %s225, 8
      %v427 = vld [vmem:[%s426] sm:$0xff]
      %vm428 = vcmask 64512
      %v429 = vsel %vm428, %v348, 0
      %v431 = vsel %vm428, %v350, 0
      %v433 = vsel %vm428, %v353, 0
      %v435 = vsel %vm428, %v355, 0
      %v437 = vsel %vm428, %v358, 0
      %v439 = vsel %vm428, %v360, 0
      %v441 = vsel %vm428, %v363, 0
      %v443 = vsel %vm428, %v365, 0
      %v445 = vsel %vm428, %v368, 0
      %v447 = vsel %vm428, %v370, 0
      %v449 = vsel %vm428, %v373, 0
      %v451 = vsel %vm428, %v375, 0
      %v453 = vsel %vm428, %v378, 0
      %v455 = vsel %vm428, %v380, 0
      %v457 = vsel %vm428, %v383, 0
      %v459 = vsel %vm428, %v385, 0
      %v461 = vsel %vm428, %v388, 0
      %v463 = vsel %vm428, %v390, 0
      %v465 = vsel %vm428, %v393, 0
      %v467 = vsel %vm428, %v395, 0
      %v469 = vsel %vm428, %v398, 0
      %v471 = vsel %vm428, %v400, 0
      %v473 = vsel %vm428, %v403, 0
      %v475 = vsel %vm428, %v405, 0
      %v477 = vsel %vm428, %v408, 0
      %v479 = vsel %vm428, %v410, 0
      %v481 = vsel %vm428, %v413, 0
      %v483 = vsel %vm428, %v415, 0
      %v485 = vsel %vm428, %v418, 0
      %v487 = vsel %vm428, %v420, 0
      %v489 = vsel %vm428, %v423, 0
      %v491 = vsel %vm428, %v425, 0
      %493 = vmatprep.subr.mxu0 0.0
      %494 = vmatpush1.msra.mxu0 %v427
      %495 = vmatprep.subr.mxu0 0.0
      %496 = vmatpush1.msra.mxu0 0.0
      %497 = vmatprep.subr.mxu0 0.0
      %498 = vmatpush1.msra.mxu0 0.0
      %499 = vmatprep.subr.mxu0 0.0
      %500 = vmatpush1.msra.mxu0 0.0
      %501 = vmatprep.subr.mxu0 0.0
      %502 = vmatpush1.msra.mxu0 0.0
      %503 = vmatprep.subr.mxu0 0.0
      %504 = vmatpush1.msra.mxu0 0.0
      %505 = vmatprep.subr.mxu0 0.0
      %506 = vmatpush1.msra.mxu0 0.0
      %507 = vmatprep.subr.mxu0 0.0
      %508 = vmatpush1.msra.mxu0 0.0
      %509 = vmatprep.subr.mxu0 0.0
      %510 = vmatpush1.msra.mxu0 0.0
      %511 = vmatprep.subr.mxu0 0.0
      %512 = vmatpush1.msra.mxu0 0.0
      %513 = vmatprep.subr.mxu0 0.0
      %514 = vmatpush1.msra.mxu0 0.0
      %515 = vmatprep.subr.mxu0 0.0
      %516 = vmatpush1.msra.mxu0 0.0
      %517 = vmatprep.subr.mxu0 0.0
      %518 = vmatpush1.msra.mxu0 0.0
      %519 = vmatprep.subr.mxu0 0.0
      %520 = vmatpush1.msra.mxu0 0.0
      %521 = vmatprep.subr.mxu0 0.0
      %522 = vmatpush1.msra.mxu0 0.0
      %523 = vmatprep.subr.mxu0 0.0
      %524 = vmatpush1.msra.mxu0 0.0
      %525 = vmatprep.subr.mxu0 0.0
      %526 = vmatpush1.msra.mxu0 0.0
      %527 = vmatprep.subr.mxu0 0.0
      %528 = vmatpush1.msra.mxu0 0.0
      %529 = vmatprep.subr.mxu0 0.0
      %530 = vmatpush1.msra.mxu0 0.0
      %531 = vmatprep.subr.mxu0 0.0
      %532 = vmatpush1.msra.mxu0 0.0
      %533 = vmatprep.subr.mxu0 0.0
      %534 = vmatpush1.msra.mxu0 0.0
      %535 = vmatprep.subr.mxu0 0.0
      %536 = vmatpush1.msra.mxu0 0.0
      %537 = vmatprep.subr.mxu0 0.0
      %538 = vmatpush1.msra.mxu0 0.0
      %539 = vmatprep.subr.mxu0 0.0
      %540 = vmatpush1.msra.mxu0 0.0
      %541 = vmatprep.subr.mxu0 0.0
      %542 = vmatpush1.msra.mxu0 0.0
      %543 = vmatprep.subr.mxu0 0.0
      %544 = vmatpush1.msra.mxu0 0.0
      %545 = vmatprep.subr.mxu0 0.0
      %546 = vmatpush1.msra.mxu0 0.0
      %547 = vmatprep.subr.mxu0 0.0
      %548 = vmatpush1.msra.mxu0 0.0
      %549 = vmatprep.subr.mxu0 0.0
      %550 = vmatpush1.msra.mxu0 0.0
      %551 = vmatprep.subr.mxu0 0.0
      %552 = vmatpush1.msra.mxu0 0.0
      %553 = vmatprep.subr.mxu0 0.0
      %554 = vmatpush1.msra.mxu0 0.0
      %555 = vmatprep.subr.mxu0 0.0
      %556 = vmatpush1.msra.mxu0 0.0
      %557 = vmatprep.mubr.f32.mxu0 0.0
      %558 = vmatmul.mubr.f32.gmra.mrb[0].mxu0 %v429
      %v559 = vpop.f32.mrb[0].mxu0
      %v560 = vadd.f32 0.0, %v559
      %v561 = vpop.f32.mrb[0].mxu0
      %562 = vmatprep.mubr.f32.mxu0 0.0
      %563 = vmatmul.mubr.f32.gmra.mrb[0].mxu0 %v431
      %v564 = vpop.f32.mrb[0].mxu0
      %v565 = vadd.f32 0.0, %v564
      %v566 = vpop.f32.mrb[0].mxu0
      %567 = vmatprep.mubr.f32.mxu0 0.0
      %568 = vmatmul.mubr.f32.gmra.mrb[0].mxu0 %v433
      %v569 = vpop.f32.mrb[0].mxu0
      %v570 = vadd.f32 0.0, %v569
      %v571 = vpop.f32.mrb[0].mxu0
      %572 = vmatprep.mubr.f32.mxu0 0.0
      %573 = vmatmul.mubr.f32.gmra.mrb[0].mxu0 %v435
      %v574 = vpop.f32.mrb[0].mxu0
      %v575 = vadd.f32 0.0, %v574
      %v576 = vpop.f32.mrb[0].mxu0
      %577 = vmatprep.mubr.f32.mxu0 0.0
      %578 = vmatmul.mubr.f32.gmra.mrb[0].mxu0 %v437
      %v579 = vpop.f32.mrb[0].mxu0
      %v580 = vadd.f32 0.0, %v579
      %v581 = vpop.f32.mrb[0].mxu0
      %582 = vmatprep.mubr.f32.mxu0 0.0
      %583 = vmatmul.mubr.f32.gmra.mrb[0].mxu0 %v439
      %v584 = vpop.f32.mrb[0].mxu0
      %v585 = vadd.f32 0.0, %v584
      %v586 = vpop.f32.mrb[0].mxu0
      %587 = vmatprep.mubr.f32.mxu0 0.0
      %588 = vmatmul.mubr.f32.gmra.mrb[0].mxu0 %v441
      %v589 = vpop.f32.mrb[0].mxu0
      %v590 = vadd.f32 0.0, %v589
      %v591 = vpop.f32.mrb[0].mxu0
      %592 = vmatprep.mubr.f32.mxu0 0.0
      %593 = vmatmul.mubr.f32.gmra.mrb[0].mxu0 %v443
      %v594 = vpop.f32.mrb[0].mxu0
      %v595 = vadd.f32 0.0, %v594
      %v596 = vpop.f32.mrb[0].mxu0
      %597 = vmatprep.mubr.f32.mxu0 0.0
      %598 = vmatmul.mubr.f32.gmra.mrb[0].mxu0 %v445
      %v599 = vpop.f32.mrb[0].mxu0
      %v600 = vadd.f32 0.0, %v599
      %v601 = vpop.f32.mrb[0].mxu0
      %602 = vmatprep.mubr.f32.mxu0 0.0
      %603 = vmatmul.mubr.f32.gmra.mrb[0].mxu0 %v447
      %v604 = vpop.f32.mrb[0].mxu0
      %v605 = vadd.f32 0.0, %v604
      %v606 = vpop.f32.mrb[0].mxu0
      %607 = vmatprep.mubr.f32.mxu0 0.0
      %608 = vmatmul.mubr.f32.gmra.mrb[0].mxu0 %v449
      %v609 = vpop.f32.mrb[0].mxu0
      %v610 = vadd.f32 0.0, %v609
      %v611 = vpop.f32.mrb[0].mxu0
      %612 = vmatprep.mubr.f32.mxu0 0.0
      %613 = vmatmul.mubr.f32.gmra.mrb[0].mxu0 %v451
      %v614 = vpop.f32.mrb[0].mxu0
      %v615 = vadd.f32 0.0, %v614
      %v616 = vpop.f32.mrb[0].mxu0
      %617 = vmatprep.mubr.f32.mxu0 0.0
      %618 = vmatmul.mubr.f32.gmra.mrb[0].mxu0 %v453
      %v619 = vpop.f32.mrb[0].mxu0
      %v620 = vadd.f32 0.0, %v619
      %v621 = vpop.f32.mrb[0].mxu0
      %622 = vmatprep.mubr.f32.mxu0 0.0
      %623 = vmatmul.mubr.f32.gmra.mrb[0].mxu0 %v455
      %v624 = vpop.f32.mrb[0].mxu0
      %v625 = vadd.f32 0.0, %v624
      %v626 = vpop.f32.mrb[0].mxu0
      %627 = vmatprep.mubr.f32.mxu0 0.0
      %628 = vmatmul.mubr.f32.gmra.mrb[0].mxu0 %v457
      %v629 = vpop.f32.mrb[0].mxu0
      %v630 = vadd.f32 0.0, %v629
      %v631 = vpop.f32.mrb[0].mxu0
      %632 = vmatprep.mubr.f32.mxu0 0.0
      %633 = vmatmul.mubr.f32.gmra.mrb[0].mxu0 %v459
      %v634 = vpop.f32.mrb[0].mxu0
      %v635 = vadd.f32 0.0, %v634
      %v636 = vpop.f32.mrb[0].mxu0
      %637 = vmatprep.mubr.f32.mxu0 0.0
      %638 = vmatmul.mubr.f32.gmra.mrb[0].mxu0 %v461
      %v639 = vpop.f32.mrb[0].mxu0
      %v640 = vadd.f32 0.0, %v639
      %v641 = vpop.f32.mrb[0].mxu0
      %642 = vmatprep.mubr.f32.mxu0 0.0
      %643 = vmatmul.mubr.f32.gmra.mrb[0].mxu0 %v463
      %v644 = vpop.f32.mrb[0].mxu0
      %v645 = vadd.f32 0.0, %v644
      %v646 = vpop.f32.mrb[0].mxu0
      %647 = vmatprep.mubr.f32.mxu0 0.0
      %648 = vmatmul.mubr.f32.gmra.mrb[0].mxu0 %v465
      %v649 = vpop.f32.mrb[0].mxu0
      %v650 = vadd.f32 0.0, %v649
      %v651 = vpop.f32.mrb[0].mxu0
      %652 = vmatprep.mubr.f32.mxu0 0.0
      %653 = vmatmul.mubr.f32.gmra.mrb[0].mxu0 %v467
      %v654 = vpop.f32.mrb[0].mxu0
      %v655 = vadd.f32 0.0, %v654
      %v656 = vpop.f32.mrb[0].mxu0
      %657 = vmatprep.mubr.f32.mxu0 0.0
      %658 = vmatmul.mubr.f32.gmra.mrb[0].mxu0 %v469
      %v659 = vpop.f32.mrb[0].mxu0
      %v660 = vadd.f32 0.0, %v659
      %v661 = vpop.f32.mrb[0].mxu0
      %662 = vmatprep.mubr.f32.mxu0 0.0
      %663 = vmatmul.mubr.f32.gmra.mrb[0].mxu0 %v471
      %v664 = vpop.f32.mrb[0].mxu0
      %v665 = vadd.f32 0.0, %v664
      %v666 = vpop.f32.mrb[0].mxu0
      %667 = vmatprep.mubr.f32.mxu0 0.0
      %668 = vmatmul.mubr.f32.gmra.mrb[0].mxu0 %v473
      %v669 = vpop.f32.mrb[0].mxu0
      %v670 = vadd.f32 0.0, %v669
      %v671 = vpop.f32.mrb[0].mxu0
      %672 = vmatprep.mubr.f32.mxu0 0.0
      %673 = vmatmul.mubr.f32.gmra.mrb[0].mxu0 %v475
      %v674 = vpop.f32.mrb[0].mxu0
      %v675 = vadd.f32 0.0, %v674
      %v676 = vpop.f32.mrb[0].mxu0
      %677 = vmatprep.mubr.f32.mxu0 0.0
      %678 = vmatmul.mubr.f32.gmra.mrb[0].mxu0 %v477
      %v679 = vpop.f32.mrb[0].mxu0
      %v680 = vadd.f32 0.0, %v679
      %v681 = vpop.f32.mrb[0].mxu0
      %682 = vmatprep.mubr.f32.mxu0 0.0
      %683 = vmatmul.mubr.f32.gmra.mrb[0].mxu0 %v479
      %v684 = vpop.f32.mrb[0].mxu0
      %v685 = vadd.f32 0.0, %v684
      %v686 = vpop.f32.mrb[0].mxu0
      %687 = vmatprep.mubr.f32.mxu0 0.0
      %688 = vmatmul.mubr.f32.gmra.mrb[0].mxu0 %v481
      %v689 = vpop.f32.mrb[0].mxu0
      %v690 = vadd.f32 0.0, %v689
      %v691 = vpop.f32.mrb[0].mxu0
      %692 = vmatprep.mubr.f32.mxu0 0.0
      %693 = vmatmul.mubr.f32.gmra.mrb[0].mxu0 %v483
      %v694 = vpop.f32.mrb[0].mxu0
      %v695 = vadd.f32 0.0, %v694
      %v696 = vpop.f32.mrb[0].mxu0
      %697 = vmatprep.mubr.f32.mxu0 0.0
      %698 = vmatmul.mubr.f32.gmra.mrb[0].mxu0 %v485
      %v699 = vpop.f32.mrb[0].mxu0
      %v700 = vadd.f32 0.0, %v699
      %v701 = vpop.f32.mrb[0].mxu0
      %702 = vmatprep.mubr.f32.mxu0 0.0
      %703 = vmatmul.mubr.f32.gmra.mrb[0].mxu0 %v487
      %v704 = vpop.f32.mrb[0].mxu0
      %v705 = vadd.f32 0.0, %v704
      %v706 = vpop.f32.mrb[0].mxu0
      %707 = vmatprep.mubr.f32.mxu0 0.0
      %708 = vmatmul.mubr.f32.gmra.mrb[0].mxu0 %v489
      %v709 = vpop.f32.mrb[0].mxu0
      %v710 = vadd.f32 0.0, %v709
      %v711 = vpop.f32.mrb[0].mxu0
      %712 = vmatprep.mubr.f32.mxu0 0.0
      %713 = vmatmul.mubr.f32.gmra.mrb[0].mxu0 %v491
      %v714 = vpop.f32.mrb[0].mxu0
      %v715 = vadd.f32 0.0, %v714
      %v716 = vpop.f32.mrb[0].mxu0
      %717 = vdwg.mxu0
      %v718 = vsel %vm428, %v248, 0
      %v720 = vsel %vm428, %v249, 0
      %v722 = vsel %vm428, %v251, 0
      %v724 = vsel %vm428, %v252, 0
      %v726 = vsel %vm428, %v254, 0
      %v728 = vsel %vm428, %v255, 0
      %v730 = vsel %vm428, %v257, 0
      %v732 = vsel %vm428, %v258, 0
      %v734 = vsel %vm428, %v260, 0
      %v736 = vsel %vm428, %v261, 0
      %v738 = vsel %vm428, %v263, 0
      %v740 = vsel %vm428, %v264, 0
      %v742 = vsel %vm428, %v266, 0
      %v744 = vsel %vm428, %v267, 0
      %v746 = vsel %vm428, %v269, 0
      %v748 = vsel %vm428, %v270, 0
      %v750 = vsel %vm428, %v272, 0
      %v752 = vsel %vm428, %v273, 0
      %v754 = vsel %vm428, %v275, 0
      %v756 = vsel %vm428, %v276, 0
      %v758 = vsel %vm428, %v278, 0
      %v760 = vsel %vm428, %v279, 0
      %v762 = vsel %vm428, %v281, 0
      %v764 = vsel %vm428, %v282, 0
      %v766 = vsel %vm428, %v284, 0
      %v768 = vsel %vm428, %v285, 0
      %v770 = vsel %vm428, %v287, 0
      %v772 = vsel %vm428, %v288, 0
      %v774 = vsel %vm428, %v290, 0
      %v776 = vsel %vm428, %v291, 0
      %v778 = vsel %vm428, %v293, 0
      %v780 = vsel %vm428, %v294, 0
      %782 = vmatprep.subr.mxu0 0.0
      %783 = vmatpush1.msra.mxu0 %v296
      %784 = vmatprep.subr.mxu0 0.0
      %785 = vmatpush1.msra.mxu0 0.0
      %786 = vmatprep.subr.mxu0 0.0
      %787 = vmatpush1.msra.mxu0 0.0
      %788 = vmatprep.subr.mxu0 0.0
      %789 = vmatpush1.msra.mxu0 0.0
      %790 = vmatprep.subr.mxu0 0.0
      %791 = vmatpush1.msra.mxu0 0.0
      %792 = vmatprep.subr.mxu0 0.0
      %793 = vmatpush1.msra.mxu0 0.0
      %794 = vmatprep.subr.mxu0 0.0
      %795 = vmatpush1.msra.mxu0 0.0
      %796 = vmatprep.subr.mxu0 0.0
      %797 = vmatpush1.msra.mxu0 0.0
      %798 = vmatprep.subr.mxu0 0.0
      %799 = vmatpush1.msra.mxu0 0.0
      %800 = vmatprep.subr.mxu0 0.0
      %801 = vmatpush1.msra.mxu0 0.0
      %802 = vmatprep.subr.mxu0 0.0
      %803 = vmatpush1.msra.mxu0 0.0
      %804 = vmatprep.subr.mxu0 0.0
      %805 = vmatpush1.msra.mxu0 0.0
      %806 = vmatprep.subr.mxu0 0.0
      %807 = vmatpush1.msra.mxu0 0.0
      %808 = vmatprep.subr.mxu0 0.0
      %809 = vmatpush1.msra.mxu0 0.0
      %810 = vmatprep.subr.mxu0 0.0
      %811 = vmatpush1.msra.mxu0 0.0
      %812 = vmatprep.subr.mxu0 0.0
      %813 = vmatpush1.msra.mxu0 0.0
      %814 = vmatprep.subr.mxu0 0.0
      %815 = vmatpush1.msra.mxu0 0.0
      %816 = vmatprep.subr.mxu0 0.0
      %817 = vmatpush1.msra.mxu0 0.0
      %818 = vmatprep.subr.mxu0 0.0
      %819 = vmatpush1.msra.mxu0 0.0
      %820 = vmatprep.subr.mxu0 0.0
      %821 = vmatpush1.msra.mxu0 0.0
      %822 = vmatprep.subr.mxu0 0.0
      %823 = vmatpush1.msra.mxu0 0.0
      %824 = vmatprep.subr.mxu0 0.0
      %825 = vmatpush1.msra.mxu0 0.0
      %826 = vmatprep.subr.mxu0 0.0
      %827 = vmatpush1.msra.mxu0 0.0
      %828 = vmatprep.subr.mxu0 0.0
      %829 = vmatpush1.msra.mxu0 0.0
      %830 = vmatprep.subr.mxu0 0.0
      %831 = vmatpush1.msra.mxu0 0.0
      %832 = vmatprep.subr.mxu0 0.0
      %833 = vmatpush1.msra.mxu0 0.0
      %834 = vmatprep.subr.mxu0 0.0
      %835 = vmatpush1.msra.mxu0 0.0
      %836 = vmatprep.subr.mxu0 0.0
      %837 = vmatpush1.msra.mxu0 0.0
      %838 = vmatprep.subr.mxu0 0.0
      %839 = vmatpush1.msra.mxu0 0.0
      %840 = vmatprep.subr.mxu0 0.0
      %841 = vmatpush1.msra.mxu0 0.0
      %842 = vmatprep.subr.mxu0 0.0
      %843 = vmatpush1.msra.mxu0 0.0
      %844 = vmatprep.subr.mxu0 0.0
      %845 = vmatpush1.msra.mxu0 0.0
      %846 = vmatprep.mubr.f32.mxu0 0.0
      %847 = vmatmul.mubr.f32.gmra.mrb[0].mxu0 %v718
      %v848 = vpop.f32.mrb[0].mxu0
      %v849 = vadd.f32 %v560, %v848
      %v850 = vpop.f32.mrb[0].mxu0
      %851 = vmatprep.mubr.f32.mxu0 0.0
      %852 = vmatmul.mubr.f32.gmra.mrb[0].mxu0 %v720
      %v853 = vpop.f32.mrb[0].mxu0
      %v854 = vadd.f32 %v565, %v853
      %v855 = vpop.f32.mrb[0].mxu0
      %856 = vmatprep.mubr.f32.mxu0 0.0
      %857 = vmatmul.mubr.f32.gmra.mrb[0].mxu0 %v722
      %v858 = vpop.f32.mrb[0].mxu0
      %v859 = vadd.f32 %v570, %v858
      %v860 = vpop.f32.mrb[0].mxu0
      %861 = vmatprep.mubr.f32.mxu0 0.0
      %862 = vmatmul.mubr.f32.gmra.mrb[0].mxu0 %v724
      %v863 = vpop.f32.mrb[0].mxu0
      %v864 = vadd.f32 %v575, %v863
      %v865 = vpop.f32.mrb[0].mxu0
      %866 = vmatprep.mubr.f32.mxu0 0.0
      %867 = vmatmul.mubr.f32.gmra.mrb[0].mxu0 %v726
      %v868 = vpop.f32.mrb[0].mxu0
      %v869 = vadd.f32 %v580, %v868
      %v870 = vpop.f32.mrb[0].mxu0
      %871 = vmatprep.mubr.f32.mxu0 0.0
      %872 = vmatmul.mubr.f32.gmra.mrb[0].mxu0 %v728
      %v873 = vpop.f32.mrb[0].mxu0
      %v874 = vadd.f32 %v585, %v873
      %v875 = vpop.f32.mrb[0].mxu0
      %876 = vmatprep.mubr.f32.mxu0 0.0
      %877 = vmatmul.mubr.f32.gmra.mrb[0].mxu0 %v730
      %v878 = vpop.f32.mrb[0].mxu0
      %v879 = vadd.f32 %v590, %v878
      %v880 = vpop.f32.mrb[0].mxu0
      %881 = vmatprep.mubr.f32.mxu0 0.0
      %882 = vmatmul.mubr.f32.gmra.mrb[0].mxu0 %v732
      %v883 = vpop.f32.mrb[0].mxu0
      %v884 = vadd.f32 %v595, %v883
      %v885 = vpop.f32.mrb[0].mxu0
      %886 = vmatprep.mubr.f32.mxu0 0.0
      %887 = vmatmul.mubr.f32.gmra.mrb[0].mxu0 %v734
      %v888 = vpop.f32.mrb[0].mxu0
      %v889 = vadd.f32 %v600, %v888
      %v890 = vpop.f32.mrb[0].mxu0
      %891 = vmatprep.mubr.f32.mxu0 0.0
      %892 = vmatmul.mubr.f32.gmra.mrb[0].mxu0 %v736
      %v893 = vpop.f32.mrb[0].mxu0
      %v894 = vadd.f32 %v605, %v893
      %v895 = vpop.f32.mrb[0].mxu0
      %896 = vmatprep.mubr.f32.mxu0 0.0
      %897 = vmatmul.mubr.f32.gmra.mrb[0].mxu0 %v738
      %v898 = vpop.f32.mrb[0].mxu0
      %v899 = vadd.f32 %v610, %v898
      %v900 = vpop.f32.mrb[0].mxu0
      %901 = vmatprep.mubr.f32.mxu0 0.0
      %902 = vmatmul.mubr.f32.gmra.mrb[0].mxu0 %v740
      %v903 = vpop.f32.mrb[0].mxu0
      %v904 = vadd.f32 %v615, %v903
      %v905 = vpop.f32.mrb[0].mxu0
      %906 = vmatprep.mubr.f32.mxu0 0.0
      %907 = vmatmul.mubr.f32.gmra.mrb[0].mxu0 %v742
      %v908 = vpop.f32.mrb[0].mxu0
      %v909 = vadd.f32 %v620, %v908
      %v910 = vpop.f32.mrb[0].mxu0
      %911 = vmatprep.mubr.f32.mxu0 0.0
      %912 = vmatmul.mubr.f32.gmra.mrb[0].mxu0 %v744
      %v913 = vpop.f32.mrb[0].mxu0
      %v914 = vadd.f32 %v625, %v913
      %v915 = vpop.f32.mrb[0].mxu0
      %916 = vmatprep.mubr.f32.mxu0 0.0
      %917 = vmatmul.mubr.f32.gmra.mrb[0].mxu0 %v746
      %v918 = vpop.f32.mrb[0].mxu0
      %v919 = vadd.f32 %v630, %v918
      %v920 = vpop.f32.mrb[0].mxu0
      %921 = vmatprep.mubr.f32.mxu0 0.0
      %922 = vmatmul.mubr.f32.gmra.mrb[0].mxu0 %v748
      %v923 = vpop.f32.mrb[0].mxu0
      %v924 = vadd.f32 %v635, %v923
      %v925 = vpop.f32.mrb[0].mxu0
      %926 = vmatprep.mubr.f32.mxu0 0.0
      %927 = vmatmul.mubr.f32.gmra.mrb[0].mxu0 %v750
      %v928 = vpop.f32.mrb[0].mxu0
      %v929 = vadd.f32 %v640, %v928
      %v930 = vpop.f32.mrb[0].mxu0
      %931 = vmatprep.mubr.f32.mxu0 0.0
      %932 = vmatmul.mubr.f32.gmra.mrb[0].mxu0 %v752
      %v933 = vpop.f32.mrb[0].mxu0
      %v934 = vadd.f32 %v645, %v933
      %v935 = vpop.f32.mrb[0].mxu0
      %936 = vmatprep.mubr.f32.mxu0 0.0
      %937 = vmatmul.mubr.f32.gmra.mrb[0].mxu0 %v754
      %v938 = vpop.f32.mrb[0].mxu0
      %v939 = vadd.f32 %v650, %v938
      %v940 = vpop.f32.mrb[0].mxu0
      %941 = vmatprep.mubr.f32.mxu0 0.0
      %942 = vmatmul.mubr.f32.gmra.mrb[0].mxu0 %v756
      %v943 = vpop.f32.mrb[0].mxu0
      %v944 = vadd.f32 %v655, %v943
      %v945 = vpop.f32.mrb[0].mxu0
      %946 = vmatprep.mubr.f32.mxu0 0.0
      %947 = vmatmul.mubr.f32.gmra.mrb[0].mxu0 %v758
      %v948 = vpop.f32.mrb[0].mxu0
      %v949 = vadd.f32 %v660, %v948
      %v950 = vpop.f32.mrb[0].mxu0
      %951 = vmatprep.mubr.f32.mxu0 0.0
      %952 = vmatmul.mubr.f32.gmra.mrb[0].mxu0 %v760
      %v953 = vpop.f32.mrb[0].mxu0
      %v954 = vadd.f32 %v665, %v953
      %v955 = vpop.f32.mrb[0].mxu0
      %956 = vmatprep.mubr.f32.mxu0 0.0
      %957 = vmatmul.mubr.f32.gmra.mrb[0].mxu0 %v762
      %v958 = vpop.f32.mrb[0].mxu0
      %v959 = vadd.f32 %v670, %v958
      %v960 = vpop.f32.mrb[0].mxu0
      %961 = vmatprep.mubr.f32.mxu0 0.0
      %962 = vmatmul.mubr.f32.gmra.mrb[0].mxu0 %v764
      %v963 = vpop.f32.mrb[0].mxu0
      %v964 = vadd.f32 %v675, %v963
      %v965 = vpop.f32.mrb[0].mxu0
      %966 = vmatprep.mubr.f32.mxu0 0.0
      %967 = vmatmul.mubr.f32.gmra.mrb[0].mxu0 %v766
      %v968 = vpop.f32.mrb[0].mxu0
      %v969 = vadd.f32 %v680, %v968
      %v970 = vpop.f32.mrb[0].mxu0
      %971 = vmatprep.mubr.f32.mxu0 0.0
      %972 = vmatmul.mubr.f32.gmra.mrb[0].mxu0 %v768
      %v973 = vpop.f32.mrb[0].mxu0
      %v974 = vadd.f32 %v685, %v973
      %v975 = vpop.f32.mrb[0].mxu0
      %976 = vmatprep.mubr.f32.mxu0 0.0
      %977 = vmatmul.mubr.f32.gmra.mrb[0].mxu0 %v770
      %v978 = vpop.f32.mrb[0].mxu0
      %v979 = vadd.f32 %v690, %v978
      %v980 = vpop.f32.mrb[0].mxu0
      %981 = vmatprep.mubr.f32.mxu0 0.0
      %982 = vmatmul.mubr.f32.gmra.mrb[0].mxu0 %v772
      %v983 = vpop.f32.mrb[0].mxu0
      %v984 = vadd.f32 %v695, %v983
      %v985 = vpop.f32.mrb[0].mxu0
      %986 = vmatprep.mubr.f32.mxu0 0.0
      %987 = vmatmul.mubr.f32.gmra.mrb[0].mxu0 %v774
      %v988 = vpop.f32.mrb[0].mxu0
      %v989 = vadd.f32 %v700, %v988
      %v990 = vpop.f32.mrb[0].mxu0
      %991 = vmatprep.mubr.f32.mxu0 0.0
      %992 = vmatmul.mubr.f32.gmra.mrb[0].mxu0 %v776
      %v993 = vpop.f32.mrb[0].mxu0
      %v994 = vadd.f32 %v705, %v993
      %v995 = vpop.f32.mrb[0].mxu0
      %996 = vmatprep.mubr.f32.mxu0 0.0
      %997 = vmatmul.mubr.f32.gmra.mrb[0].mxu0 %v778
      %v998 = vpop.f32.mrb[0].mxu0
      %v999 = vadd.f32 %v710, %v998
      %v1000 = vpop.f32.mrb[0].mxu0
      %1001 = vmatprep.mubr.f32.mxu0 0.0
      %1002 = vmatmul.mubr.f32.gmra.mrb[0].mxu0 %v780
      %v1003 = vpop.f32.mrb[0].mxu0
      %v1004 = vadd.f32 %v715, %v1003
      %v1005 = vpop.f32.mrb[0].mxu0
      %1006 = vdwg.mxu0
      %vm1007 = vcmask 1045504
      %v1008 = vrot.slane %v248, 2
      %v1009 = vrot.slane %v249, 2
      %v1010 = vsel %vm1007, %v1008, %v1009
      %v1011 = vrot.slane %v250, 2
      %v1012 = vsel %vm1007, %v1009, %v1011
      %v1013 = vrot.slane %v251, 2
      %v1014 = vrot.slane %v252, 2
      %v1015 = vsel %vm1007, %v1013, %v1014
      %v1016 = vrot.slane %v253, 2
      %v1017 = vsel %vm1007, %v1014, %v1016
      %v1018 = vrot.slane %v254, 2
      %v1019 = vrot.slane %v255, 2
      %v1020 = vsel %vm1007, %v1018, %v1019
      %v1021 = vrot.slane %v256, 2
      %v1022 = vsel %vm1007, %v1019, %v1021
      %v1023 = vrot.slane %v257, 2
      %v1024 = vrot.slane %v258, 2
      %v1025 = vsel %vm1007, %v1023, %v1024
      %v1026 = vrot.slane %v259, 2
      %v1027 = vsel %vm1007, %v1024, %v1026
      %v1028 = vrot.slane %v260, 2
      %v1029 = vrot.slane %v261, 2
      %v1030 = vsel %vm1007, %v1028, %v1029
      %v1031 = vrot.slane %v262, 2
      %v1032 = vsel %vm1007, %v1029, %v1031
      %v1033 = vrot.slane %v263, 2
      %v1034 = vrot.slane %v264, 2
      %v1035 = vsel %vm1007, %v1033, %v1034
      %v1036 = vrot.slane %v265, 2
      %v1037 = vsel %vm1007, %v1034, %v1036
      %v1038 = vrot.slane %v266, 2
      %v1039 = vrot.slane %v267, 2
      %v1040 = vsel %vm1007, %v1038, %v1039
      %v1041 = vrot.slane %v268, 2
      %v1042 = vsel %vm1007, %v1039, %v1041
      %v1043 = vrot.slane %v269, 2
      %v1044 = vrot.slane %v270, 2
      %v1045 = vsel %vm1007, %v1043, %v1044
      %v1046 = vrot.slane %v271, 2
      %v1047 = vsel %vm1007, %v1044, %v1046
      %v1048 = vrot.slane %v272, 2
      %v1049 = vrot.slane %v273, 2
      %v1050 = vsel %vm1007, %v1048, %v1049
      %v1051 = vrot.slane %v274, 2
      %v1052 = vsel %vm1007, %v1049, %v1051
      %v1053 = vrot.slane %v275, 2
      %v1054 = vrot.slane %v276, 2
      %v1055 = vsel %vm1007, %v1053, %v1054
      %v1056 = vrot.slane %v277, 2
      %v1057 = vsel %vm1007, %v1054, %v1056
      %v1058 = vrot.slane %v278, 2
      %v1059 = vrot.slane %v279, 2
      %v1060 = vsel %vm1007, %v1058, %v1059
      %v1061 = vrot.slane %v280, 2
      %v1062 = vsel %vm1007, %v1059, %v1061
      %v1063 = vrot.slane %v281, 2
      %v1064 = vrot.slane %v282, 2
      %v1065 = vsel %vm1007, %v1063, %v1064
      %v1066 = vrot.slane %v283, 2
      %v1067 = vsel %vm1007, %v1064, %v1066
      %v1068 = vrot.slane %v284, 2
      %v1069 = vrot.slane %v285, 2
      %v1070 = vsel %vm1007, %v1068, %v1069
      %v1071 = vrot.slane %v286, 2
      %v1072 = vsel %vm1007, %v1069, %v1071
      %v1073 = vrot.slane %v287, 2
      %v1074 = vrot.slane %v288, 2
      %v1075 = vsel %vm1007, %v1073, %v1074
      %v1076 = vrot.slane %v289, 2
      %v1077 = vsel %vm1007, %v1074, %v1076
      %v1078 = vrot.slane %v290, 2
      %v1079 = vrot.slane %v291, 2
      %v1080 = vsel %vm1007, %v1078, %v1079
      %v1081 = vrot.slane %v292, 2
      %v1082 = vsel %vm1007, %v1079, %v1081
      %v1083 = vrot.slane %v293, 2
      %v1084 = vrot.slane %v294, 2
      %v1085 = vsel %vm1007, %v1083, %v1084
      %v1086 = vrot.slane %v295, 2
      %v1087 = vsel %vm1007, %v1084, %v1086
      %s1088 = scalar_lea.vmem %s225, 16
      %v1089 = vld [vmem:[%s1088] sm:$0xff]
      %v1090 = vsel %vm428, %v1010, 0
      %v1092 = vsel %vm428, %v1012, 0
      %v1094 = vsel %vm428, %v1015, 0
      %v1096 = vsel %vm428, %v1017, 0
      %v1098 = vsel %vm428, %v1020, 0
      %v1100 = vsel %vm428, %v1022, 0
      %v1102 = vsel %vm428, %v1025, 0
      %v1104 = vsel %vm428, %v1027, 0
      %v1106 = vsel %vm428, %v1030, 0
      %v1108 = vsel %vm428, %v1032, 0
      %v1110 = vsel %vm428, %v1035, 0
      %v1112 = vsel %vm428, %v1037, 0
      %v1114 = vsel %vm428, %v1040, 0
      %v1116 = vsel %vm428, %v1042, 0
      %v1118 = vsel %vm428, %v1045, 0
      %v1120 = vsel %vm428, %v1047, 0
      %v1122 = vsel %vm428, %v1050, 0
      %v1124 = vsel %vm428, %v1052, 0
      %v1126 = vsel %vm428, %v1055, 0
      %v1128 = vsel %vm428, %v1057, 0
      %v1130 = vsel %vm428, %v1060, 0
      %v1132 = vsel %vm428, %v1062, 0
      %v1134 = vsel %vm428, %v1065, 0
      %v1136 = vsel %vm428, %v1067, 0
      %v1138 = vsel %vm428, %v1070, 0
      %v1140 = vsel %vm428, %v1072, 0
      %v1142 = vsel %vm428, %v1075, 0
      %v1144 = vsel %vm428, %v1077, 0
      %v1146 = vsel %vm428, %v1080, 0
      %v1148 = vsel %vm428, %v1082, 0
      %v1150 = vsel %vm428, %v1085, 0
      %v1152 = vsel %vm428, %v1087, 0
      %1154 = vmatprep.subr.mxu0 0.0
      %1155 = vmatpush1.msra.mxu0 %v1089
      %1156 = vmatprep.subr.mxu0 0.0
      %1157 = vmatpush1.msra.mxu0 0.0
      %1158 = vmatprep.subr.mxu0 0.0
      %1159 = vmatpush1.msra.mxu0 0.0
      %1160 = vmatprep.subr.mxu0 0.0
      %1161 = vmatpush1.msra.mxu0 0.0
      %1162 = vmatprep.subr.mxu0 0.0
      %1163 = vmatpush1.msra.mxu0 0.0
      %1164 = vmatprep.subr.mxu0 0.0
      %1165 = vmatpush1.msra.mxu0 0.0
      %1166 = vmatprep.subr.mxu0 0.0
      %1167 = vmatpush1.msra.mxu0 0.0
      %1168 = vmatprep.subr.mxu0 0.0
      %1169 = vmatpush1.msra.mxu0 0.0
      %1170 = vmatprep.subr.mxu0 0.0
      %1171 = vmatpush1.msra.mxu0 0.0
      %1172 = vmatprep.subr.mxu0 0.0
      %1173 = vmatpush1.msra.mxu0 0.0
      %1174 = vmatprep.subr.mxu0 0.0
      %1175 = vmatpush1.msra.mxu0 0.0
      %1176 = vmatprep.subr.mxu0 0.0
      %1177 = vmatpush1.msra.mxu0 0.0
      %1178 = vmatprep.subr.mxu0 0.0
      %1179 = vmatpush1.msra.mxu0 0.0
      %1180 = vmatprep.subr.mxu0 0.0
      %1181 = vmatpush1.msra.mxu0 0.0
      %1182 = vmatprep.subr.mxu0 0.0
      %1183 = vmatpush1.msra.mxu0 0.0
      %1184 = vmatprep.subr.mxu0 0.0
      %1185 = vmatpush1.msra.mxu0 0.0
      %1186 = vmatprep.subr.mxu0 0.0
      %1187 = vmatpush1.msra.mxu0 0.0
      %1188 = vmatprep.subr.mxu0 0.0
      %1189 = vmatpush1.msra.mxu0 0.0
      %1190 = vmatprep.subr.mxu0 0.0
      %1191 = vmatpush1.msra.mxu0 0.0
      %1192 = vmatprep.subr.mxu0 0.0
      %1193 = vmatpush1.msra.mxu0 0.0
      %1194 = vmatprep.subr.mxu0 0.0
      %1195 = vmatpush1.msra.mxu0 0.0
      %1196 = vmatprep.subr.mxu0 0.0
      %1197 = vmatpush1.msra.mxu0 0.0
      %1198 = vmatprep.subr.mxu0 0.0
      %1199 = vmatpush1.msra.mxu0 0.0
      %1200 = vmatprep.subr.mxu0 0.0
      %1201 = vmatpush1.msra.mxu0 0.0
      %1202 = vmatprep.subr.mxu0 0.0
      %1203 = vmatpush1.msra.mxu0 0.0
      %1204 = vmatprep.subr.mxu0 0.0
      %1205 = vmatpush1.msra.mxu0 0.0
      %1206 = vmatprep.subr.mxu0 0.0
      %1207 = vmatpush1.msra.mxu0 0.0
      %1208 = vmatprep.subr.mxu0 0.0
      %1209 = vmatpush1.msra.mxu0 0.0
      %1210 = vmatprep.subr.mxu0 0.0
      %1211 = vmatpush1.msra.mxu0 0.0
      %1212 = vmatprep.subr.mxu0 0.0
      %1213 = vmatpush1.msra.mxu0 0.0
      %1214 = vmatprep.subr.mxu0 0.0
      %1215 = vmatpush1.msra.mxu0 0.0
      %1216 = vmatprep.subr.mxu0 0.0
      %1217 = vmatpush1.msra.mxu0 0.0
      %1218 = vmatprep.mubr.f32.mxu0 0.0
      %1219 = vmatmul.mubr.f32.gmra.mrb[0].mxu0 %v1090
      %v1220 = vpop.f32.mrb[0].mxu0
      %v1221 = vadd.f32 0.0, %v1220
      %v1222 = vpop.f32.mrb[0].mxu0
      %1223 = vmatprep.mubr.f32.mxu0 0.0
      %1224 = vmatmul.mubr.f32.gmra.mrb[0].mxu0 %v1092
      %v1225 = vpop.f32.mrb[0].mxu0
      %v1226 = vadd.f32 0.0, %v1225
      %v1227 = vpop.f32.mrb[0].mxu0
      %1228 = vmatprep.mubr.f32.mxu0 0.0
      %1229 = vmatmul.mubr.f32.gmra.mrb[0].mxu0 %v1094
      %v1230 = vpop.f32.mrb[0].mxu0
      %v1231 = vadd.f32 0.0, %v1230
      %v1232 = vpop.f32.mrb[0].mxu0
      %1233 = vmatprep.mubr.f32.mxu0 0.0
      %1234 = vmatmul.mubr.f32.gmra.mrb[0].mxu0 %v1096
      %v1235 = vpop.f32.mrb[0].mxu0
      %v1236 = vadd.f32 0.0, %v1235
      %v1237 = vpop.f32.mrb[0].mxu0
      %1238 = vmatprep.mubr.f32.mxu0 0.0
      %1239 = vmatmul.mubr.f32.gmra.mrb[0].mxu0 %v1098
      %v1240 = vpop.f32.mrb[0].mxu0
      %v1241 = vadd.f32 0.0, %v1240
      %v1242 = vpop.f32.mrb[0].mxu0
      %1243 = vmatprep.mubr.f32.mxu0 0.0
      %1244 = vmatmul.mubr.f32.gmra.mrb[0].mxu0 %v1100
      %v1245 = vpop.f32.mrb[0].mxu0
      %v1246 = vadd.f32 0.0, %v1245
      %v1247 = vpop.f32.mrb[0].mxu0
      %1248 = vmatprep.mubr.f32.mxu0 0.0
      %1249 = vmatmul.mubr.f32.gmra.mrb[0].mxu0 %v1102
      %v1250 = vpop.f32.mrb[0].mxu0
      %v1251 = vadd.f32 0.0, %v1250
      %v1252 = vpop.f32.mrb[0].mxu0
      %1253 = vmatprep.mubr.f32.mxu0 0.0
      %1254 = vmatmul.mubr.f32.gmra.mrb[0].mxu0 %v1104
      %v1255 = vpop.f32.mrb[0].mxu0
      %v1256 = vadd.f32 0.0, %v1255
      %v1257 = vpop.f32.mrb[0].mxu0
      %1258 = vmatprep.mubr.f32.mxu0 0.0
      %1259 = vmatmul.mubr.f32.gmra.mrb[0].mxu0 %v1106
      %v1260 = vpop.f32.mrb[0].mxu0
      %v1261 = vadd.f32 0.0, %v1260
      %v1262 = vpop.f32.mrb[0].mxu0
      %1263 = vmatprep.mubr.f32.mxu0 0.0
      %1264 = vmatmul.mubr.f32.gmra.mrb[0].mxu0 %v1108
      %v1265 = vpop.f32.mrb[0].mxu0
      %v1266 = vadd.f32 0.0, %v1265
      %v1267 = vpop.f32.mrb[0].mxu0
      %1268 = vmatprep.mubr.f32.mxu0 0.0
      %1269 = vmatmul.mubr.f32.gmra.mrb[0].mxu0 %v1110
      %v1270 = vpop.f32.mrb[0].mxu0
      %v1271 = vadd.f32 0.0, %v1270
      %v1272 = vpop.f32.mrb[0].mxu0
      %1273 = vmatprep.mubr.f32.mxu0 0.0
      %1274 = vmatmul.mubr.f32.gmra.mrb[0].mxu0 %v1112
      %v1275 = vpop.f32.mrb[0].mxu0
      %v1276 = vadd.f32 0.0, %v1275
      %v1277 = vpop.f32.mrb[0].mxu0
      %1278 = vmatprep.mubr.f32.mxu0 0.0
      %1279 = vmatmul.mubr.f32.gmra.mrb[0].mxu0 %v1114
      %v1280 = vpop.f32.mrb[0].mxu0
      %v1281 = vadd.f32 0.0, %v1280
      %v1282 = vpop.f32.mrb[0].mxu0
      %1283 = vmatprep.mubr.f32.mxu0 0.0
      %1284 = vmatmul.mubr.f32.gmra.mrb[0].mxu0 %v1116
      %v1285 = vpop.f32.mrb[0].mxu0
      %v1286 = vadd.f32 0.0, %v1285
      %v1287 = vpop.f32.mrb[0].mxu0
      %1288 = vmatprep.mubr.f32.mxu0 0.0
      %1289 = vmatmul.mubr.f32.gmra.mrb[0].mxu0 %v1118
      %v1290 = vpop.f32.mrb[0].mxu0
      %v1291 = vadd.f32 0.0, %v1290
      %v1292 = vpop.f32.mrb[0].mxu0
      %1293 = vmatprep.mubr.f32.mxu0 0.0
      %1294 = vmatmul.mubr.f32.gmra.mrb[0].mxu0 %v1120
      %v1295 = vpop.f32.mrb[0].mxu0
      %v1296 = vadd.f32 0.0, %v1295
      %v1297 = vpop.f32.mrb[0].mxu0
      %1298 = vmatprep.mubr.f32.mxu0 0.0
      %1299 = vmatmul.mubr.f32.gmra.mrb[0].mxu0 %v1122
      %v1300 = vpop.f32.mrb[0].mxu0
      %v1301 = vadd.f32 0.0, %v1300
      %v1302 = vpop.f32.mrb[0].mxu0
      %1303 = vmatprep.mubr.f32.mxu0 0.0
      %1304 = vmatmul.mubr.f32.gmra.mrb[0].mxu0 %v1124
      %v1305 = vpop.f32.mrb[0].mxu0
      %v1306 = vadd.f32 0.0, %v1305
      %v1307 = vpop.f32.mrb[0].mxu0
      %1308 = vmatprep.mubr.f32.mxu0 0.0
      %1309 = vmatmul.mubr.f32.gmra.mrb[0].mxu0 %v1126
      %v1310 = vpop.f32.mrb[0].mxu0
      %v1311 = vadd.f32 0.0, %v1310
      %v1312 = vpop.f32.mrb[0].mxu0
      %1313 = vmatprep.mubr.f32.mxu0 0.0
      %1314 = vmatmul.mubr.f32.gmra.mrb[0].mxu0 %v1128
      %v1315 = vpop.f32.mrb[0].mxu0
      %v1316 = vadd.f32 0.0, %v1315
      %v1317 = vpop.f32.mrb[0].mxu0
      %1318 = vmatprep.mubr.f32.mxu0 0.0
      %1319 = vmatmul.mubr.f32.gmra.mrb[0].mxu0 %v1130
      %v1320 = vpop.f32.mrb[0].mxu0
      %v1321 = vadd.f32 0.0, %v1320
      %v1322 = vpop.f32.mrb[0].mxu0
      %1323 = vmatprep.mubr.f32.mxu0 0.0
      %1324 = vmatmul.mubr.f32.gmra.mrb[0].mxu0 %v1132
      %v1325 = vpop.f32.mrb[0].mxu0
      %v1326 = vadd.f32 0.0, %v1325
      %v1327 = vpop.f32.mrb[0].mxu0
      %1328 = vmatprep.mubr.f32.mxu0 0.0
      %1329 = vmatmul.mubr.f32.gmra.mrb[0].mxu0 %v1134
      %v1330 = vpop.f32.mrb[0].mxu0
      %v1331 = vadd.f32 0.0, %v1330
      %v1332 = vpop.f32.mrb[0].mxu0
      %1333 = vmatprep.mubr.f32.mxu0 0.0
      %1334 = vmatmul.mubr.f32.gmra.mrb[0].mxu0 %v1136
      %v1335 = vpop.f32.mrb[0].mxu0
      %v1336 = vadd.f32 0.0, %v1335
      %v1337 = vpop.f32.mrb[0].mxu0
      %1338 = vmatprep.mubr.f32.mxu0 0.0
      %1339 = vmatmul.mubr.f32.gmra.mrb[0].mxu0 %v1138
      %v1340 = vpop.f32.mrb[0].mxu0
      %v1341 = vadd.f32 0.0, %v1340
      %v1342 = vpop.f32.mrb[0].mxu0
      %1343 = vmatprep.mubr.f32.mxu0 0.0
      %1344 = vmatmul.mubr.f32.gmra.mrb[0].mxu0 %v1140
      %v1345 = vpop.f32.mrb[0].mxu0
      %v1346 = vadd.f32 0.0, %v1345
      %v1347 = vpop.f32.mrb[0].mxu0
      %1348 = vmatprep.mubr.f32.mxu0 0.0
      %1349 = vmatmul.mubr.f32.gmra.mrb[0].mxu0 %v1142
      %v1350 = vpop.f32.mrb[0].mxu0
      %v1351 = vadd.f32 0.0, %v1350
      %v1352 = vpop.f32.mrb[0].mxu0
      %1353 = vmatprep.mubr.f32.mxu0 0.0
      %1354 = vmatmul.mubr.f32.gmra.mrb[0].mxu0 %v1144
      %v1355 = vpop.f32.mrb[0].mxu0
      %v1356 = vadd.f32 0.0, %v1355
      %v1357 = vpop.f32.mrb[0].mxu0
      %1358 = vmatprep.mubr.f32.mxu0 0.0
      %1359 = vmatmul.mubr.f32.gmra.mrb[0].mxu0 %v1146
      %v1360 = vpop.f32.mrb[0].mxu0
      %v1361 = vadd.f32 0.0, %v1360
      %v1362 = vpop.f32.mrb[0].mxu0
      %1363 = vmatprep.mubr.f32.mxu0 0.0
      %1364 = vmatmul.mubr.f32.gmra.mrb[0].mxu0 %v1148
      %v1365 = vpop.f32.mrb[0].mxu0
      %v1366 = vadd.f32 0.0, %v1365
      %v1367 = vpop.f32.mrb[0].mxu0
      %1368 = vmatprep.mubr.f32.mxu0 0.0
      %1369 = vmatmul.mubr.f32.gmra.mrb[0].mxu0 %v1150
      %v1370 = vpop.f32.mrb[0].mxu0
      %v1371 = vadd.f32 0.0, %v1370
      %v1372 = vpop.f32.mrb[0].mxu0
      %1373 = vmatprep.mubr.f32.mxu0 0.0
      %1374 = vmatmul.mubr.f32.gmra.mrb[0].mxu0 %v1152
      %v1375 = vpop.f32.mrb[0].mxu0
      %v1376 = vadd.f32 0.0, %v1375
      %v1377 = vpop.f32.mrb[0].mxu0
      %1378 = vdwg.mxu0
      %v1379 = vadd.f32 %v849, %v1221
      %v1380 = vadd.f32 %v854, %v1226
      %v1381 = vadd.f32 %v859, %v1231
      %v1382 = vadd.f32 %v864, %v1236
      %v1383 = vadd.f32 %v869, %v1241
      %v1384 = vadd.f32 %v874, %v1246
      %v1385 = vadd.f32 %v879, %v1251
      %v1386 = vadd.f32 %v884, %v1256
      %v1387 = vadd.f32 %v889, %v1261
      %v1388 = vadd.f32 %v894, %v1266
      %v1389 = vadd.f32 %v899, %v1271
      %v1390 = vadd.f32 %v904, %v1276
      %v1391 = vadd.f32 %v909, %v1281
      %v1392 = vadd.f32 %v914, %v1286
      %v1393 = vadd.f32 %v919, %v1291
      %v1394 = vadd.f32 %v924, %v1296
      %v1395 = vadd.f32 %v929, %v1301
      %v1396 = vadd.f32 %v934, %v1306
      %v1397 = vadd.f32 %v939, %v1311
      %v1398 = vadd.f32 %v944, %v1316
      %v1399 = vadd.f32 %v949, %v1321
      %v1400 = vadd.f32 %v954, %v1326
      %v1401 = vadd.f32 %v959, %v1331
      %v1402 = vadd.f32 %v964, %v1336
      %v1403 = vadd.f32 %v969, %v1341
      %v1404 = vadd.f32 %v974, %v1346
      %v1405 = vadd.f32 %v979, %v1351
      %v1406 = vadd.f32 %v984, %v1356
      %v1407 = vadd.f32 %v989, %v1361
      %v1408 = vadd.f32 %v994, %v1366
      %v1409 = vadd.f32 %v999, %v1371
      %v1410 = vadd.f32 %v1004, %v1376
      %s1411 = sadd.s32 %s245, 1
      %s1412 = smul.u32 %s1411, 24
      %s1413 = scalar_lea.vmem %s221, %s1412
      %v1414 = vld [vmem:[%s1413] sm:$0xff]
      %v1415 = vld [vmem:[%s1413 + $0x8] sm:$0xff]
      %v1416 = vld [vmem:[%s1413 + $0x10] sm:$0x3]
      %v1417 = vld [vmem:[%s1413 + $0x18] sm:$0xff]
      %v1418 = vld [vmem:[%s1413 + $0x20] sm:$0xff]
      %v1419 = vld [vmem:[%s1413 + $0x28] sm:$0x3]
      %v1420 = vld [vmem:[%s1413 + $0x30] sm:$0xff]
      %v1421 = vld [vmem:[%s1413 + $0x38] sm:$0xff]
      %v1422 = vld [vmem:[%s1413 + $0x40] sm:$0x3]
      %v1423 = vld [vmem:[%s1413 + $0x48] sm:$0xff]
      %v1424 = vld [vmem:[%s1413 + $0x50] sm:$0xff]
      %v1425 = vld [vmem:[%s1413 + $0x58] sm:$0x3]
      %v1426 = vld [vmem:[%s1413 + $0x60] sm:$0xff]
      %v1427 = vld [vmem:[%s1413 + $0x68] sm:$0xff]
      %v1428 = vld [vmem:[%s1413 + $0x70] sm:$0x3]
      %v1429 = vld [vmem:[%s1413 + $0x78] sm:$0xff]
      %v1430 = vld [vmem:[%s1413 + $0x80] sm:$0xff]
      %v1431 = vld [vmem:[%s1413 + $0x88] sm:$0x3]
      %v1432 = vld [vmem:[%s1413 + $0x90] sm:$0xff]
      %v1433 = vld [vmem:[%s1413 + $0x98] sm:$0xff]
      %v1434 = vld [vmem:[%s1413 + $0xa0] sm:$0x3]
      %v1435 = vld [vmem:[%s1413 + $0xa8] sm:$0xff]
      %v1436 = vld [vmem:[%s1413 + $0xb0] sm:$0xff]
      %v1437 = vld [vmem:[%s1413 + $0xb8] sm:$0x3]
      %v1438 = vld [vmem:[%s1413 + $0xc0] sm:$0xff]
      %v1439 = vld [vmem:[%s1413 + $0xc8] sm:$0xff]
      %v1440 = vld [vmem:[%s1413 + $0xd0] sm:$0x3]
      %v1441 = vld [vmem:[%s1413 + $0xd8] sm:$0xff]
      %v1442 = vld [vmem:[%s1413 + $0xe0] sm:$0xff]
      %v1443 = vld [vmem:[%s1413 + $0xe8] sm:$0x3]
      %v1444 = vld [vmem:[%s1413 + $0xf0] sm:$0xff]
      %v1445 = vld [vmem:[%s1413 + $0xf8] sm:$0xff]
      %v1446 = vld [vmem:[%s1413 + $0x100] sm:$0x3]
      %v1447 = vld [vmem:[%s1413 + $0x108] sm:$0xff]
      %v1448 = vld [vmem:[%s1413 + $0x110] sm:$0xff]
      %v1449 = vld [vmem:[%s1413 + $0x118] sm:$0x3]
      %v1450 = vld [vmem:[%s1413 + $0x120] sm:$0xff]
      %v1451 = vld [vmem:[%s1413 + $0x128] sm:$0xff]
      %v1452 = vld [vmem:[%s1413 + $0x130] sm:$0x3]
      %v1453 = vld [vmem:[%s1413 + $0x138] sm:$0xff]
      %v1454 = vld [vmem:[%s1413 + $0x140] sm:$0xff]
      %v1455 = vld [vmem:[%s1413 + $0x148] sm:$0x3]
      %v1456 = vld [vmem:[%s1413 + $0x150] sm:$0xff]
      %v1457 = vld [vmem:[%s1413 + $0x158] sm:$0xff]
      %v1458 = vld [vmem:[%s1413 + $0x160] sm:$0x3]
      %v1459 = vld [vmem:[%s1413 + $0x168] sm:$0xff]
      %v1460 = vld [vmem:[%s1413 + $0x170] sm:$0xff]
      %v1461 = vld [vmem:[%s1413 + $0x178] sm:$0x3]
      %s1462 = scalar_lea.vmem %s225, 24
      %v1463 = vld [vmem:[%s1462] sm:$0xff]
      %v1465 = vsel %vm428, %v1414, 0
      %v1468 = vsel %vm428, %v1415, 0
      %v1471 = vsel %vm428, %v1417, 0
      %v1474 = vsel %vm428, %v1418, 0
      %v1477 = vsel %vm428, %v1420, 0
      %v1480 = vsel %vm428, %v1421, 0
      %v1483 = vsel %vm428, %v1423, 0
      %v1486 = vsel %vm428, %v1424, 0
      %v1489 = vsel %vm428, %v1426, 0
      %v1492 = vsel %vm428, %v1427, 0
      %v1495 = vsel %vm428, %v1429, 0
      %v1498 = vsel %vm428, %v1430, 0
      %v1501 = vsel %vm428, %v1432, 0
      %v1504 = vsel %vm428, %v1433, 0
      %v1507 = vsel %vm428, %v1435, 0
      %v1510 = vsel %vm428, %v1436, 0
      %v1513 = vsel %vm428, %v1438, 0
      %v1516 = vsel %vm428, %v1439, 0
      %v1519 = vsel %vm428, %v1441, 0
      %v1522 = vsel %vm428, %v1442, 0
      %v1525 = vsel %vm428, %v1444, 0
      %v1528 = vsel %vm428, %v1445, 0
      %v1531 = vsel %vm428, %v1447, 0
      %v1534 = vsel %vm428, %v1448, 0
      %v1537 = vsel %vm428, %v1450, 0
      %v1540 = vsel %vm428, %v1451, 0
      %v1543 = vsel %vm428, %v1453, 0
      %v1546 = vsel %vm428, %v1454, 0
      %v1549 = vsel %vm428, %v1456, 0
      %v1552 = vsel %vm428, %v1457, 0
      %v1555 = vsel %vm428, %v1459, 0
      %v1558 = vsel %vm428, %v1460, 0
      %1560 = vmatprep.subr.mxu0 0.0
      %1561 = vmatpush1.msra.mxu0 %v1463
      %1562 = vmatprep.subr.mxu0 0.0
      %1563 = vmatpush1.msra.mxu0 0.0
      %1564 = vmatprep.subr.mxu0 0.0
      %1565 = vmatpush1.msra.mxu0 0.0
      %1566 = vmatprep.subr.mxu0 0.0
      %1567 = vmatpush1.msra.mxu0 0.0
      %1568 = vmatprep.subr.mxu0 0.0
      %1569 = vmatpush1.msra.mxu0 0.0
      %1570 = vmatprep.subr.mxu0 0.0
      %1571 = vmatpush1.msra.mxu0 0.0
      %1572 = vmatprep.subr.mxu0 0.0
      %1573 = vmatpush1.msra.mxu0 0.0
      %1574 = vmatprep.subr.mxu0 0.0
      %1575 = vmatpush1.msra.mxu0 0.0
      %1576 = vmatprep.subr.mxu0 0.0
      %1577 = vmatpush1.msra.mxu0 0.0
      %1578 = vmatprep.subr.mxu0 0.0
      %1579 = vmatpush1.msra.mxu0 0.0
      %1580 = vmatprep.subr.mxu0 0.0
      %1581 = vmatpush1.msra.mxu0 0.0
      %1582 = vmatprep.subr.mxu0 0.0
      %1583 = vmatpush1.msra.mxu0 0.0
      %1584 = vmatprep.subr.mxu0 0.0
      %1585 = vmatpush1.msra.mxu0 0.0
      %1586 = vmatprep.subr.mxu0 0.0
      %1587 = vmatpush1.msra.mxu0 0.0
      %1588 = vmatprep.subr.mxu0 0.0
      %1589 = vmatpush1.msra.mxu0 0.0
      %1590 = vmatprep.subr.mxu0 0.0
      %1591 = vmatpush1.msra.mxu0 0.0
      %1592 = vmatprep.subr.mxu0 0.0
      %1593 = vmatpush1.msra.mxu0 0.0
      %1594 = vmatprep.subr.mxu0 0.0
      %1595 = vmatpush1.msra.mxu0 0.0
      %1596 = vmatprep.subr.mxu0 0.0
      %1597 = vmatpush1.msra.mxu0 0.0
      %1598 = vmatprep.subr.mxu0 0.0
      %1599 = vmatpush1.msra.mxu0 0.0
      %1600 = vmatprep.subr.mxu0 0.0
      %1601 = vmatpush1.msra.mxu0 0.0
      %1602 = vmatprep.subr.mxu0 0.0
      %1603 = vmatpush1.msra.mxu0 0.0
      %1604 = vmatprep.subr.mxu0 0.0
      %1605 = vmatpush1.msra.mxu0 0.0
      %1606 = vmatprep.subr.mxu0 0.0
      %1607 = vmatpush1.msra.mxu0 0.0
      %1608 = vmatprep.subr.mxu0 0.0
      %1609 = vmatpush1.msra.mxu0 0.0
      %1610 = vmatprep.subr.mxu0 0.0
      %1611 = vmatpush1.msra.mxu0 0.0
      %1612 = vmatprep.subr.mxu0 0.0
      %1613 = vmatpush1.msra.mxu0 0.0
      %1614 = vmatprep.subr.mxu0 0.0
      %1615 = vmatpush1.msra.mxu0 0.0
      %1616 = vmatprep.subr.mxu0 0.0
      %1617 = vmatpush1.msra.mxu0 0.0
      %1618 = vmatprep.subr.mxu0 0.0
      %1619 = vmatpush1.msra.mxu0 0.0
      %1620 = vmatprep.subr.mxu0 0.0
      %1621 = vmatpush1.msra.mxu0 0.0
      %1622 = vmatprep.subr.mxu0 0.0
      %1623 = vmatpush1.msra.mxu0 0.0
      %1624 = vmatprep.mubr.f32.mxu0 0.0
      %1625 = vmatmul.mubr.f32.gmra.mrb[0].mxu0 %v1465
      %v1626 = vpop.f32.mrb[0].mxu0
      %v1627 = vadd.f32 0.0, %v1626
      %v1628 = vpop.f32.mrb[0].mxu0
      %1629 = vmatprep.mubr.f32.mxu0 0.0
      %1630 = vmatmul.mubr.f32.gmra.mrb[0].mxu0 %v1468
      %v1631 = vpop.f32.mrb[0].mxu0
      %v1632 = vadd.f32 0.0, %v1631
      %v1633 = vpop.f32.mrb[0].mxu0
      %1634 = vmatprep.mubr.f32.mxu0 0.0
      %1635 = vmatmul.mubr.f32.gmra.mrb[0].mxu0 %v1471
      %v1636 = vpop.f32.mrb[0].mxu0
      %v1637 = vadd.f32 0.0, %v1636
      %v1638 = vpop.f32.mrb[0].mxu0
      %1639 = vmatprep.mubr.f32.mxu0 0.0
      %1640 = vmatmul.mubr.f32.gmra.mrb[0].mxu0 %v1474
      %v1641 = vpop.f32.mrb[0].mxu0
      %v1642 = vadd.f32 0.0, %v1641
      %v1643 = vpop.f32.mrb[0].mxu0
      %1644 = vmatprep.mubr.f32.mxu0 0.0
      %1645 = vmatmul.mubr.f32.gmra.mrb[0].mxu0 %v1477
      %v1646 = vpop.f32.mrb[0].mxu0
      %v1647 = vadd.f32 0.0, %v1646
      %v1648 = vpop.f32.mrb[0].mxu0
      %1649 = vmatprep.mubr.f32.mxu0 0.0
      %1650 = vmatmul.mubr.f32.gmra.mrb[0].mxu0 %v1480
      %v1651 = vpop.f32.mrb[0].mxu0
      %v1652 = vadd.f32 0.0, %v1651
      %v1653 = vpop.f32.mrb[0].mxu0
      %1654 = vmatprep.mubr.f32.mxu0 0.0
      %1655 = vmatmul.mubr.f32.gmra.mrb[0].mxu0 %v1483
      %v1656 = vpop.f32.mrb[0].mxu0
      %v1657 = vadd.f32 0.0, %v1656
      %v1658 = vpop.f32.mrb[0].mxu0
      %1659 = vmatprep.mubr.f32.mxu0 0.0
      %1660 = vmatmul.mubr.f32.gmra.mrb[0].mxu0 %v1486
      %v1661 = vpop.f32.mrb[0].mxu0
      %v1662 = vadd.f32 0.0, %v1661
      %v1663 = vpop.f32.mrb[0].mxu0
      %1664 = vmatprep.mubr.f32.mxu0 0.0
      %1665 = vmatmul.mubr.f32.gmra.mrb[0].mxu0 %v1489
      %v1666 = vpop.f32.mrb[0].mxu0
      %v1667 = vadd.f32 0.0, %v1666
      %v1668 = vpop.f32.mrb[0].mxu0
      %1669 = vmatprep.mubr.f32.mxu0 0.0
      %1670 = vmatmul.mubr.f32.gmra.mrb[0].mxu0 %v1492
      %v1671 = vpop.f32.mrb[0].mxu0
      %v1672 = vadd.f32 0.0, %v1671
      %v1673 = vpop.f32.mrb[0].mxu0
      %1674 = vmatprep.mubr.f32.mxu0 0.0
      %1675 = vmatmul.mubr.f32.gmra.mrb[0].mxu0 %v1495
      %v1676 = vpop.f32.mrb[0].mxu0
      %v1677 = vadd.f32 0.0, %v1676
      %v1678 = vpop.f32.mrb[0].mxu0
      %1679 = vmatprep.mubr.f32.mxu0 0.0
      %1680 = vmatmul.mubr.f32.gmra.mrb[0].mxu0 %v1498
      %v1681 = vpop.f32.mrb[0].mxu0
      %v1682 = vadd.f32 0.0, %v1681
      %v1683 = vpop.f32.mrb[0].mxu0
      %1684 = vmatprep.mubr.f32.mxu0 0.0
      %1685 = vmatmul.mubr.f32.gmra.mrb[0].mxu0 %v1501
      %v1686 = vpop.f32.mrb[0].mxu0
      %v1687 = vadd.f32 0.0, %v1686
      %v1688 = vpop.f32.mrb[0].mxu0
      %1689 = vmatprep.mubr.f32.mxu0 0.0
      %1690 = vmatmul.mubr.f32.gmra.mrb[0].mxu0 %v1504
      %v1691 = vpop.f32.mrb[0].mxu0
      %v1692 = vadd.f32 0.0, %v1691
      %v1693 = vpop.f32.mrb[0].mxu0
      %1694 = vmatprep.mubr.f32.mxu0 0.0
      %1695 = vmatmul.mubr.f32.gmra.mrb[0].mxu0 %v1507
      %v1696 = vpop.f32.mrb[0].mxu0
      %v1697 = vadd.f32 0.0, %v1696
      %v1698 = vpop.f32.mrb[0].mxu0
      %1699 = vmatprep.mubr.f32.mxu0 0.0
      %1700 = vmatmul.mubr.f32.gmra.mrb[0].mxu0 %v1510
      %v1701 = vpop.f32.mrb[0].mxu0
      %v1702 = vadd.f32 0.0, %v1701
      %v1703 = vpop.f32.mrb[0].mxu0
      %1704 = vmatprep.mubr.f32.mxu0 0.0
      %1705 = vmatmul.mubr.f32.gmra.mrb[0].mxu0 %v1513
      %v1706 = vpop.f32.mrb[0].mxu0
      %v1707 = vadd.f32 0.0, %v1706
      %v1708 = vpop.f32.mrb[0].mxu0
      %1709 = vmatprep.mubr.f32.mxu0 0.0
      %1710 = vmatmul.mubr.f32.gmra.mrb[0].mxu0 %v1516
      %v1711 = vpop.f32.mrb[0].mxu0
      %v1712 = vadd.f32 0.0, %v1711
      %v1713 = vpop.f32.mrb[0].mxu0
      %1714 = vmatprep.mubr.f32.mxu0 0.0
      %1715 = vmatmul.mubr.f32.gmra.mrb[0].mxu0 %v1519
      %v1716 = vpop.f32.mrb[0].mxu0
      %v1717 = vadd.f32 0.0, %v1716
      %v1718 = vpop.f32.mrb[0].mxu0
      %1719 = vmatprep.mubr.f32.mxu0 0.0
      %1720 = vmatmul.mubr.f32.gmra.mrb[0].mxu0 %v1522
      %v1721 = vpop.f32.mrb[0].mxu0
      %v1722 = vadd.f32 0.0, %v1721
      %v1723 = vpop.f32.mrb[0].mxu0
      %1724 = vmatprep.mubr.f32.mxu0 0.0
      %1725 = vmatmul.mubr.f32.gmra.mrb[0].mxu0 %v1525
      %v1726 = vpop.f32.mrb[0].mxu0
      %v1727 = vadd.f32 0.0, %v1726
      %v1728 = vpop.f32.mrb[0].mxu0
      %1729 = vmatprep.mubr.f32.mxu0 0.0
      %1730 = vmatmul.mubr.f32.gmra.mrb[0].mxu0 %v1528
      %v1731 = vpop.f32.mrb[0].mxu0
      %v1732 = vadd.f32 0.0, %v1731
      %v1733 = vpop.f32.mrb[0].mxu0
      %1734 = vmatprep.mubr.f32.mxu0 0.0
      %1735 = vmatmul.mubr.f32.gmra.mrb[0].mxu0 %v1531
      %v1736 = vpop.f32.mrb[0].mxu0
      %v1737 = vadd.f32 0.0, %v1736
      %v1738 = vpop.f32.mrb[0].mxu0
      %1739 = vmatprep.mubr.f32.mxu0 0.0
      %1740 = vmatmul.mubr.f32.gmra.mrb[0].mxu0 %v1534
      %v1741 = vpop.f32.mrb[0].mxu0
      %v1742 = vadd.f32 0.0, %v1741
      %v1743 = vpop.f32.mrb[0].mxu0
      %1744 = vmatprep.mubr.f32.mxu0 0.0
      %1745 = vmatmul.mubr.f32.gmra.mrb[0].mxu0 %v1537
      %v1746 = vpop.f32.mrb[0].mxu0
      %v1747 = vadd.f32 0.0, %v1746
      %v1748 = vpop.f32.mrb[0].mxu0
      %1749 = vmatprep.mubr.f32.mxu0 0.0
      %1750 = vmatmul.mubr.f32.gmra.mrb[0].mxu0 %v1540
      %v1751 = vpop.f32.mrb[0].mxu0
      %v1752 = vadd.f32 0.0, %v1751
      %v1753 = vpop.f32.mrb[0].mxu0
      %1754 = vmatprep.mubr.f32.mxu0 0.0
      %1755 = vmatmul.mubr.f32.gmra.mrb[0].mxu0 %v1543
      %v1756 = vpop.f32.mrb[0].mxu0
      %v1757 = vadd.f32 0.0, %v1756
      %v1758 = vpop.f32.mrb[0].mxu0
      %1759 = vmatprep.mubr.f32.mxu0 0.0
      %1760 = vmatmul.mubr.f32.gmra.mrb[0].mxu0 %v1546
      %v1761 = vpop.f32.mrb[0].mxu0
      %v1762 = vadd.f32 0.0, %v1761
      %v1763 = vpop.f32.mrb[0].mxu0
      %1764 = vmatprep.mubr.f32.mxu0 0.0
      %1765 = vmatmul.mubr.f32.gmra.mrb[0].mxu0 %v1549
      %v1766 = vpop.f32.mrb[0].mxu0
      %v1767 = vadd.f32 0.0, %v1766
      %v1768 = vpop.f32.mrb[0].mxu0
      %1769 = vmatprep.mubr.f32.mxu0 0.0
      %1770 = vmatmul.mubr.f32.gmra.mrb[0].mxu0 %v1552
      %v1771 = vpop.f32.mrb[0].mxu0
      %v1772 = vadd.f32 0.0, %v1771
      %v1773 = vpop.f32.mrb[0].mxu0
      %1774 = vmatprep.mubr.f32.mxu0 0.0
      %1775 = vmatmul.mubr.f32.gmra.mrb[0].mxu0 %v1555
      %v1776 = vpop.f32.mrb[0].mxu0
      %v1777 = vadd.f32 0.0, %v1776
      %v1778 = vpop.f32.mrb[0].mxu0
      %1779 = vmatprep.mubr.f32.mxu0 0.0
      %1780 = vmatmul.mubr.f32.gmra.mrb[0].mxu0 %v1558
      %v1781 = vpop.f32.mrb[0].mxu0
      %v1782 = vadd.f32 0.0, %v1781
      %v1783 = vpop.f32.mrb[0].mxu0
      %1784 = vdwg.mxu0
      %v1785 = vadd.f32 %v1379, %v1627
      %v1786 = vadd.f32 %v1380, %v1632
      %v1787 = vadd.f32 %v1381, %v1637
      %v1788 = vadd.f32 %v1382, %v1642
      %v1789 = vadd.f32 %v1383, %v1647
      %v1790 = vadd.f32 %v1384, %v1652
      %v1791 = vadd.f32 %v1385, %v1657
      %v1792 = vadd.f32 %v1386, %v1662
      %v1793 = vadd.f32 %v1387, %v1667
      %v1794 = vadd.f32 %v1388, %v1672
      %v1795 = vadd.f32 %v1389, %v1677
      %v1796 = vadd.f32 %v1390, %v1682
      %v1797 = vadd.f32 %v1391, %v1687
      %v1798 = vadd.f32 %v1392, %v1692
      %v1799 = vadd.f32 %v1393, %v1697
      %v1800 = vadd.f32 %v1394, %v1702
      %v1801 = vadd.f32 %v1395, %v1707
      %v1802 = vadd.f32 %v1396, %v1712
      %v1803 = vadd.f32 %v1397, %v1717
      %v1804 = vadd.f32 %v1398, %v1722
      %v1805 = vadd.f32 %v1399, %v1727
      %v1806 = vadd.f32 %v1400, %v1732
      %v1807 = vadd.f32 %v1401, %v1737
      %v1808 = vadd.f32 %v1402, %v1742
      %v1809 = vadd.f32 %v1403, %v1747
      %v1810 = vadd.f32 %v1404, %v1752
      %v1811 = vadd.f32 %v1405, %v1757
      %v1812 = vadd.f32 %v1406, %v1762
      %v1813 = vadd.f32 %v1407, %v1767
      %v1814 = vadd.f32 %v1408, %v1772
      %v1815 = vadd.f32 %v1409, %v1777
      %v1816 = vadd.f32 %v1410, %v1782
      %v1833 = vrot.slane %v1414, 1
      %v1834 = vrot.slane %v1415, 1
      %v1835 = vsel %vm345, %v1833, %v1834
      %v1836 = vrot.slane %v1416, 1
      %v1837 = vsel %vm345, %v1834, %v1836
      %v1838 = vrot.slane %v1417, 1
      %v1839 = vrot.slane %v1418, 1
      %v1840 = vsel %vm345, %v1838, %v1839
      %v1841 = vrot.slane %v1419, 1
      %v1842 = vsel %vm345, %v1839, %v1841
      %v1843 = vrot.slane %v1420, 1
      %v1844 = vrot.slane %v1421, 1
      %v1845 = vsel %vm345, %v1843, %v1844
      %v1846 = vrot.slane %v1422, 1
      %v1847 = vsel %vm345, %v1844, %v1846
      %v1848 = vrot.slane %v1423, 1
      %v1849 = vrot.slane %v1424, 1
      %v1850 = vsel %vm345, %v1848, %v1849
      %v1851 = vrot.slane %v1425, 1
      %v1852 = vsel %vm345, %v1849, %v1851
      %v1853 = vrot.slane %v1426, 1
      %v1854 = vrot.slane %v1427, 1
      %v1855 = vsel %vm345, %v1853, %v1854
      %v1856 = vrot.slane %v1428, 1
      %v1857 = vsel %vm345, %v1854, %v1856
      %v1858 = vrot.slane %v1429, 1
      %v1859 = vrot.slane %v1430, 1
      %v1860 = vsel %vm345, %v1858, %v1859
      %v1861 = vrot.slane %v1431, 1
      %v1862 = vsel %vm345, %v1859, %v1861
      %v1863 = vrot.slane %v1432, 1
      %v1864 = vrot.slane %v1433, 1
      %v1865 = vsel %vm345, %v1863, %v1864
      %v1866 = vrot.slane %v1434, 1
      %v1867 = vsel %vm345, %v1864, %v1866
      %v1868 = vrot.slane %v1435, 1
      %v1869 = vrot.slane %v1436, 1
      %v1870 = vsel %vm345, %v1868, %v1869
      %v1871 = vrot.slane %v1437, 1
      %v1872 = vsel %vm345, %v1869, %v1871
      %v1873 = vrot.slane %v1438, 1
      %v1874 = vrot.slane %v1439, 1
      %v1875 = vsel %vm345, %v1873, %v1874
      %v1876 = vrot.slane %v1440, 1
      %v1877 = vsel %vm345, %v1874, %v1876
      %v1878 = vrot.slane %v1441, 1
      %v1879 = vrot.slane %v1442, 1
      %v1880 = vsel %vm345, %v1878, %v1879
      %v1881 = vrot.slane %v1443, 1
      %v1882 = vsel %vm345, %v1879, %v1881
      %v1883 = vrot.slane %v1444, 1
      %v1884 = vrot.slane %v1445, 1
      %v1885 = vsel %vm345, %v1883, %v1884
      %v1886 = vrot.slane %v1446, 1
      %v1887 = vsel %vm345, %v1884, %v1886
      %v1888 = vrot.slane %v1447, 1
      %v1889 = vrot.slane %v1448, 1
      %v1890 = vsel %vm345, %v1888, %v1889
      %v1891 = vrot.slane %v1449, 1
      %v1892 = vsel %vm345, %v1889, %v1891
      %v1893 = vrot.slane %v1450, 1
      %v1894 = vrot.slane %v1451, 1
      %v1895 = vsel %vm345, %v1893, %v1894
      %v1896 = vrot.slane %v1452, 1
      %v1897 = vsel %vm345, %v1894, %v1896
      %v1898 = vrot.slane %v1453, 1
      %v1899 = vrot.slane %v1454, 1
      %v1900 = vsel %vm345, %v1898, %v1899
      %v1901 = vrot.slane %v1455, 1
      %v1902 = vsel %vm345, %v1899, %v1901
      %v1903 = vrot.slane %v1456, 1
      %v1904 = vrot.slane %v1457, 1
      %v1905 = vsel %vm345, %v1903, %v1904
      %v1906 = vrot.slane %v1458, 1
      %v1907 = vsel %vm345, %v1904, %v1906
      %v1908 = vrot.slane %v1459, 1
      %v1909 = vrot.slane %v1460, 1
      %v1910 = vsel %vm345, %v1908, %v1909
      %v1911 = vrot.slane %v1461, 1
      %v1912 = vsel %vm345, %v1909, %v1911
      %s1913 = scalar_lea.vmem %s225, 32
      %v1914 = vld [vmem:[%s1913] sm:$0xff]
      %v1915 = vsel %vm428, %v1835, 0
      %v1917 = vsel %vm428, %v1837, 0
      %v1919 = vsel %vm428, %v1840, 0
      %v1921 = vsel %vm428, %v1842, 0
      %v1923 = vsel %vm428, %v1845, 0
      %v1925 = vsel %vm428, %v1847, 0
      %v1927 = vsel %vm428, %v1850, 0
      %v1929 = vsel %vm428, %v1852, 0
      %v1931 = vsel %vm428, %v1855, 0
      %v1933 = vsel %vm428, %v1857, 0
      %v1935 = vsel %vm428, %v1860, 0
      %v1937 = vsel %vm428, %v1862, 0
      %v1939 = vsel %vm428, %v1865, 0
      %v1941 = vsel %vm428, %v1867, 0
      %v1943 = vsel %vm428, %v1870, 0
      %v1945 = vsel %vm428, %v1872, 0
      %v1947 = vsel %vm428, %v1875, 0
      %v1949 = vsel %vm428, %v1877, 0
      %v1951 = vsel %vm428, %v1880, 0
      %v1953 = vsel %vm428, %v1882, 0
      %v1955 = vsel %vm428, %v1885, 0
      %v1957 = vsel %vm428, %v1887, 0
      %v1959 = vsel %vm428, %v1890, 0
      %v1961 = vsel %vm428, %v1892, 0
      %v1963 = vsel %vm428, %v1895, 0
      %v1965 = vsel %vm428, %v1897, 0
      %v1967 = vsel %vm428, %v1900, 0
      %v1969 = vsel %vm428, %v1902, 0
      %v1971 = vsel %vm428, %v1905, 0
      %v1973 = vsel %vm428, %v1907, 0
      %v1975 = vsel %vm428, %v1910, 0
      %v1977 = vsel %vm428, %v1912, 0
      %1979 = vmatprep.subr.mxu0 0.0
      %1980 = vmatpush1.msra.mxu0 %v1914
      %1981 = vmatprep.subr.mxu0 0.0
      %1982 = vmatpush1.msra.mxu0 0.0
      %1983 = vmatprep.subr.mxu0 0.0
      %1984 = vmatpush1.msra.mxu0 0.0
      %1985 = vmatprep.subr.mxu0 0.0
      %1986 = vmatpush1.msra.mxu0 0.0
      %1987 = vmatprep.subr.mxu0 0.0
      %1988 = vmatpush1.msra.mxu0 0.0
      %1989 = vmatprep.subr.mxu0 0.0
      %1990 = vmatpush1.msra.mxu0 0.0
      %1991 = vmatprep.subr.mxu0 0.0
      %1992 = vmatpush1.msra.mxu0 0.0
      %1993 = vmatprep.subr.mxu0 0.0
      %1994 = vmatpush1.msra.mxu0 0.0
      %1995 = vmatprep.subr.mxu0 0.0
      %1996 = vmatpush1.msra.mxu0 0.0
      %1997 = vmatprep.subr.mxu0 0.0
      %1998 = vmatpush1.msra.mxu0 0.0
      %1999 = vmatprep.subr.mxu0 0.0
      %2000 = vmatpush1.msra.mxu0 0.0
      %2001 = vmatprep.subr.mxu0 0.0
      %2002 = vmatpush1.msra.mxu0 0.0
      %2003 = vmatprep.subr.mxu0 0.0
      %2004 = vmatpush1.msra.mxu0 0.0
      %2005 = vmatprep.subr.mxu0 0.0
      %2006 = vmatpush1.msra.mxu0 0.0
      %2007 = vmatprep.subr.mxu0 0.0
      %2008 = vmatpush1.msra.mxu0 0.0
      %2009 = vmatprep.subr.mxu0 0.0
      %2010 = vmatpush1.msra.mxu0 0.0
      %2011 = vmatprep.subr.mxu0 0.0
      %2012 = vmatpush1.msra.mxu0 0.0
      %2013 = vmatprep.subr.mxu0 0.0
      %2014 = vmatpush1.msra.mxu0 0.0
      %2015 = vmatprep.subr.mxu0 0.0
      %2016 = vmatpush1.msra.mxu0 0.0
      %2017 = vmatprep.subr.mxu0 0.0
      %2018 = vmatpush1.msra.mxu0 0.0
      %2019 = vmatprep.subr.mxu0 0.0
      %2020 = vmatpush1.msra.mxu0 0.0
      %2021 = vmatprep.subr.mxu0 0.0
      %2022 = vmatpush1.msra.mxu0 0.0
      %2023 = vmatprep.subr.mxu0 0.0
      %2024 = vmatpush1.msra.mxu0 0.0
      %2025 = vmatprep.subr.mxu0 0.0
      %2026 = vmatpush1.msra.mxu0 0.0
      %2027 = vmatprep.subr.mxu0 0.0
      %2028 = vmatpush1.msra.mxu0 0.0
      %2029 = vmatprep.subr.mxu0 0.0
      %2030 = vmatpush1.msra.mxu0 0.0
      %2031 = vmatprep.subr.mxu0 0.0
      %2032 = vmatpush1.msra.mxu0 0.0
      %2033 = vmatprep.subr.mxu0 0.0
      %2034 = vmatpush1.msra.mxu0 0.0
      %2035 = vmatprep.subr.mxu0 0.0
      %2036 = vmatpush1.msra.mxu0 0.0
      %2037 = vmatprep.subr.mxu0 0.0
      %2038 = vmatpush1.msra.mxu0 0.0
      %2039 = vmatprep.subr.mxu0 0.0
      %2040 = vmatpush1.msra.mxu0 0.0
      %2041 = vmatprep.subr.mxu0 0.0
      %2042 = vmatpush1.msra.mxu0 0.0
      %2043 = vmatprep.mubr.f32.mxu0 0.0
      %2044 = vmatmul.mubr.f32.gmra.mrb[0].mxu0 %v1915
      %v2045 = vpop.f32.mrb[0].mxu0
      %v2046 = vadd.f32 0.0, %v2045
      %v2047 = vpop.f32.mrb[0].mxu0
      %2048 = vmatprep.mubr.f32.mxu0 0.0
      %2049 = vmatmul.mubr.f32.gmra.mrb[0].mxu0 %v1917
      %v2050 = vpop.f32.mrb[0].mxu0
      %v2051 = vadd.f32 0.0, %v2050
      %v2052 = vpop.f32.mrb[0].mxu0
      %2053 = vmatprep.mubr.f32.mxu0 0.0
      %2054 = vmatmul.mubr.f32.gmra.mrb[0].mxu0 %v1919
      %v2055 = vpop.f32.mrb[0].mxu0
      %v2056 = vadd.f32 0.0, %v2055
      %v2057 = vpop.f32.mrb[0].mxu0
      %2058 = vmatprep.mubr.f32.mxu0 0.0
      %2059 = vmatmul.mubr.f32.gmra.mrb[0].mxu0 %v1921
      %v2060 = vpop.f32.mrb[0].mxu0
      %v2061 = vadd.f32 0.0, %v2060
      %v2062 = vpop.f32.mrb[0].mxu0
      %2063 = vmatprep.mubr.f32.mxu0 0.0
      %2064 = vmatmul.mubr.f32.gmra.mrb[0].mxu0 %v1923
      %v2065 = vpop.f32.mrb[0].mxu0
      %v2066 = vadd.f32 0.0, %v2065
      %v2067 = vpop.f32.mrb[0].mxu0
      %2068 = vmatprep.mubr.f32.mxu0 0.0
      %2069 = vmatmul.mubr.f32.gmra.mrb[0].mxu0 %v1925
      %v2070 = vpop.f32.mrb[0].mxu0
      %v2071 = vadd.f32 0.0, %v2070
      %v2072 = vpop.f32.mrb[0].mxu0
      %2073 = vmatprep.mubr.f32.mxu0 0.0
      %2074 = vmatmul.mubr.f32.gmra.mrb[0].mxu0 %v1927
      %v2075 = vpop.f32.mrb[0].mxu0
      %v2076 = vadd.f32 0.0, %v2075
      %v2077 = vpop.f32.mrb[0].mxu0
      %2078 = vmatprep.mubr.f32.mxu0 0.0
      %2079 = vmatmul.mubr.f32.gmra.mrb[0].mxu0 %v1929
      %v2080 = vpop.f32.mrb[0].mxu0
      %v2081 = vadd.f32 0.0, %v2080
      %v2082 = vpop.f32.mrb[0].mxu0
      %2083 = vmatprep.mubr.f32.mxu0 0.0
      %2084 = vmatmul.mubr.f32.gmra.mrb[0].mxu0 %v1931
      %v2085 = vpop.f32.mrb[0].mxu0
      %v2086 = vadd.f32 0.0, %v2085
      %v2087 = vpop.f32.mrb[0].mxu0
      %2088 = vmatprep.mubr.f32.mxu0 0.0
      %2089 = vmatmul.mubr.f32.gmra.mrb[0].mxu0 %v1933
      %v2090 = vpop.f32.mrb[0].mxu0
      %v2091 = vadd.f32 0.0, %v2090
      %v2092 = vpop.f32.mrb[0].mxu0
      %2093 = vmatprep.mubr.f32.mxu0 0.0
      %2094 = vmatmul.mubr.f32.gmra.mrb[0].mxu0 %v1935
      %v2095 = vpop.f32.mrb[0].mxu0
      %v2096 = vadd.f32 0.0, %v2095
      %v2097 = vpop.f32.mrb[0].mxu0
      %2098 = vmatprep.mubr.f32.mxu0 0.0
      %2099 = vmatmul.mubr.f32.gmra.mrb[0].mxu0 %v1937
      %v2100 = vpop.f32.mrb[0].mxu0
      %v2101 = vadd.f32 0.0, %v2100
      %v2102 = vpop.f32.mrb[0].mxu0
      %2103 = vmatprep.mubr.f32.mxu0 0.0
      %2104 = vmatmul.mubr.f32.gmra.mrb[0].mxu0 %v1939
      %v2105 = vpop.f32.mrb[0].mxu0
      %v2106 = vadd.f32 0.0, %v2105
      %v2107 = vpop.f32.mrb[0].mxu0
      %2108 = vmatprep.mubr.f32.mxu0 0.0
      %2109 = vmatmul.mubr.f32.gmra.mrb[0].mxu0 %v1941
      %v2110 = vpop.f32.mrb[0].mxu0
      %v2111 = vadd.f32 0.0, %v2110
      %v2112 = vpop.f32.mrb[0].mxu0
      %2113 = vmatprep.mubr.f32.mxu0 0.0
      %2114 = vmatmul.mubr.f32.gmra.mrb[0].mxu0 %v1943
      %v2115 = vpop.f32.mrb[0].mxu0
      %v2116 = vadd.f32 0.0, %v2115
      %v2117 = vpop.f32.mrb[0].mxu0
      %2118 = vmatprep.mubr.f32.mxu0 0.0
      %2119 = vmatmul.mubr.f32.gmra.mrb[0].mxu0 %v1945
      %v2120 = vpop.f32.mrb[0].mxu0
      %v2121 = vadd.f32 0.0, %v2120
      %v2122 = vpop.f32.mrb[0].mxu0
      %2123 = vmatprep.mubr.f32.mxu0 0.0
      %2124 = vmatmul.mubr.f32.gmra.mrb[0].mxu0 %v1947
      %v2125 = vpop.f32.mrb[0].mxu0
      %v2126 = vadd.f32 0.0, %v2125
      %v2127 = vpop.f32.mrb[0].mxu0
      %2128 = vmatprep.mubr.f32.mxu0 0.0
      %2129 = vmatmul.mubr.f32.gmra.mrb[0].mxu0 %v1949
      %v2130 = vpop.f32.mrb[0].mxu0
      %v2131 = vadd.f32 0.0, %v2130
      %v2132 = vpop.f32.mrb[0].mxu0
      %2133 = vmatprep.mubr.f32.mxu0 0.0
      %2134 = vmatmul.mubr.f32.gmra.mrb[0].mxu0 %v1951
      %v2135 = vpop.f32.mrb[0].mxu0
      %v2136 = vadd.f32 0.0, %v2135
      %v2137 = vpop.f32.mrb[0].mxu0
      %2138 = vmatprep.mubr.f32.mxu0 0.0
      %2139 = vmatmul.mubr.f32.gmra.mrb[0].mxu0 %v1953
      %v2140 = vpop.f32.mrb[0].mxu0
      %v2141 = vadd.f32 0.0, %v2140
      %v2142 = vpop.f32.mrb[0].mxu0
      %2143 = vmatprep.mubr.f32.mxu0 0.0
      %2144 = vmatmul.mubr.f32.gmra.mrb[0].mxu0 %v1955
      %v2145 = vpop.f32.mrb[0].mxu0
      %v2146 = vadd.f32 0.0, %v2145
      %v2147 = vpop.f32.mrb[0].mxu0
      %2148 = vmatprep.mubr.f32.mxu0 0.0
      %2149 = vmatmul.mubr.f32.gmra.mrb[0].mxu0 %v1957
      %v2150 = vpop.f32.mrb[0].mxu0
      %v2151 = vadd.f32 0.0, %v2150
      %v2152 = vpop.f32.mrb[0].mxu0
      %2153 = vmatprep.mubr.f32.mxu0 0.0
      %2154 = vmatmul.mubr.f32.gmra.mrb[0].mxu0 %v1959
      %v2155 = vpop.f32.mrb[0].mxu0
      %v2156 = vadd.f32 0.0, %v2155
      %v2157 = vpop.f32.mrb[0].mxu0
      %2158 = vmatprep.mubr.f32.mxu0 0.0
      %2159 = vmatmul.mubr.f32.gmra.mrb[0].mxu0 %v1961
      %v2160 = vpop.f32.mrb[0].mxu0
      %v2161 = vadd.f32 0.0, %v2160
      %v2162 = vpop.f32.mrb[0].mxu0
      %2163 = vmatprep.mubr.f32.mxu0 0.0
      %2164 = vmatmul.mubr.f32.gmra.mrb[0].mxu0 %v1963
      %v2165 = vpop.f32.mrb[0].mxu0
      %v2166 = vadd.f32 0.0, %v2165
      %v2167 = vpop.f32.mrb[0].mxu0
      %2168 = vmatprep.mubr.f32.mxu0 0.0
      %2169 = vmatmul.mubr.f32.gmra.mrb[0].mxu0 %v1965
      %v2170 = vpop.f32.mrb[0].mxu0
      %v2171 = vadd.f32 0.0, %v2170
      %v2172 = vpop.f32.mrb[0].mxu0
      %2173 = vmatprep.mubr.f32.mxu0 0.0
      %2174 = vmatmul.mubr.f32.gmra.mrb[0].mxu0 %v1967
      %v2175 = vpop.f32.mrb[0].mxu0
      %v2176 = vadd.f32 0.0, %v2175
      %v2177 = vpop.f32.mrb[0].mxu0
      %2178 = vmatprep.mubr.f32.mxu0 0.0
      %2179 = vmatmul.mubr.f32.gmra.mrb[0].mxu0 %v1969
      %v2180 = vpop.f32.mrb[0].mxu0
      %v2181 = vadd.f32 0.0, %v2180
      %v2182 = vpop.f32.mrb[0].mxu0
      %2183 = vmatprep.mubr.f32.mxu0 0.0
      %2184 = vmatmul.mubr.f32.gmra.mrb[0].mxu0 %v1971
      %v2185 = vpop.f32.mrb[0].mxu0
      %v2186 = vadd.f32 0.0, %v2185
      %v2187 = vpop.f32.mrb[0].mxu0
      %2188 = vmatprep.mubr.f32.mxu0 0.0
      %2189 = vmatmul.mubr.f32.gmra.mrb[0].mxu0 %v1973
      %v2190 = vpop.f32.mrb[0].mxu0
      %v2191 = vadd.f32 0.0, %v2190
      %v2192 = vpop.f32.mrb[0].mxu0
      %2193 = vmatprep.mubr.f32.mxu0 0.0
      %2194 = vmatmul.mubr.f32.gmra.mrb[0].mxu0 %v1975
      %v2195 = vpop.f32.mrb[0].mxu0
      %v2196 = vadd.f32 0.0, %v2195
      %v2197 = vpop.f32.mrb[0].mxu0
      %2198 = vmatprep.mubr.f32.mxu0 0.0
      %2199 = vmatmul.mubr.f32.gmra.mrb[0].mxu0 %v1977
      %v2200 = vpop.f32.mrb[0].mxu0
      %v2201 = vadd.f32 0.0, %v2200
      %v2202 = vpop.f32.mrb[0].mxu0
      %2203 = vdwg.mxu0
      %v2204 = vadd.f32 %v1785, %v2046
      %v2205 = vadd.f32 %v1786, %v2051
      %v2206 = vadd.f32 %v1787, %v2056
      %v2207 = vadd.f32 %v1788, %v2061
      %v2208 = vadd.f32 %v1789, %v2066
      %v2209 = vadd.f32 %v1790, %v2071
      %v2210 = vadd.f32 %v1791, %v2076
      %v2211 = vadd.f32 %v1792, %v2081
      %v2212 = vadd.f32 %v1793, %v2086
      %v2213 = vadd.f32 %v1794, %v2091
      %v2214 = vadd.f32 %v1795, %v2096
      %v2215 = vadd.f32 %v1796, %v2101
      %v2216 = vadd.f32 %v1797, %v2106
      %v2217 = vadd.f32 %v1798, %v2111
      %v2218 = vadd.f32 %v1799, %v2116
      %v2219 = vadd.f32 %v1800, %v2121
      %v2220 = vadd.f32 %v1801, %v2126
      %v2221 = vadd.f32 %v1802, %v2131
      %v2222 = vadd.f32 %v1803, %v2136
      %v2223 = vadd.f32 %v1804, %v2141
      %v2224 = vadd.f32 %v1805, %v2146
      %v2225 = vadd.f32 %v1806, %v2151
      %v2226 = vadd.f32 %v1807, %v2156
      %v2227 = vadd.f32 %v1808, %v2161
      %v2228 = vadd.f32 %v1809, %v2166
      %v2229 = vadd.f32 %v1810, %v2171
      %v2230 = vadd.f32 %v1811, %v2176
      %v2231 = vadd.f32 %v1812, %v2181
      %v2232 = vadd.f32 %v1813, %v2186
      %v2233 = vadd.f32 %v1814, %v2191
      %v2234 = vadd.f32 %v1815, %v2196
      %v2235 = vadd.f32 %v1816, %v2201
      %v2236 = vrot.slane %v1414, 2
      %v2237 = vrot.slane %v1415, 2
      %v2238 = vsel %vm1007, %v2236, %v2237
      %v2239 = vrot.slane %v1416, 2
      %v2240 = vsel %vm1007, %v2237, %v2239
      %v2241 = vrot.slane %v1417, 2
      %v2242 = vrot.slane %v1418, 2
      %v2243 = vsel %vm1007, %v2241, %v2242
      %v2244 = vrot.slane %v1419, 2
      %v2245 = vsel %vm1007, %v2242, %v2244
      %v2246 = vrot.slane %v1420, 2
      %v2247 = vrot.slane %v1421, 2
      %v2248 = vsel %vm1007, %v2246, %v2247
      %v2249 = vrot.slane %v1422, 2
      %v2250 = vsel %vm1007, %v2247, %v2249
      %v2251 = vrot.slane %v1423, 2
      %v2252 = vrot.slane %v1424, 2
      %v2253 = vsel %vm1007, %v2251, %v2252
      %v2254 = vrot.slane %v1425, 2
      %v2255 = vsel %vm1007, %v2252, %v2254
      %v2256 = vrot.slane %v1426, 2
      %v2257 = vrot.slane %v1427, 2
      %v2258 = vsel %vm1007, %v2256, %v2257
      %v2259 = vrot.slane %v1428, 2
      %v2260 = vsel %vm1007, %v2257, %v2259
      %v2261 = vrot.slane %v1429, 2
      %v2262 = vrot.slane %v1430, 2
      %v2263 = vsel %vm1007, %v2261, %v2262
      %v2264 = vrot.slane %v1431, 2
      %v2265 = vsel %vm1007, %v2262, %v2264
      %v2266 = vrot.slane %v1432, 2
      %v2267 = vrot.slane %v1433, 2
      %v2268 = vsel %vm1007, %v2266, %v2267
      %v2269 = vrot.slane %v1434, 2
      %v2270 = vsel %vm1007, %v2267, %v2269
      %v2271 = vrot.slane %v1435, 2
      %v2272 = vrot.slane %v1436, 2
      %v2273 = vsel %vm1007, %v2271, %v2272
      %v2274 = vrot.slane %v1437, 2
      %v2275 = vsel %vm1007, %v2272, %v2274
      %v2276 = vrot.slane %v1438, 2
      %v2277 = vrot.slane %v1439, 2
      %v2278 = vsel %vm1007, %v2276, %v2277
      %v2279 = vrot.slane %v1440, 2
      %v2280 = vsel %vm1007, %v2277, %v2279
      %v2281 = vrot.slane %v1441, 2
      %v2282 = vrot.slane %v1442, 2
      %v2283 = vsel %vm1007, %v2281, %v2282
      %v2284 = vrot.slane %v1443, 2
      %v2285 = vsel %vm1007, %v2282, %v2284
      %v2286 = vrot.slane %v1444, 2
      %v2287 = vrot.slane %v1445, 2
      %v2288 = vsel %vm1007, %v2286, %v2287
      %v2289 = vrot.slane %v1446, 2
      %v2290 = vsel %vm1007, %v2287, %v2289
      %v2291 = vrot.slane %v1447, 2
      %v2292 = vrot.slane %v1448, 2
      %v2293 = vsel %vm1007, %v2291, %v2292
      %v2294 = vrot.slane %v1449, 2
      %v2295 = vsel %vm1007, %v2292, %v2294
      %v2296 = vrot.slane %v1450, 2
      %v2297 = vrot.slane %v1451, 2
      %v2298 = vsel %vm1007, %v2296, %v2297
      %v2299 = vrot.slane %v1452, 2
      %v2300 = vsel %vm1007, %v2297, %v2299
      %v2301 = vrot.slane %v1453, 2
      %v2302 = vrot.slane %v1454, 2
      %v2303 = vsel %vm1007, %v2301, %v2302
      %v2304 = vrot.slane %v1455, 2
      %v2305 = vsel %vm1007, %v2302, %v2304
      %v2306 = vrot.slane %v1456, 2
      %v2307 = vrot.slane %v1457, 2
      %v2308 = vsel %vm1007, %v2306, %v2307
      %v2309 = vrot.slane %v1458, 2
      %v2310 = vsel %vm1007, %v2307, %v2309
      %v2311 = vrot.slane %v1459, 2
      %v2312 = vrot.slane %v1460, 2
      %v2313 = vsel %vm1007, %v2311, %v2312
      %v2314 = vrot.slane %v1461, 2
      %v2315 = vsel %vm1007, %v2312, %v2314
      %s2316 = scalar_lea.vmem %s225, 40
      %v2317 = vld [vmem:[%s2316] sm:$0xff]
      %v2318 = vsel %vm428, %v2238, 0
      %v2320 = vsel %vm428, %v2240, 0
      %v2322 = vsel %vm428, %v2243, 0
      %v2324 = vsel %vm428, %v2245, 0
      %v2326 = vsel %vm428, %v2248, 0
      %v2328 = vsel %vm428, %v2250, 0
      %v2330 = vsel %vm428, %v2253, 0
      %v2332 = vsel %vm428, %v2255, 0
      %v2334 = vsel %vm428, %v2258, 0
      %v2336 = vsel %vm428, %v2260, 0
      %v2338 = vsel %vm428, %v2263, 0
      %v2340 = vsel %vm428, %v2265, 0
      %v2342 = vsel %vm428, %v2268, 0
      %v2344 = vsel %vm428, %v2270, 0
      %v2346 = vsel %vm428, %v2273, 0
      %v2348 = vsel %vm428, %v2275, 0
      %v2350 = vsel %vm428, %v2278, 0
      %v2352 = vsel %vm428, %v2280, 0
      %v2354 = vsel %vm428, %v2283, 0
      %v2356 = vsel %vm428, %v2285, 0
      %v2358 = vsel %vm428, %v2288, 0
      %v2360 = vsel %vm428, %v2290, 0
      %v2362 = vsel %vm428, %v2293, 0
      %v2364 = vsel %vm428, %v2295, 0
      %v2366 = vsel %vm428, %v2298, 0
      %v2368 = vsel %vm428, %v2300, 0
      %v2370 = vsel %vm428, %v2303, 0
      %v2372 = vsel %vm428, %v2305, 0
      %v2374 = vsel %vm428, %v2308, 0
      %v2376 = vsel %vm428, %v2310, 0
      %v2378 = vsel %vm428, %v2313, 0
      %v2380 = vsel %vm428, %v2315, 0
      %2382 = vmatprep.subr.mxu0 0.0
      %2383 = vmatpush1.msra.mxu0 %v2317
      %2384 = vmatprep.subr.mxu0 0.0
      %2385 = vmatpush1.msra.mxu0 0.0
      %2386 = vmatprep.subr.mxu0 0.0
      %2387 = vmatpush1.msra.mxu0 0.0
      %2388 = vmatprep.subr.mxu0 0.0
      %2389 = vmatpush1.msra.mxu0 0.0
      %2390 = vmatprep.subr.mxu0 0.0
      %2391 = vmatpush1.msra.mxu0 0.0
      %2392 = vmatprep.subr.mxu0 0.0
      %2393 = vmatpush1.msra.mxu0 0.0
      %2394 = vmatprep.subr.mxu0 0.0
      %2395 = vmatpush1.msra.mxu0 0.0
      %2396 = vmatprep.subr.mxu0 0.0
      %2397 = vmatpush1.msra.mxu0 0.0
      %2398 = vmatprep.subr.mxu0 0.0
      %2399 = vmatpush1.msra.mxu0 0.0
      %2400 = vmatprep.subr.mxu0 0.0
      %2401 = vmatpush1.msra.mxu0 0.0
      %2402 = vmatprep.subr.mxu0 0.0
      %2403 = vmatpush1.msra.mxu0 0.0
      %2404 = vmatprep.subr.mxu0 0.0
      %2405 = vmatpush1.msra.mxu0 0.0
      %2406 = vmatprep.subr.mxu0 0.0
      %2407 = vmatpush1.msra.mxu0 0.0
      %2408 = vmatprep.subr.mxu0 0.0
      %2409 = vmatpush1.msra.mxu0 0.0
      %2410 = vmatprep.subr.mxu0 0.0
      %2411 = vmatpush1.msra.mxu0 0.0
      %2412 = vmatprep.subr.mxu0 0.0
      %2413 = vmatpush1.msra.mxu0 0.0
      %2414 = vmatprep.subr.mxu0 0.0
      %2415 = vmatpush1.msra.mxu0 0.0
      %2416 = vmatprep.subr.mxu0 0.0
      %2417 = vmatpush1.msra.mxu0 0.0
      %2418 = vmatprep.subr.mxu0 0.0
      %2419 = vmatpush1.msra.mxu0 0.0
      %2420 = vmatprep.subr.mxu0 0.0
      %2421 = vmatpush1.msra.mxu0 0.0
      %2422 = vmatprep.subr.mxu0 0.0
      %2423 = vmatpush1.msra.mxu0 0.0
      %2424 = vmatprep.subr.mxu0 0.0
      %2425 = vmatpush1.msra.mxu0 0.0
      %2426 = vmatprep.subr.mxu0 0.0
      %2427 = vmatpush1.msra.mxu0 0.0
      %2428 = vmatprep.subr.mxu0 0.0
      %2429 = vmatpush1.msra.mxu0 0.0
      %2430 = vmatprep.subr.mxu0 0.0
      %2431 = vmatpush1.msra.mxu0 0.0
      %2432 = vmatprep.subr.mxu0 0.0
      %2433 = vmatpush1.msra.mxu0 0.0
      %2434 = vmatprep.subr.mxu0 0.0
      %2435 = vmatpush1.msra.mxu0 0.0
      %2436 = vmatprep.subr.mxu0 0.0
      %2437 = vmatpush1.msra.mxu0 0.0
      %2438 = vmatprep.subr.mxu0 0.0
      %2439 = vmatpush1.msra.mxu0 0.0
      %2440 = vmatprep.subr.mxu0 0.0
      %2441 = vmatpush1.msra.mxu0 0.0
      %2442 = vmatprep.subr.mxu0 0.0
      %2443 = vmatpush1.msra.mxu0 0.0
      %2444 = vmatprep.subr.mxu0 0.0
      %2445 = vmatpush1.msra.mxu0 0.0
      %2446 = vmatprep.mubr.f32.mxu0 0.0
      %2447 = vmatmul.mubr.f32.gmra.mrb[0].mxu0 %v2318
      %v2448 = vpop.f32.mrb[0].mxu0
      %v2449 = vadd.f32 0.0, %v2448
      %v2450 = vpop.f32.mrb[0].mxu0
      %2451 = vmatprep.mubr.f32.mxu0 0.0
      %2452 = vmatmul.mubr.f32.gmra.mrb[0].mxu0 %v2320
      %v2453 = vpop.f32.mrb[0].mxu0
      %v2454 = vadd.f32 0.0, %v2453
      %v2455 = vpop.f32.mrb[0].mxu0
      %2456 = vmatprep.mubr.f32.mxu0 0.0
      %2457 = vmatmul.mubr.f32.gmra.mrb[0].mxu0 %v2322
      %v2458 = vpop.f32.mrb[0].mxu0
      %v2459 = vadd.f32 0.0, %v2458
      %v2460 = vpop.f32.mrb[0].mxu0
      %2461 = vmatprep.mubr.f32.mxu0 0.0
      %2462 = vmatmul.mubr.f32.gmra.mrb[0].mxu0 %v2324
      %v2463 = vpop.f32.mrb[0].mxu0
      %v2464 = vadd.f32 0.0, %v2463
      %v2465 = vpop.f32.mrb[0].mxu0
      %2466 = vmatprep.mubr.f32.mxu0 0.0
      %2467 = vmatmul.mubr.f32.gmra.mrb[0].mxu0 %v2326
      %v2468 = vpop.f32.mrb[0].mxu0
      %v2469 = vadd.f32 0.0, %v2468
      %v2470 = vpop.f32.mrb[0].mxu0
      %2471 = vmatprep.mubr.f32.mxu0 0.0
      %2472 = vmatmul.mubr.f32.gmra.mrb[0].mxu0 %v2328
      %v2473 = vpop.f32.mrb[0].mxu0
      %v2474 = vadd.f32 0.0, %v2473
      %v2475 = vpop.f32.mrb[0].mxu0
      %2476 = vmatprep.mubr.f32.mxu0 0.0
      %2477 = vmatmul.mubr.f32.gmra.mrb[0].mxu0 %v2330
      %v2478 = vpop.f32.mrb[0].mxu0
      %v2479 = vadd.f32 0.0, %v2478
      %v2480 = vpop.f32.mrb[0].mxu0
      %2481 = vmatprep.mubr.f32.mxu0 0.0
      %2482 = vmatmul.mubr.f32.gmra.mrb[0].mxu0 %v2332
      %v2483 = vpop.f32.mrb[0].mxu0
      %v2484 = vadd.f32 0.0, %v2483
      %v2485 = vpop.f32.mrb[0].mxu0
      %2486 = vmatprep.mubr.f32.mxu0 0.0
      %2487 = vmatmul.mubr.f32.gmra.mrb[0].mxu0 %v2334
      %v2488 = vpop.f32.mrb[0].mxu0
      %v2489 = vadd.f32 0.0, %v2488
      %v2490 = vpop.f32.mrb[0].mxu0
      %2491 = vmatprep.mubr.f32.mxu0 0.0
      %2492 = vmatmul.mubr.f32.gmra.mrb[0].mxu0 %v2336
      %v2493 = vpop.f32.mrb[0].mxu0
      %v2494 = vadd.f32 0.0, %v2493
      %v2495 = vpop.f32.mrb[0].mxu0
      %2496 = vmatprep.mubr.f32.mxu0 0.0
      %2497 = vmatmul.mubr.f32.gmra.mrb[0].mxu0 %v2338
      %v2498 = vpop.f32.mrb[0].mxu0
      %v2499 = vadd.f32 0.0, %v2498
      %v2500 = vpop.f32.mrb[0].mxu0
      %2501 = vmatprep.mubr.f32.mxu0 0.0
      %2502 = vmatmul.mubr.f32.gmra.mrb[0].mxu0 %v2340
      %v2503 = vpop.f32.mrb[0].mxu0
      %v2504 = vadd.f32 0.0, %v2503
      %v2505 = vpop.f32.mrb[0].mxu0
      %2506 = vmatprep.mubr.f32.mxu0 0.0
      %2507 = vmatmul.mubr.f32.gmra.mrb[0].mxu0 %v2342
      %v2508 = vpop.f32.mrb[0].mxu0
      %v2509 = vadd.f32 0.0, %v2508
      %v2510 = vpop.f32.mrb[0].mxu0
      %2511 = vmatprep.mubr.f32.mxu0 0.0
      %2512 = vmatmul.mubr.f32.gmra.mrb[0].mxu0 %v2344
      %v2513 = vpop.f32.mrb[0].mxu0
      %v2514 = vadd.f32 0.0, %v2513
      %v2515 = vpop.f32.mrb[0].mxu0
      %2516 = vmatprep.mubr.f32.mxu0 0.0
      %2517 = vmatmul.mubr.f32.gmra.mrb[0].mxu0 %v2346
      %v2518 = vpop.f32.mrb[0].mxu0
      %v2519 = vadd.f32 0.0, %v2518
      %v2520 = vpop.f32.mrb[0].mxu0
      %2521 = vmatprep.mubr.f32.mxu0 0.0
      %2522 = vmatmul.mubr.f32.gmra.mrb[0].mxu0 %v2348
      %v2523 = vpop.f32.mrb[0].mxu0
      %v2524 = vadd.f32 0.0, %v2523
      %v2525 = vpop.f32.mrb[0].mxu0
      %2526 = vmatprep.mubr.f32.mxu0 0.0
      %2527 = vmatmul.mubr.f32.gmra.mrb[0].mxu0 %v2350
      %v2528 = vpop.f32.mrb[0].mxu0
      %v2529 = vadd.f32 0.0, %v2528
      %v2530 = vpop.f32.mrb[0].mxu0
      %2531 = vmatprep.mubr.f32.mxu0 0.0
      %2532 = vmatmul.mubr.f32.gmra.mrb[0].mxu0 %v2352
      %v2533 = vpop.f32.mrb[0].mxu0
      %v2534 = vadd.f32 0.0, %v2533
      %v2535 = vpop.f32.mrb[0].mxu0
      %2536 = vmatprep.mubr.f32.mxu0 0.0
      %2537 = vmatmul.mubr.f32.gmra.mrb[0].mxu0 %v2354
      %v2538 = vpop.f32.mrb[0].mxu0
      %v2539 = vadd.f32 0.0, %v2538
      %v2540 = vpop.f32.mrb[0].mxu0
      %2541 = vmatprep.mubr.f32.mxu0 0.0
      %2542 = vmatmul.mubr.f32.gmra.mrb[0].mxu0 %v2356
      %v2543 = vpop.f32.mrb[0].mxu0
      %v2544 = vadd.f32 0.0, %v2543
      %v2545 = vpop.f32.mrb[0].mxu0
      %2546 = vmatprep.mubr.f32.mxu0 0.0
      %2547 = vmatmul.mubr.f32.gmra.mrb[0].mxu0 %v2358
      %v2548 = vpop.f32.mrb[0].mxu0
      %v2549 = vadd.f32 0.0, %v2548
      %v2550 = vpop.f32.mrb[0].mxu0
      %2551 = vmatprep.mubr.f32.mxu0 0.0
      %2552 = vmatmul.mubr.f32.gmra.mrb[0].mxu0 %v2360
      %v2553 = vpop.f32.mrb[0].mxu0
      %v2554 = vadd.f32 0.0, %v2553
      %v2555 = vpop.f32.mrb[0].mxu0
      %2556 = vmatprep.mubr.f32.mxu0 0.0
      %2557 = vmatmul.mubr.f32.gmra.mrb[0].mxu0 %v2362
      %v2558 = vpop.f32.mrb[0].mxu0
      %v2559 = vadd.f32 0.0, %v2558
      %v2560 = vpop.f32.mrb[0].mxu0
      %2561 = vmatprep.mubr.f32.mxu0 0.0
      %2562 = vmatmul.mubr.f32.gmra.mrb[0].mxu0 %v2364
      %v2563 = vpop.f32.mrb[0].mxu0
      %v2564 = vadd.f32 0.0, %v2563
      %v2565 = vpop.f32.mrb[0].mxu0
      %2566 = vmatprep.mubr.f32.mxu0 0.0
      %2567 = vmatmul.mubr.f32.gmra.mrb[0].mxu0 %v2366
      %v2568 = vpop.f32.mrb[0].mxu0
      %v2569 = vadd.f32 0.0, %v2568
      %v2570 = vpop.f32.mrb[0].mxu0
      %2571 = vmatprep.mubr.f32.mxu0 0.0
      %2572 = vmatmul.mubr.f32.gmra.mrb[0].mxu0 %v2368
      %v2573 = vpop.f32.mrb[0].mxu0
      %v2574 = vadd.f32 0.0, %v2573
      %v2575 = vpop.f32.mrb[0].mxu0
      %2576 = vmatprep.mubr.f32.mxu0 0.0
      %2577 = vmatmul.mubr.f32.gmra.mrb[0].mxu0 %v2370
      %v2578 = vpop.f32.mrb[0].mxu0
      %v2579 = vadd.f32 0.0, %v2578
      %v2580 = vpop.f32.mrb[0].mxu0
      %2581 = vmatprep.mubr.f32.mxu0 0.0
      %2582 = vmatmul.mubr.f32.gmra.mrb[0].mxu0 %v2372
      %v2583 = vpop.f32.mrb[0].mxu0
      %v2584 = vadd.f32 0.0, %v2583
      %v2585 = vpop.f32.mrb[0].mxu0
      %2586 = vmatprep.mubr.f32.mxu0 0.0
      %2587 = vmatmul.mubr.f32.gmra.mrb[0].mxu0 %v2374
      %v2588 = vpop.f32.mrb[0].mxu0
      %v2589 = vadd.f32 0.0, %v2588
      %v2590 = vpop.f32.mrb[0].mxu0
      %2591 = vmatprep.mubr.f32.mxu0 0.0
      %2592 = vmatmul.mubr.f32.gmra.mrb[0].mxu0 %v2376
      %v2593 = vpop.f32.mrb[0].mxu0
      %v2594 = vadd.f32 0.0, %v2593
      %v2595 = vpop.f32.mrb[0].mxu0
      %2596 = vmatprep.mubr.f32.mxu0 0.0
      %2597 = vmatmul.mubr.f32.gmra.mrb[0].mxu0 %v2378
      %v2598 = vpop.f32.mrb[0].mxu0
      %v2599 = vadd.f32 0.0, %v2598
      %v2600 = vpop.f32.mrb[0].mxu0
      %2601 = vmatprep.mubr.f32.mxu0 0.0
      %2602 = vmatmul.mubr.f32.gmra.mrb[0].mxu0 %v2380
      %v2603 = vpop.f32.mrb[0].mxu0
      %v2604 = vadd.f32 0.0, %v2603
      %v2605 = vpop.f32.mrb[0].mxu0
      %2606 = vdwg.mxu0
      %v2607 = vadd.f32 %v2204, %v2449
      %v2608 = vadd.f32 %v2205, %v2454
      %v2609 = vadd.f32 %v2206, %v2459
      %v2610 = vadd.f32 %v2207, %v2464
      %v2611 = vadd.f32 %v2208, %v2469
      %v2612 = vadd.f32 %v2209, %v2474
      %v2613 = vadd.f32 %v2210, %v2479
      %v2614 = vadd.f32 %v2211, %v2484
      %v2615 = vadd.f32 %v2212, %v2489
      %v2616 = vadd.f32 %v2213, %v2494
      %v2617 = vadd.f32 %v2214, %v2499
      %v2618 = vadd.f32 %v2215, %v2504
      %v2619 = vadd.f32 %v2216, %v2509
      %v2620 = vadd.f32 %v2217, %v2514
      %v2621 = vadd.f32 %v2218, %v2519
      %v2622 = vadd.f32 %v2219, %v2524
      %v2623 = vadd.f32 %v2220, %v2529
      %v2624 = vadd.f32 %v2221, %v2534
      %v2625 = vadd.f32 %v2222, %v2539
      %v2626 = vadd.f32 %v2223, %v2544
      %v2627 = vadd.f32 %v2224, %v2549
      %v2628 = vadd.f32 %v2225, %v2554
      %v2629 = vadd.f32 %v2226, %v2559
      %v2630 = vadd.f32 %v2227, %v2564
      %v2631 = vadd.f32 %v2228, %v2569
      %v2632 = vadd.f32 %v2229, %v2574
      %v2633 = vadd.f32 %v2230, %v2579
      %v2634 = vadd.f32 %v2231, %v2584
      %v2635 = vadd.f32 %v2232, %v2589
      %v2636 = vadd.f32 %v2233, %v2594
      %v2637 = vadd.f32 %v2234, %v2599
      %v2638 = vadd.f32 %v2235, %v2604
      %s2639 = sadd.s32 %s245, 2
      %s2640 = smul.u32 %s2639, 24
      %s2641 = scalar_lea.vmem %s221, %s2640
      %v2642 = vld [vmem:[%s2641] sm:$0xff]
      %v2643 = vld [vmem:[%s2641 + $0x8] sm:$0xff]
      %v2644 = vld [vmem:[%s2641 + $0x10] sm:$0x3]
      %v2645 = vld [vmem:[%s2641 + $0x18] sm:$0xff]
      %v2646 = vld [vmem:[%s2641 + $0x20] sm:$0xff]
      %v2647 = vld [vmem:[%s2641 + $0x28] sm:$0x3]
      %v2648 = vld [vmem:[%s2641 + $0x30] sm:$0xff]
      %v2649 = vld [vmem:[%s2641 + $0x38] sm:$0xff]
      %v2650 = vld [vmem:[%s2641 + $0x40] sm:$0x3]
      %v2651 = vld [vmem:[%s2641 + $0x48] sm:$0xff]
      %v2652 = vld [vmem:[%s2641 + $0x50] sm:$0xff]
      %v2653 = vld [vmem:[%s2641 + $0x58] sm:$0x3]
      %v2654 = vld [vmem:[%s2641 + $0x60] sm:$0xff]
      %v2655 = vld [vmem:[%s2641 + $0x68] sm:$0xff]
      %v2656 = vld [vmem:[%s2641 + $0x70] sm:$0x3]
      %v2657 = vld [vmem:[%s2641 + $0x78] sm:$0xff]
      %v2658 = vld [vmem:[%s2641 + $0x80] sm:$0xff]
      %v2659 = vld [vmem:[%s2641 + $0x88] sm:$0x3]
      %v2660 = vld [vmem:[%s2641 + $0x90] sm:$0xff]
      %v2661 = vld [vmem:[%s2641 + $0x98] sm:$0xff]
      %v2662 = vld [vmem:[%s2641 + $0xa0] sm:$0x3]
      %v2663 = vld [vmem:[%s2641 + $0xa8] sm:$0xff]
      %v2664 = vld [vmem:[%s2641 + $0xb0] sm:$0xff]
      %v2665 = vld [vmem:[%s2641 + $0xb8] sm:$0x3]
      %v2666 = vld [vmem:[%s2641 + $0xc0] sm:$0xff]
      %v2667 = vld [vmem:[%s2641 + $0xc8] sm:$0xff]
      %v2668 = vld [vmem:[%s2641 + $0xd0] sm:$0x3]
      %v2669 = vld [vmem:[%s2641 + $0xd8] sm:$0xff]
      %v2670 = vld [vmem:[%s2641 + $0xe0] sm:$0xff]
      %v2671 = vld [vmem:[%s2641 + $0xe8] sm:$0x3]
      %v2672 = vld [vmem:[%s2641 + $0xf0] sm:$0xff]
      %v2673 = vld [vmem:[%s2641 + $0xf8] sm:$0xff]
      %v2674 = vld [vmem:[%s2641 + $0x100] sm:$0x3]
      %v2675 = vld [vmem:[%s2641 + $0x108] sm:$0xff]
      %v2676 = vld [vmem:[%s2641 + $0x110] sm:$0xff]
      %v2677 = vld [vmem:[%s2641 + $0x118] sm:$0x3]
      %v2678 = vld [vmem:[%s2641 + $0x120] sm:$0xff]
      %v2679 = vld [vmem:[%s2641 + $0x128] sm:$0xff]
      %v2680 = vld [vmem:[%s2641 + $0x130] sm:$0x3]
      %v2681 = vld [vmem:[%s2641 + $0x138] sm:$0xff]
      %v2682 = vld [vmem:[%s2641 + $0x140] sm:$0xff]
      %v2683 = vld [vmem:[%s2641 + $0x148] sm:$0x3]
      %v2684 = vld [vmem:[%s2641 + $0x150] sm:$0xff]
      %v2685 = vld [vmem:[%s2641 + $0x158] sm:$0xff]
      %v2686 = vld [vmem:[%s2641 + $0x160] sm:$0x3]
      %v2687 = vld [vmem:[%s2641 + $0x168] sm:$0xff]
      %v2688 = vld [vmem:[%s2641 + $0x170] sm:$0xff]
      %v2689 = vld [vmem:[%s2641 + $0x178] sm:$0x3]
      %s2690 = scalar_lea.vmem %s225, 48
      %v2691 = vld [vmem:[%s2690] sm:$0xff]
      %v2693 = vsel %vm428, %v2642, 0
      %v2696 = vsel %vm428, %v2643, 0
      %v2699 = vsel %vm428, %v2645, 0
      %v2702 = vsel %vm428, %v2646, 0
      %v2705 = vsel %vm428, %v2648, 0
      %v2708 = vsel %vm428, %v2649, 0
      %v2711 = vsel %vm428, %v2651, 0
      %v2714 = vsel %vm428, %v2652, 0
      %v2717 = vsel %vm428, %v2654, 0
      %v2720 = vsel %vm428, %v2655, 0
      %v2723 = vsel %vm428, %v2657, 0
      %v2726 = vsel %vm428, %v2658, 0
      %v2729 = vsel %vm428, %v2660, 0
      %v2732 = vsel %vm428, %v2661, 0
      %v2735 = vsel %vm428, %v2663, 0
      %v2738 = vsel %vm428, %v2664, 0
      %v2741 = vsel %vm428, %v2666, 0
      %v2744 = vsel %vm428, %v2667, 0
      %v2747 = vsel %vm428, %v2669, 0
      %v2750 = vsel %vm428, %v2670, 0
      %v2753 = vsel %vm428, %v2672, 0
      %v2756 = vsel %vm428, %v2673, 0
      %v2759 = vsel %vm428, %v2675, 0
      %v2762 = vsel %vm428, %v2676, 0
      %v2765 = vsel %vm428, %v2678, 0
      %v2768 = vsel %vm428, %v2679, 0
      %v2771 = vsel %vm428, %v2681, 0
      %v2774 = vsel %vm428, %v2682, 0
      %v2777 = vsel %vm428, %v2684, 0
      %v2780 = vsel %vm428, %v2685, 0
      %v2783 = vsel %vm428, %v2687, 0
      %v2786 = vsel %vm428, %v2688, 0
      %2788 = vmatprep.subr.mxu0 0.0
      %2789 = vmatpush1.msra.mxu0 %v2691
      %2790 = vmatprep.subr.mxu0 0.0
      %2791 = vmatpush1.msra.mxu0 0.0
      %2792 = vmatprep.subr.mxu0 0.0
      %2793 = vmatpush1.msra.mxu0 0.0
      %2794 = vmatprep.subr.mxu0 0.0
      %2795 = vmatpush1.msra.mxu0 0.0
      %2796 = vmatprep.subr.mxu0 0.0
      %2797 = vmatpush1.msra.mxu0 0.0
      %2798 = vmatprep.subr.mxu0 0.0
      %2799 = vmatpush1.msra.mxu0 0.0
      %2800 = vmatprep.subr.mxu0 0.0
      %2801 = vmatpush1.msra.mxu0 0.0
      %2802 = vmatprep.subr.mxu0 0.0
      %2803 = vmatpush1.msra.mxu0 0.0
      %2804 = vmatprep.subr.mxu0 0.0
      %2805 = vmatpush1.msra.mxu0 0.0
      %2806 = vmatprep.subr.mxu0 0.0
      %2807 = vmatpush1.msra.mxu0 0.0
      %2808 = vmatprep.subr.mxu0 0.0
      %2809 = vmatpush1.msra.mxu0 0.0
      %2810 = vmatprep.subr.mxu0 0.0
      %2811 = vmatpush1.msra.mxu0 0.0
      %2812 = vmatprep.subr.mxu0 0.0
      %2813 = vmatpush1.msra.mxu0 0.0
      %2814 = vmatprep.subr.mxu0 0.0
      %2815 = vmatpush1.msra.mxu0 0.0
      %2816 = vmatprep.subr.mxu0 0.0
      %2817 = vmatpush1.msra.mxu0 0.0
      %2818 = vmatprep.subr.mxu0 0.0
      %2819 = vmatpush1.msra.mxu0 0.0
      %2820 = vmatprep.subr.mxu0 0.0
      %2821 = vmatpush1.msra.mxu0 0.0
      %2822 = vmatprep.subr.mxu0 0.0
      %2823 = vmatpush1.msra.mxu0 0.0
      %2824 = vmatprep.subr.mxu0 0.0
      %2825 = vmatpush1.msra.mxu0 0.0
      %2826 = vmatprep.subr.mxu0 0.0
      %2827 = vmatpush1.msra.mxu0 0.0
      %2828 = vmatprep.subr.mxu0 0.0
      %2829 = vmatpush1.msra.mxu0 0.0
      %2830 = vmatprep.subr.mxu0 0.0
      %2831 = vmatpush1.msra.mxu0 0.0
      %2832 = vmatprep.subr.mxu0 0.0
      %2833 = vmatpush1.msra.mxu0 0.0
      %2834 = vmatprep.subr.mxu0 0.0
      %2835 = vmatpush1.msra.mxu0 0.0
      %2836 = vmatprep.subr.mxu0 0.0
      %2837 = vmatpush1.msra.mxu0 0.0
      %2838 = vmatprep.subr.mxu0 0.0
      %2839 = vmatpush1.msra.mxu0 0.0
      %2840 = vmatprep.subr.mxu0 0.0
      %2841 = vmatpush1.msra.mxu0 0.0
      %2842 = vmatprep.subr.mxu0 0.0
      %2843 = vmatpush1.msra.mxu0 0.0
      %2844 = vmatprep.subr.mxu0 0.0
      %2845 = vmatpush1.msra.mxu0 0.0
      %2846 = vmatprep.subr.mxu0 0.0
      %2847 = vmatpush1.msra.mxu0 0.0
      %2848 = vmatprep.subr.mxu0 0.0
      %2849 = vmatpush1.msra.mxu0 0.0
      %2850 = vmatprep.subr.mxu0 0.0
      %2851 = vmatpush1.msra.mxu0 0.0
      %2852 = vmatprep.mubr.f32.mxu0 0.0
      %2853 = vmatmul.mubr.f32.gmra.mrb[0].mxu0 %v2693
      %v2854 = vpop.f32.mrb[0].mxu0
      %v2855 = vadd.f32 0.0, %v2854
      %v2856 = vpop.f32.mrb[0].mxu0
      %2857 = vmatprep.mubr.f32.mxu0 0.0
      %2858 = vmatmul.mubr.f32.gmra.mrb[0].mxu0 %v2696
      %v2859 = vpop.f32.mrb[0].mxu0
      %v2860 = vadd.f32 0.0, %v2859
      %v2861 = vpop.f32.mrb[0].mxu0
      %2862 = vmatprep.mubr.f32.mxu0 0.0
      %2863 = vmatmul.mubr.f32.gmra.mrb[0].mxu0 %v2699
      %v2864 = vpop.f32.mrb[0].mxu0
      %v2865 = vadd.f32 0.0, %v2864
      %v2866 = vpop.f32.mrb[0].mxu0
      %2867 = vmatprep.mubr.f32.mxu0 0.0
      %2868 = vmatmul.mubr.f32.gmra.mrb[0].mxu0 %v2702
      %v2869 = vpop.f32.mrb[0].mxu0
      %v2870 = vadd.f32 0.0, %v2869
      %v2871 = vpop.f32.mrb[0].mxu0
      %2872 = vmatprep.mubr.f32.mxu0 0.0
      %2873 = vmatmul.mubr.f32.gmra.mrb[0].mxu0 %v2705
      %v2874 = vpop.f32.mrb[0].mxu0
      %v2875 = vadd.f32 0.0, %v2874
      %v2876 = vpop.f32.mrb[0].mxu0
      %2877 = vmatprep.mubr.f32.mxu0 0.0
      %2878 = vmatmul.mubr.f32.gmra.mrb[0].mxu0 %v2708
      %v2879 = vpop.f32.mrb[0].mxu0
      %v2880 = vadd.f32 0.0, %v2879
      %v2881 = vpop.f32.mrb[0].mxu0
      %2882 = vmatprep.mubr.f32.mxu0 0.0
      %2883 = vmatmul.mubr.f32.gmra.mrb[0].mxu0 %v2711
      %v2884 = vpop.f32.mrb[0].mxu0
      %v2885 = vadd.f32 0.0, %v2884
      %v2886 = vpop.f32.mrb[0].mxu0
      %2887 = vmatprep.mubr.f32.mxu0 0.0
      %2888 = vmatmul.mubr.f32.gmra.mrb[0].mxu0 %v2714
      %v2889 = vpop.f32.mrb[0].mxu0
      %v2890 = vadd.f32 0.0, %v2889
      %v2891 = vpop.f32.mrb[0].mxu0
      %2892 = vmatprep.mubr.f32.mxu0 0.0
      %2893 = vmatmul.mubr.f32.gmra.mrb[0].mxu0 %v2717
      %v2894 = vpop.f32.mrb[0].mxu0
      %v2895 = vadd.f32 0.0, %v2894
      %v2896 = vpop.f32.mrb[0].mxu0
      %2897 = vmatprep.mubr.f32.mxu0 0.0
      %2898 = vmatmul.mubr.f32.gmra.mrb[0].mxu0 %v2720
      %v2899 = vpop.f32.mrb[0].mxu0
      %v2900 = vadd.f32 0.0, %v2899
      %v2901 = vpop.f32.mrb[0].mxu0
      %2902 = vmatprep.mubr.f32.mxu0 0.0
      %2903 = vmatmul.mubr.f32.gmra.mrb[0].mxu0 %v2723
      %v2904 = vpop.f32.mrb[0].mxu0
      %v2905 = vadd.f32 0.0, %v2904
      %v2906 = vpop.f32.mrb[0].mxu0
      %2907 = vmatprep.mubr.f32.mxu0 0.0
      %2908 = vmatmul.mubr.f32.gmra.mrb[0].mxu0 %v2726
      %v2909 = vpop.f32.mrb[0].mxu0
      %v2910 = vadd.f32 0.0, %v2909
      %v2911 = vpop.f32.mrb[0].mxu0
      %2912 = vmatprep.mubr.f32.mxu0 0.0
      %2913 = vmatmul.mubr.f32.gmra.mrb[0].mxu0 %v2729
      %v2914 = vpop.f32.mrb[0].mxu0
      %v2915 = vadd.f32 0.0, %v2914
      %v2916 = vpop.f32.mrb[0].mxu0
      %2917 = vmatprep.mubr.f32.mxu0 0.0
      %2918 = vmatmul.mubr.f32.gmra.mrb[0].mxu0 %v2732
      %v2919 = vpop.f32.mrb[0].mxu0
      %v2920 = vadd.f32 0.0, %v2919
      %v2921 = vpop.f32.mrb[0].mxu0
      %2922 = vmatprep.mubr.f32.mxu0 0.0
      %2923 = vmatmul.mubr.f32.gmra.mrb[0].mxu0 %v2735
      %v2924 = vpop.f32.mrb[0].mxu0
      %v2925 = vadd.f32 0.0, %v2924
      %v2926 = vpop.f32.mrb[0].mxu0
      %2927 = vmatprep.mubr.f32.mxu0 0.0
      %2928 = vmatmul.mubr.f32.gmra.mrb[0].mxu0 %v2738
      %v2929 = vpop.f32.mrb[0].mxu0
      %v2930 = vadd.f32 0.0, %v2929
      %v2931 = vpop.f32.mrb[0].mxu0
      %2932 = vmatprep.mubr.f32.mxu0 0.0
      %2933 = vmatmul.mubr.f32.gmra.mrb[0].mxu0 %v2741
      %v2934 = vpop.f32.mrb[0].mxu0
      %v2935 = vadd.f32 0.0, %v2934
      %v2936 = vpop.f32.mrb[0].mxu0
      %2937 = vmatprep.mubr.f32.mxu0 0.0
      %2938 = vmatmul.mubr.f32.gmra.mrb[0].mxu0 %v2744
      %v2939 = vpop.f32.mrb[0].mxu0
      %v2940 = vadd.f32 0.0, %v2939
      %v2941 = vpop.f32.mrb[0].mxu0
      %2942 = vmatprep.mubr.f32.mxu0 0.0
      %2943 = vmatmul.mubr.f32.gmra.mrb[0].mxu0 %v2747
      %v2944 = vpop.f32.mrb[0].mxu0
      %v2945 = vadd.f32 0.0, %v2944
      %v2946 = vpop.f32.mrb[0].mxu0
      %2947 = vmatprep.mubr.f32.mxu0 0.0
      %2948 = vmatmul.mubr.f32.gmra.mrb[0].mxu0 %v2750
      %v2949 = vpop.f32.mrb[0].mxu0
      %v2950 = vadd.f32 0.0, %v2949
      %v2951 = vpop.f32.mrb[0].mxu0
      %2952 = vmatprep.mubr.f32.mxu0 0.0
      %2953 = vmatmul.mubr.f32.gmra.mrb[0].mxu0 %v2753
      %v2954 = vpop.f32.mrb[0].mxu0
      %v2955 = vadd.f32 0.0, %v2954
      %v2956 = vpop.f32.mrb[0].mxu0
      %2957 = vmatprep.mubr.f32.mxu0 0.0
      %2958 = vmatmul.mubr.f32.gmra.mrb[0].mxu0 %v2756
      %v2959 = vpop.f32.mrb[0].mxu0
      %v2960 = vadd.f32 0.0, %v2959
      %v2961 = vpop.f32.mrb[0].mxu0
      %2962 = vmatprep.mubr.f32.mxu0 0.0
      %2963 = vmatmul.mubr.f32.gmra.mrb[0].mxu0 %v2759
      %v2964 = vpop.f32.mrb[0].mxu0
      %v2965 = vadd.f32 0.0, %v2964
      %v2966 = vpop.f32.mrb[0].mxu0
      %2967 = vmatprep.mubr.f32.mxu0 0.0
      %2968 = vmatmul.mubr.f32.gmra.mrb[0].mxu0 %v2762
      %v2969 = vpop.f32.mrb[0].mxu0
      %v2970 = vadd.f32 0.0, %v2969
      %v2971 = vpop.f32.mrb[0].mxu0
      %2972 = vmatprep.mubr.f32.mxu0 0.0
      %2973 = vmatmul.mubr.f32.gmra.mrb[0].mxu0 %v2765
      %v2974 = vpop.f32.mrb[0].mxu0
      %v2975 = vadd.f32 0.0, %v2974
      %v2976 = vpop.f32.mrb[0].mxu0
      %2977 = vmatprep.mubr.f32.mxu0 0.0
      %2978 = vmatmul.mubr.f32.gmra.mrb[0].mxu0 %v2768
      %v2979 = vpop.f32.mrb[0].mxu0
      %v2980 = vadd.f32 0.0, %v2979
      %v2981 = vpop.f32.mrb[0].mxu0
      %2982 = vmatprep.mubr.f32.mxu0 0.0
      %2983 = vmatmul.mubr.f32.gmra.mrb[0].mxu0 %v2771
      %v2984 = vpop.f32.mrb[0].mxu0
      %v2985 = vadd.f32 0.0, %v2984
      %v2986 = vpop.f32.mrb[0].mxu0
      %2987 = vmatprep.mubr.f32.mxu0 0.0
      %2988 = vmatmul.mubr.f32.gmra.mrb[0].mxu0 %v2774
      %v2989 = vpop.f32.mrb[0].mxu0
      %v2990 = vadd.f32 0.0, %v2989
      %v2991 = vpop.f32.mrb[0].mxu0
      %2992 = vmatprep.mubr.f32.mxu0 0.0
      %2993 = vmatmul.mubr.f32.gmra.mrb[0].mxu0 %v2777
      %v2994 = vpop.f32.mrb[0].mxu0
      %v2995 = vadd.f32 0.0, %v2994
      %v2996 = vpop.f32.mrb[0].mxu0
      %2997 = vmatprep.mubr.f32.mxu0 0.0
      %2998 = vmatmul.mubr.f32.gmra.mrb[0].mxu0 %v2780
      %v2999 = vpop.f32.mrb[0].mxu0
      %v3000 = vadd.f32 0.0, %v2999
      %v3001 = vpop.f32.mrb[0].mxu0
      %3002 = vmatprep.mubr.f32.mxu0 0.0
      %3003 = vmatmul.mubr.f32.gmra.mrb[0].mxu0 %v2783
      %v3004 = vpop.f32.mrb[0].mxu0
      %v3005 = vadd.f32 0.0, %v3004
      %v3006 = vpop.f32.mrb[0].mxu0
      %3007 = vmatprep.mubr.f32.mxu0 0.0
      %3008 = vmatmul.mubr.f32.gmra.mrb[0].mxu0 %v2786
      %v3009 = vpop.f32.mrb[0].mxu0
      %v3010 = vadd.f32 0.0, %v3009
      %v3011 = vpop.f32.mrb[0].mxu0
      %3012 = vdwg.mxu0
      %v3013 = vadd.f32 %v2607, %v2855
      %v3014 = vadd.f32 %v2608, %v2860
      %v3015 = vadd.f32 %v2609, %v2865
      %v3016 = vadd.f32 %v2610, %v2870
      %v3017 = vadd.f32 %v2611, %v2875
      %v3018 = vadd.f32 %v2612, %v2880
      %v3019 = vadd.f32 %v2613, %v2885
      %v3020 = vadd.f32 %v2614, %v2890
      %v3021 = vadd.f32 %v2615, %v2895
      %v3022 = vadd.f32 %v2616, %v2900
      %v3023 = vadd.f32 %v2617, %v2905
      %v3024 = vadd.f32 %v2618, %v2910
      %v3025 = vadd.f32 %v2619, %v2915
      %v3026 = vadd.f32 %v2620, %v2920
      %v3027 = vadd.f32 %v2621, %v2925
      %v3028 = vadd.f32 %v2622, %v2930
      %v3029 = vadd.f32 %v2623, %v2935
      %v3030 = vadd.f32 %v2624, %v2940
      %v3031 = vadd.f32 %v2625, %v2945
      %v3032 = vadd.f32 %v2626, %v2950
      %v3033 = vadd.f32 %v2627, %v2955
      %v3034 = vadd.f32 %v2628, %v2960
      %v3035 = vadd.f32 %v2629, %v2965
      %v3036 = vadd.f32 %v2630, %v2970
      %v3037 = vadd.f32 %v2631, %v2975
      %v3038 = vadd.f32 %v2632, %v2980
      %v3039 = vadd.f32 %v2633, %v2985
      %v3040 = vadd.f32 %v2634, %v2990
      %v3041 = vadd.f32 %v2635, %v2995
      %v3042 = vadd.f32 %v2636, %v3000
      %v3043 = vadd.f32 %v2637, %v3005
      %v3044 = vadd.f32 %v2638, %v3010
      %v3061 = vrot.slane %v2642, 1
      %v3062 = vrot.slane %v2643, 1
      %v3063 = vsel %vm345, %v3061, %v3062
      %v3064 = vrot.slane %v2644, 1
      %v3065 = vsel %vm345, %v3062, %v3064
      %v3066 = vrot.slane %v2645, 1
      %v3067 = vrot.slane %v2646, 1
      %v3068 = vsel %vm345, %v3066, %v3067
      %v3069 = vrot.slane %v2647, 1
      %v3070 = vsel %vm345, %v3067, %v3069
      %v3071 = vrot.slane %v2648, 1
      %v3072 = vrot.slane %v2649, 1
      %v3073 = vsel %vm345, %v3071, %v3072
      %v3074 = vrot.slane %v2650, 1
      %v3075 = vsel %vm345, %v3072, %v3074
      %v3076 = vrot.slane %v2651, 1
      %v3077 = vrot.slane %v2652, 1
      %v3078 = vsel %vm345, %v3076, %v3077
      %v3079 = vrot.slane %v2653, 1
      %v3080 = vsel %vm345, %v3077, %v3079
      %v3081 = vrot.slane %v2654, 1
      %v3082 = vrot.slane %v2655, 1
      %v3083 = vsel %vm345, %v3081, %v3082
      %v3084 = vrot.slane %v2656, 1
      %v3085 = vsel %vm345, %v3082, %v3084
      %v3086 = vrot.slane %v2657, 1
      %v3087 = vrot.slane %v2658, 1
      %v3088 = vsel %vm345, %v3086, %v3087
      %v3089 = vrot.slane %v2659, 1
      %v3090 = vsel %vm345, %v3087, %v3089
      %v3091 = vrot.slane %v2660, 1
      %v3092 = vrot.slane %v2661, 1
      %v3093 = vsel %vm345, %v3091, %v3092
      %v3094 = vrot.slane %v2662, 1
      %v3095 = vsel %vm345, %v3092, %v3094
      %v3096 = vrot.slane %v2663, 1
      %v3097 = vrot.slane %v2664, 1
      %v3098 = vsel %vm345, %v3096, %v3097
      %v3099 = vrot.slane %v2665, 1
      %v3100 = vsel %vm345, %v3097, %v3099
      %v3101 = vrot.slane %v2666, 1
      %v3102 = vrot.slane %v2667, 1
      %v3103 = vsel %vm345, %v3101, %v3102
      %v3104 = vrot.slane %v2668, 1
      %v3105 = vsel %vm345, %v3102, %v3104
      %v3106 = vrot.slane %v2669, 1
      %v3107 = vrot.slane %v2670, 1
      %v3108 = vsel %vm345, %v3106, %v3107
      %v3109 = vrot.slane %v2671, 1
      %v3110 = vsel %vm345, %v3107, %v3109
      %v3111 = vrot.slane %v2672, 1
      %v3112 = vrot.slane %v2673, 1
      %v3113 = vsel %vm345, %v3111, %v3112
      %v3114 = vrot.slane %v2674, 1
      %v3115 = vsel %vm345, %v3112, %v3114
      %v3116 = vrot.slane %v2675, 1
      %v3117 = vrot.slane %v2676, 1
      %v3118 = vsel %vm345, %v3116, %v3117
      %v3119 = vrot.slane %v2677, 1
      %v3120 = vsel %vm345, %v3117, %v3119
      %v3121 = vrot.slane %v2678, 1
      %v3122 = vrot.slane %v2679, 1
      %v3123 = vsel %vm345, %v3121, %v3122
      %v3124 = vrot.slane %v2680, 1
      %v3125 = vsel %vm345, %v3122, %v3124
      %v3126 = vrot.slane %v2681, 1
      %v3127 = vrot.slane %v2682, 1
      %v3128 = vsel %vm345, %v3126, %v3127
      %v3129 = vrot.slane %v2683, 1
      %v3130 = vsel %vm345, %v3127, %v3129
      %v3131 = vrot.slane %v2684, 1
      %v3132 = vrot.slane %v2685, 1
      %v3133 = vsel %vm345, %v3131, %v3132
      %v3134 = vrot.slane %v2686, 1
      %v3135 = vsel %vm345, %v3132, %v3134
      %v3136 = vrot.slane %v2687, 1
      %v3137 = vrot.slane %v2688, 1
      %v3138 = vsel %vm345, %v3136, %v3137
      %v3139 = vrot.slane %v2689, 1
      %v3140 = vsel %vm345, %v3137, %v3139
      %s3141 = scalar_lea.vmem %s225, 56
      %v3142 = vld [vmem:[%s3141] sm:$0xff]
      %v3143 = vsel %vm428, %v3063, 0
      %v3145 = vsel %vm428, %v3065, 0
      %v3147 = vsel %vm428, %v3068, 0
      %v3149 = vsel %vm428, %v3070, 0
      %v3151 = vsel %vm428, %v3073, 0
      %v3153 = vsel %vm428, %v3075, 0
      %v3155 = vsel %vm428, %v3078, 0
      %v3157 = vsel %vm428, %v3080, 0
      %v3159 = vsel %vm428, %v3083, 0
      %v3161 = vsel %vm428, %v3085, 0
      %v3163 = vsel %vm428, %v3088, 0
      %v3165 = vsel %vm428, %v3090, 0
      %v3167 = vsel %vm428, %v3093, 0
      %v3169 = vsel %vm428, %v3095, 0
      %v3171 = vsel %vm428, %v3098, 0
      %v3173 = vsel %vm428, %v3100, 0
      %v3175 = vsel %vm428, %v3103, 0
      %v3177 = vsel %vm428, %v3105, 0
      %v3179 = vsel %vm428, %v3108, 0
      %v3181 = vsel %vm428, %v3110, 0
      %v3183 = vsel %vm428, %v3113, 0
      %v3185 = vsel %vm428, %v3115, 0
      %v3187 = vsel %vm428, %v3118, 0
      %v3189 = vsel %vm428, %v3120, 0
      %v3191 = vsel %vm428, %v3123, 0
      %v3193 = vsel %vm428, %v3125, 0
      %v3195 = vsel %vm428, %v3128, 0
      %v3197 = vsel %vm428, %v3130, 0
      %v3199 = vsel %vm428, %v3133, 0
      %v3201 = vsel %vm428, %v3135, 0
      %v3203 = vsel %vm428, %v3138, 0
      %v3205 = vsel %vm428, %v3140, 0
      %3207 = vmatprep.subr.mxu0 0.0
      %3208 = vmatpush1.msra.mxu0 %v3142
      %3209 = vmatprep.subr.mxu0 0.0
      %3210 = vmatpush1.msra.mxu0 0.0
      %3211 = vmatprep.subr.mxu0 0.0
      %3212 = vmatpush1.msra.mxu0 0.0
      %3213 = vmatprep.subr.mxu0 0.0
      %3214 = vmatpush1.msra.mxu0 0.0
      %3215 = vmatprep.subr.mxu0 0.0
      %3216 = vmatpush1.msra.mxu0 0.0
      %3217 = vmatprep.subr.mxu0 0.0
      %3218 = vmatpush1.msra.mxu0 0.0
      %3219 = vmatprep.subr.mxu0 0.0
      %3220 = vmatpush1.msra.mxu0 0.0
      %3221 = vmatprep.subr.mxu0 0.0
      %3222 = vmatpush1.msra.mxu0 0.0
      %3223 = vmatprep.subr.mxu0 0.0
      %3224 = vmatpush1.msra.mxu0 0.0
      %3225 = vmatprep.subr.mxu0 0.0
      %3226 = vmatpush1.msra.mxu0 0.0
      %3227 = vmatprep.subr.mxu0 0.0
      %3228 = vmatpush1.msra.mxu0 0.0
      %3229 = vmatprep.subr.mxu0 0.0
      %3230 = vmatpush1.msra.mxu0 0.0
      %3231 = vmatprep.subr.mxu0 0.0
      %3232 = vmatpush1.msra.mxu0 0.0
      %3233 = vmatprep.subr.mxu0 0.0
      %3234 = vmatpush1.msra.mxu0 0.0
      %3235 = vmatprep.subr.mxu0 0.0
      %3236 = vmatpush1.msra.mxu0 0.0
      %3237 = vmatprep.subr.mxu0 0.0
      %3238 = vmatpush1.msra.mxu0 0.0
      %3239 = vmatprep.subr.mxu0 0.0
      %3240 = vmatpush1.msra.mxu0 0.0
      %3241 = vmatprep.subr.mxu0 0.0
      %3242 = vmatpush1.msra.mxu0 0.0
      %3243 = vmatprep.subr.mxu0 0.0
      %3244 = vmatpush1.msra.mxu0 0.0
      %3245 = vmatprep.subr.mxu0 0.0
      %3246 = vmatpush1.msra.mxu0 0.0
      %3247 = vmatprep.subr.mxu0 0.0
      %3248 = vmatpush1.msra.mxu0 0.0
      %3249 = vmatprep.subr.mxu0 0.0
      %3250 = vmatpush1.msra.mxu0 0.0
      %3251 = vmatprep.subr.mxu0 0.0
      %3252 = vmatpush1.msra.mxu0 0.0
      %3253 = vmatprep.subr.mxu0 0.0
      %3254 = vmatpush1.msra.mxu0 0.0
      %3255 = vmatprep.subr.mxu0 0.0
      %3256 = vmatpush1.msra.mxu0 0.0
      %3257 = vmatprep.subr.mxu0 0.0
      %3258 = vmatpush1.msra.mxu0 0.0
      %3259 = vmatprep.subr.mxu0 0.0
      %3260 = vmatpush1.msra.mxu0 0.0
      %3261 = vmatprep.subr.mxu0 0.0
      %3262 = vmatpush1.msra.mxu0 0.0
      %3263 = vmatprep.subr.mxu0 0.0
      %3264 = vmatpush1.msra.mxu0 0.0
      %3265 = vmatprep.subr.mxu0 0.0
      %3266 = vmatpush1.msra.mxu0 0.0
      %3267 = vmatprep.subr.mxu0 0.0
      %3268 = vmatpush1.msra.mxu0 0.0
      %3269 = vmatprep.subr.mxu0 0.0
      %3270 = vmatpush1.msra.mxu0 0.0
      %3271 = vmatprep.mubr.f32.mxu0 0.0
      %3272 = vmatmul.mubr.f32.gmra.mrb[0].mxu0 %v3143
      %v3273 = vpop.f32.mrb[0].mxu0
      %v3274 = vadd.f32 0.0, %v3273
      %v3275 = vpop.f32.mrb[0].mxu0
      %3276 = vmatprep.mubr.f32.mxu0 0.0
      %3277 = vmatmul.mubr.f32.gmra.mrb[0].mxu0 %v3145
      %v3278 = vpop.f32.mrb[0].mxu0
      %v3279 = vadd.f32 0.0, %v3278
      %v3280 = vpop.f32.mrb[0].mxu0
      %3281 = vmatprep.mubr.f32.mxu0 0.0
      %3282 = vmatmul.mubr.f32.gmra.mrb[0].mxu0 %v3147
      %v3283 = vpop.f32.mrb[0].mxu0
      %v3284 = vadd.f32 0.0, %v3283
      %v3285 = vpop.f32.mrb[0].mxu0
      %3286 = vmatprep.mubr.f32.mxu0 0.0
      %3287 = vmatmul.mubr.f32.gmra.mrb[0].mxu0 %v3149
      %v3288 = vpop.f32.mrb[0].mxu0
      %v3289 = vadd.f32 0.0, %v3288
      %v3290 = vpop.f32.mrb[0].mxu0
      %3291 = vmatprep.mubr.f32.mxu0 0.0
      %3292 = vmatmul.mubr.f32.gmra.mrb[0].mxu0 %v3151
      %v3293 = vpop.f32.mrb[0].mxu0
      %v3294 = vadd.f32 0.0, %v3293
      %v3295 = vpop.f32.mrb[0].mxu0
      %3296 = vmatprep.mubr.f32.mxu0 0.0
      %3297 = vmatmul.mubr.f32.gmra.mrb[0].mxu0 %v3153
      %v3298 = vpop.f32.mrb[0].mxu0
      %v3299 = vadd.f32 0.0, %v3298
      %v3300 = vpop.f32.mrb[0].mxu0
      %3301 = vmatprep.mubr.f32.mxu0 0.0
      %3302 = vmatmul.mubr.f32.gmra.mrb[0].mxu0 %v3155
      %v3303 = vpop.f32.mrb[0].mxu0
      %v3304 = vadd.f32 0.0, %v3303
      %v3305 = vpop.f32.mrb[0].mxu0
      %3306 = vmatprep.mubr.f32.mxu0 0.0
      %3307 = vmatmul.mubr.f32.gmra.mrb[0].mxu0 %v3157
      %v3308 = vpop.f32.mrb[0].mxu0
      %v3309 = vadd.f32 0.0, %v3308
      %v3310 = vpop.f32.mrb[0].mxu0
      %3311 = vmatprep.mubr.f32.mxu0 0.0
      %3312 = vmatmul.mubr.f32.gmra.mrb[0].mxu0 %v3159
      %v3313 = vpop.f32.mrb[0].mxu0
      %v3314 = vadd.f32 0.0, %v3313
      %v3315 = vpop.f32.mrb[0].mxu0
      %3316 = vmatprep.mubr.f32.mxu0 0.0
      %3317 = vmatmul.mubr.f32.gmra.mrb[0].mxu0 %v3161
      %v3318 = vpop.f32.mrb[0].mxu0
      %v3319 = vadd.f32 0.0, %v3318
      %v3320 = vpop.f32.mrb[0].mxu0
      %3321 = vmatprep.mubr.f32.mxu0 0.0
      %3322 = vmatmul.mubr.f32.gmra.mrb[0].mxu0 %v3163
      %v3323 = vpop.f32.mrb[0].mxu0
      %v3324 = vadd.f32 0.0, %v3323
      %v3325 = vpop.f32.mrb[0].mxu0
      %3326 = vmatprep.mubr.f32.mxu0 0.0
      %3327 = vmatmul.mubr.f32.gmra.mrb[0].mxu0 %v3165
      %v3328 = vpop.f32.mrb[0].mxu0
      %v3329 = vadd.f32 0.0, %v3328
      %v3330 = vpop.f32.mrb[0].mxu0
      %3331 = vmatprep.mubr.f32.mxu0 0.0
      %3332 = vmatmul.mubr.f32.gmra.mrb[0].mxu0 %v3167
      %v3333 = vpop.f32.mrb[0].mxu0
      %v3334 = vadd.f32 0.0, %v3333
      %v3335 = vpop.f32.mrb[0].mxu0
      %3336 = vmatprep.mubr.f32.mxu0 0.0
      %3337 = vmatmul.mubr.f32.gmra.mrb[0].mxu0 %v3169
      %v3338 = vpop.f32.mrb[0].mxu0
      %v3339 = vadd.f32 0.0, %v3338
      %v3340 = vpop.f32.mrb[0].mxu0
      %3341 = vmatprep.mubr.f32.mxu0 0.0
      %3342 = vmatmul.mubr.f32.gmra.mrb[0].mxu0 %v3171
      %v3343 = vpop.f32.mrb[0].mxu0
      %v3344 = vadd.f32 0.0, %v3343
      %v3345 = vpop.f32.mrb[0].mxu0
      %3346 = vmatprep.mubr.f32.mxu0 0.0
      %3347 = vmatmul.mubr.f32.gmra.mrb[0].mxu0 %v3173
      %v3348 = vpop.f32.mrb[0].mxu0
      %v3349 = vadd.f32 0.0, %v3348
      %v3350 = vpop.f32.mrb[0].mxu0
      %3351 = vmatprep.mubr.f32.mxu0 0.0
      %3352 = vmatmul.mubr.f32.gmra.mrb[0].mxu0 %v3175
      %v3353 = vpop.f32.mrb[0].mxu0
      %v3354 = vadd.f32 0.0, %v3353
      %v3355 = vpop.f32.mrb[0].mxu0
      %3356 = vmatprep.mubr.f32.mxu0 0.0
      %3357 = vmatmul.mubr.f32.gmra.mrb[0].mxu0 %v3177
      %v3358 = vpop.f32.mrb[0].mxu0
      %v3359 = vadd.f32 0.0, %v3358
      %v3360 = vpop.f32.mrb[0].mxu0
      %3361 = vmatprep.mubr.f32.mxu0 0.0
      %3362 = vmatmul.mubr.f32.gmra.mrb[0].mxu0 %v3179
      %v3363 = vpop.f32.mrb[0].mxu0
      %v3364 = vadd.f32 0.0, %v3363
      %v3365 = vpop.f32.mrb[0].mxu0
      %3366 = vmatprep.mubr.f32.mxu0 0.0
      %3367 = vmatmul.mubr.f32.gmra.mrb[0].mxu0 %v3181
      %v3368 = vpop.f32.mrb[0].mxu0
      %v3369 = vadd.f32 0.0, %v3368
      %v3370 = vpop.f32.mrb[0].mxu0
      %3371 = vmatprep.mubr.f32.mxu0 0.0
      %3372 = vmatmul.mubr.f32.gmra.mrb[0].mxu0 %v3183
      %v3373 = vpop.f32.mrb[0].mxu0
      %v3374 = vadd.f32 0.0, %v3373
      %v3375 = vpop.f32.mrb[0].mxu0
      %3376 = vmatprep.mubr.f32.mxu0 0.0
      %3377 = vmatmul.mubr.f32.gmra.mrb[0].mxu0 %v3185
      %v3378 = vpop.f32.mrb[0].mxu0
      %v3379 = vadd.f32 0.0, %v3378
      %v3380 = vpop.f32.mrb[0].mxu0
      %3381 = vmatprep.mubr.f32.mxu0 0.0
      %3382 = vmatmul.mubr.f32.gmra.mrb[0].mxu0 %v3187
      %v3383 = vpop.f32.mrb[0].mxu0
      %v3384 = vadd.f32 0.0, %v3383
      %v3385 = vpop.f32.mrb[0].mxu0
      %3386 = vmatprep.mubr.f32.mxu0 0.0
      %3387 = vmatmul.mubr.f32.gmra.mrb[0].mxu0 %v3189
      %v3388 = vpop.f32.mrb[0].mxu0
      %v3389 = vadd.f32 0.0, %v3388
      %v3390 = vpop.f32.mrb[0].mxu0
      %3391 = vmatprep.mubr.f32.mxu0 0.0
      %3392 = vmatmul.mubr.f32.gmra.mrb[0].mxu0 %v3191
      %v3393 = vpop.f32.mrb[0].mxu0
      %v3394 = vadd.f32 0.0, %v3393
      %v3395 = vpop.f32.mrb[0].mxu0
      %3396 = vmatprep.mubr.f32.mxu0 0.0
      %3397 = vmatmul.mubr.f32.gmra.mrb[0].mxu0 %v3193
      %v3398 = vpop.f32.mrb[0].mxu0
      %v3399 = vadd.f32 0.0, %v3398
      %v3400 = vpop.f32.mrb[0].mxu0
      %3401 = vmatprep.mubr.f32.mxu0 0.0
      %3402 = vmatmul.mubr.f32.gmra.mrb[0].mxu0 %v3195
      %v3403 = vpop.f32.mrb[0].mxu0
      %v3404 = vadd.f32 0.0, %v3403
      %v3405 = vpop.f32.mrb[0].mxu0
      %3406 = vmatprep.mubr.f32.mxu0 0.0
      %3407 = vmatmul.mubr.f32.gmra.mrb[0].mxu0 %v3197
      %v3408 = vpop.f32.mrb[0].mxu0
      %v3409 = vadd.f32 0.0, %v3408
      %v3410 = vpop.f32.mrb[0].mxu0
      %3411 = vmatprep.mubr.f32.mxu0 0.0
      %3412 = vmatmul.mubr.f32.gmra.mrb[0].mxu0 %v3199
      %v3413 = vpop.f32.mrb[0].mxu0
      %v3414 = vadd.f32 0.0, %v3413
      %v3415 = vpop.f32.mrb[0].mxu0
      %3416 = vmatprep.mubr.f32.mxu0 0.0
      %3417 = vmatmul.mubr.f32.gmra.mrb[0].mxu0 %v3201
      %v3418 = vpop.f32.mrb[0].mxu0
      %v3419 = vadd.f32 0.0, %v3418
      %v3420 = vpop.f32.mrb[0].mxu0
      %3421 = vmatprep.mubr.f32.mxu0 0.0
      %3422 = vmatmul.mubr.f32.gmra.mrb[0].mxu0 %v3203
      %v3423 = vpop.f32.mrb[0].mxu0
      %v3424 = vadd.f32 0.0, %v3423
      %v3425 = vpop.f32.mrb[0].mxu0
      %3426 = vmatprep.mubr.f32.mxu0 0.0
      %3427 = vmatmul.mubr.f32.gmra.mrb[0].mxu0 %v3205
      %v3428 = vpop.f32.mrb[0].mxu0
      %v3429 = vadd.f32 0.0, %v3428
      %v3430 = vpop.f32.mrb[0].mxu0
      %3431 = vdwg.mxu0
      %v3432 = vadd.f32 %v3013, %v3274
      %v3433 = vadd.f32 %v3014, %v3279
      %v3434 = vadd.f32 %v3015, %v3284
      %v3435 = vadd.f32 %v3016, %v3289
      %v3436 = vadd.f32 %v3017, %v3294
      %v3437 = vadd.f32 %v3018, %v3299
      %v3438 = vadd.f32 %v3019, %v3304
      %v3439 = vadd.f32 %v3020, %v3309
      %v3440 = vadd.f32 %v3021, %v3314
      %v3441 = vadd.f32 %v3022, %v3319
      %v3442 = vadd.f32 %v3023, %v3324
      %v3443 = vadd.f32 %v3024, %v3329
      %v3444 = vadd.f32 %v3025, %v3334
      %v3445 = vadd.f32 %v3026, %v3339
      %v3446 = vadd.f32 %v3027, %v3344
      %v3447 = vadd.f32 %v3028, %v3349
      %v3448 = vadd.f32 %v3029, %v3354
      %v3449 = vadd.f32 %v3030, %v3359
      %v3450 = vadd.f32 %v3031, %v3364
      %v3451 = vadd.f32 %v3032, %v3369
      %v3452 = vadd.f32 %v3033, %v3374
      %v3453 = vadd.f32 %v3034, %v3379
      %v3454 = vadd.f32 %v3035, %v3384
      %v3455 = vadd.f32 %v3036, %v3389
      %v3456 = vadd.f32 %v3037, %v3394
      %v3457 = vadd.f32 %v3038, %v3399
      %v3458 = vadd.f32 %v3039, %v3404
      %v3459 = vadd.f32 %v3040, %v3409
      %v3460 = vadd.f32 %v3041, %v3414
      %v3461 = vadd.f32 %v3042, %v3419
      %v3462 = vadd.f32 %v3043, %v3424
      %v3463 = vadd.f32 %v3044, %v3429
      %v3464 = vrot.slane %v2642, 2
      %v3465 = vrot.slane %v2643, 2
      %v3466 = vsel %vm1007, %v3464, %v3465
      %v3467 = vrot.slane %v2644, 2
      %v3468 = vsel %vm1007, %v3465, %v3467
      %v3469 = vrot.slane %v2645, 2
      %v3470 = vrot.slane %v2646, 2
      %v3471 = vsel %vm1007, %v3469, %v3470
      %v3472 = vrot.slane %v2647, 2
      %v3473 = vsel %vm1007, %v3470, %v3472
      %v3474 = vrot.slane %v2648, 2
      %v3475 = vrot.slane %v2649, 2
      %v3476 = vsel %vm1007, %v3474, %v3475
      %v3477 = vrot.slane %v2650, 2
      %v3478 = vsel %vm1007, %v3475, %v3477
      %v3479 = vrot.slane %v2651, 2
      %v3480 = vrot.slane %v2652, 2
      %v3481 = vsel %vm1007, %v3479, %v3480
      %v3482 = vrot.slane %v2653, 2
      %v3483 = vsel %vm1007, %v3480, %v3482
      %v3484 = vrot.slane %v2654, 2
      %v3485 = vrot.slane %v2655, 2
      %v3486 = vsel %vm1007, %v3484, %v3485
      %v3487 = vrot.slane %v2656, 2
      %v3488 = vsel %vm1007, %v3485, %v3487
      %v3489 = vrot.slane %v2657, 2
      %v3490 = vrot.slane %v2658, 2
      %v3491 = vsel %vm1007, %v3489, %v3490
      %v3492 = vrot.slane %v2659, 2
      %v3493 = vsel %vm1007, %v3490, %v3492
      %v3494 = vrot.slane %v2660, 2
      %v3495 = vrot.slane %v2661, 2
      %v3496 = vsel %vm1007, %v3494, %v3495
      %v3497 = vrot.slane %v2662, 2
      %v3498 = vsel %vm1007, %v3495, %v3497
      %v3499 = vrot.slane %v2663, 2
      %v3500 = vrot.slane %v2664, 2
      %v3501 = vsel %vm1007, %v3499, %v3500
      %v3502 = vrot.slane %v2665, 2
      %v3503 = vsel %vm1007, %v3500, %v3502
      %v3504 = vrot.slane %v2666, 2
      %v3505 = vrot.slane %v2667, 2
      %v3506 = vsel %vm1007, %v3504, %v3505
      %v3507 = vrot.slane %v2668, 2
      %v3508 = vsel %vm1007, %v3505, %v3507
      %v3509 = vrot.slane %v2669, 2
      %v3510 = vrot.slane %v2670, 2
      %v3511 = vsel %vm1007, %v3509, %v3510
      %v3512 = vrot.slane %v2671, 2
      %v3513 = vsel %vm1007, %v3510, %v3512
      %v3514 = vrot.slane %v2672, 2
      %v3515 = vrot.slane %v2673, 2
      %v3516 = vsel %vm1007, %v3514, %v3515
      %v3517 = vrot.slane %v2674, 2
      %v3518 = vsel %vm1007, %v3515, %v3517
      %v3519 = vrot.slane %v2675, 2
      %v3520 = vrot.slane %v2676, 2
      %v3521 = vsel %vm1007, %v3519, %v3520
      %v3522 = vrot.slane %v2677, 2
      %v3523 = vsel %vm1007, %v3520, %v3522
      %v3524 = vrot.slane %v2678, 2
      %v3525 = vrot.slane %v2679, 2
      %v3526 = vsel %vm1007, %v3524, %v3525
      %v3527 = vrot.slane %v2680, 2
      %v3528 = vsel %vm1007, %v3525, %v3527
      %v3529 = vrot.slane %v2681, 2
      %v3530 = vrot.slane %v2682, 2
      %v3531 = vsel %vm1007, %v3529, %v3530
      %v3532 = vrot.slane %v2683, 2
      %v3533 = vsel %vm1007, %v3530, %v3532
      %v3534 = vrot.slane %v2684, 2
      %v3535 = vrot.slane %v2685, 2
      %v3536 = vsel %vm1007, %v3534, %v3535
      %v3537 = vrot.slane %v2686, 2
      %v3538 = vsel %vm1007, %v3535, %v3537
      %v3539 = vrot.slane %v2687, 2
      %v3540 = vrot.slane %v2688, 2
      %v3541 = vsel %vm1007, %v3539, %v3540
      %v3542 = vrot.slane %v2689, 2
      %v3543 = vsel %vm1007, %v3540, %v3542
      %s3544 = scalar_lea.vmem %s225, 64
      %v3545 = vld [vmem:[%s3544] sm:$0xff]
      %v3546 = vsel %vm428, %v3466, 0
      %v3548 = vsel %vm428, %v3468, 0
      %v3550 = vsel %vm428, %v3471, 0
      %v3552 = vsel %vm428, %v3473, 0
      %v3554 = vsel %vm428, %v3476, 0
      %v3556 = vsel %vm428, %v3478, 0
      %v3558 = vsel %vm428, %v3481, 0
      %v3560 = vsel %vm428, %v3483, 0
      %v3562 = vsel %vm428, %v3486, 0
      %v3564 = vsel %vm428, %v3488, 0
      %v3566 = vsel %vm428, %v3491, 0
      %v3568 = vsel %vm428, %v3493, 0
      %v3570 = vsel %vm428, %v3496, 0
      %v3572 = vsel %vm428, %v3498, 0
      %v3574 = vsel %vm428, %v3501, 0
      %v3576 = vsel %vm428, %v3503, 0
      %v3578 = vsel %vm428, %v3506, 0
      %v3580 = vsel %vm428, %v3508, 0
      %v3582 = vsel %vm428, %v3511, 0
      %v3584 = vsel %vm428, %v3513, 0
      %v3586 = vsel %vm428, %v3516, 0
      %v3588 = vsel %vm428, %v3518, 0
      %v3590 = vsel %vm428, %v3521, 0
      %v3592 = vsel %vm428, %v3523, 0
      %v3594 = vsel %vm428, %v3526, 0
      %v3596 = vsel %vm428, %v3528, 0
      %v3598 = vsel %vm428, %v3531, 0
      %v3600 = vsel %vm428, %v3533, 0
      %v3602 = vsel %vm428, %v3536, 0
      %v3604 = vsel %vm428, %v3538, 0
      %v3606 = vsel %vm428, %v3541, 0
      %v3608 = vsel %vm428, %v3543, 0
      %3610 = vmatprep.subr.mxu0 0.0
      %3611 = vmatpush1.msra.mxu0 %v3545
      %3612 = vmatprep.subr.mxu0 0.0
      %3613 = vmatpush1.msra.mxu0 0.0
      %3614 = vmatprep.subr.mxu0 0.0
      %3615 = vmatpush1.msra.mxu0 0.0
      %3616 = vmatprep.subr.mxu0 0.0
      %3617 = vmatpush1.msra.mxu0 0.0
      %3618 = vmatprep.subr.mxu0 0.0
      %3619 = vmatpush1.msra.mxu0 0.0
      %3620 = vmatprep.subr.mxu0 0.0
      %3621 = vmatpush1.msra.mxu0 0.0
      %3622 = vmatprep.subr.mxu0 0.0
      %3623 = vmatpush1.msra.mxu0 0.0
      %3624 = vmatprep.subr.mxu0 0.0
      %3625 = vmatpush1.msra.mxu0 0.0
      %3626 = vmatprep.subr.mxu0 0.0
      %3627 = vmatpush1.msra.mxu0 0.0
      %3628 = vmatprep.subr.mxu0 0.0
      %3629 = vmatpush1.msra.mxu0 0.0
      %3630 = vmatprep.subr.mxu0 0.0
      %3631 = vmatpush1.msra.mxu0 0.0
      %3632 = vmatprep.subr.mxu0 0.0
      %3633 = vmatpush1.msra.mxu0 0.0
      %3634 = vmatprep.subr.mxu0 0.0
      %3635 = vmatpush1.msra.mxu0 0.0
      %3636 = vmatprep.subr.mxu0 0.0
      %3637 = vmatpush1.msra.mxu0 0.0
      %3638 = vmatprep.subr.mxu0 0.0
      %3639 = vmatpush1.msra.mxu0 0.0
      %3640 = vmatprep.subr.mxu0 0.0
      %3641 = vmatpush1.msra.mxu0 0.0
      %3642 = vmatprep.subr.mxu0 0.0
      %3643 = vmatpush1.msra.mxu0 0.0
      %3644 = vmatprep.subr.mxu0 0.0
      %3645 = vmatpush1.msra.mxu0 0.0
      %3646 = vmatprep.subr.mxu0 0.0
      %3647 = vmatpush1.msra.mxu0 0.0
      %3648 = vmatprep.subr.mxu0 0.0
      %3649 = vmatpush1.msra.mxu0 0.0
      %3650 = vmatprep.subr.mxu0 0.0
      %3651 = vmatpush1.msra.mxu0 0.0
      %3652 = vmatprep.subr.mxu0 0.0
      %3653 = vmatpush1.msra.mxu0 0.0
      %3654 = vmatprep.subr.mxu0 0.0
      %3655 = vmatpush1.msra.mxu0 0.0
      %3656 = vmatprep.subr.mxu0 0.0
      %3657 = vmatpush1.msra.mxu0 0.0
      %3658 = vmatprep.subr.mxu0 0.0
      %3659 = vmatpush1.msra.mxu0 0.0
      %3660 = vmatprep.subr.mxu0 0.0
      %3661 = vmatpush1.msra.mxu0 0.0
      %3662 = vmatprep.subr.mxu0 0.0
      %3663 = vmatpush1.msra.mxu0 0.0
      %3664 = vmatprep.subr.mxu0 0.0
      %3665 = vmatpush1.msra.mxu0 0.0
      %3666 = vmatprep.subr.mxu0 0.0
      %3667 = vmatpush1.msra.mxu0 0.0
      %3668 = vmatprep.subr.mxu0 0.0
      %3669 = vmatpush1.msra.mxu0 0.0
      %3670 = vmatprep.subr.mxu0 0.0
      %3671 = vmatpush1.msra.mxu0 0.0
      %3672 = vmatprep.subr.mxu0 0.0
      %3673 = vmatpush1.msra.mxu0 0.0
      %3674 = vmatprep.mubr.f32.mxu0 0.0
      %3675 = vmatmul.mubr.f32.gmra.mrb[0].mxu0 %v3546
      %v3676 = vpop.f32.mrb[0].mxu0
      %v3677 = vadd.f32 0.0, %v3676
      %v3678 = vpop.f32.mrb[0].mxu0
      %3679 = vmatprep.mubr.f32.mxu0 0.0
      %3680 = vmatmul.mubr.f32.gmra.mrb[0].mxu0 %v3548
      %v3681 = vpop.f32.mrb[0].mxu0
      %v3682 = vadd.f32 0.0, %v3681
      %v3683 = vpop.f32.mrb[0].mxu0
      %3684 = vmatprep.mubr.f32.mxu0 0.0
      %3685 = vmatmul.mubr.f32.gmra.mrb[0].mxu0 %v3550
      %v3686 = vpop.f32.mrb[0].mxu0
      %v3687 = vadd.f32 0.0, %v3686
      %v3688 = vpop.f32.mrb[0].mxu0
      %3689 = vmatprep.mubr.f32.mxu0 0.0
      %3690 = vmatmul.mubr.f32.gmra.mrb[0].mxu0 %v3552
      %v3691 = vpop.f32.mrb[0].mxu0
      %v3692 = vadd.f32 0.0, %v3691
      %v3693 = vpop.f32.mrb[0].mxu0
      %3694 = vmatprep.mubr.f32.mxu0 0.0
      %3695 = vmatmul.mubr.f32.gmra.mrb[0].mxu0 %v3554
      %v3696 = vpop.f32.mrb[0].mxu0
      %v3697 = vadd.f32 0.0, %v3696
      %v3698 = vpop.f32.mrb[0].mxu0
      %3699 = vmatprep.mubr.f32.mxu0 0.0
      %3700 = vmatmul.mubr.f32.gmra.mrb[0].mxu0 %v3556
      %v3701 = vpop.f32.mrb[0].mxu0
      %v3702 = vadd.f32 0.0, %v3701
      %v3703 = vpop.f32.mrb[0].mxu0
      %3704 = vmatprep.mubr.f32.mxu0 0.0
      %3705 = vmatmul.mubr.f32.gmra.mrb[0].mxu0 %v3558
      %v3706 = vpop.f32.mrb[0].mxu0
      %v3707 = vadd.f32 0.0, %v3706
      %v3708 = vpop.f32.mrb[0].mxu0
      %3709 = vmatprep.mubr.f32.mxu0 0.0
      %3710 = vmatmul.mubr.f32.gmra.mrb[0].mxu0 %v3560
      %v3711 = vpop.f32.mrb[0].mxu0
      %v3712 = vadd.f32 0.0, %v3711
      %v3713 = vpop.f32.mrb[0].mxu0
      %3714 = vmatprep.mubr.f32.mxu0 0.0
      %3715 = vmatmul.mubr.f32.gmra.mrb[0].mxu0 %v3562
      %v3716 = vpop.f32.mrb[0].mxu0
      %v3717 = vadd.f32 0.0, %v3716
      %v3718 = vpop.f32.mrb[0].mxu0
      %3719 = vmatprep.mubr.f32.mxu0 0.0
      %3720 = vmatmul.mubr.f32.gmra.mrb[0].mxu0 %v3564
      %v3721 = vpop.f32.mrb[0].mxu0
      %v3722 = vadd.f32 0.0, %v3721
      %v3723 = vpop.f32.mrb[0].mxu0
      %3724 = vmatprep.mubr.f32.mxu0 0.0
      %3725 = vmatmul.mubr.f32.gmra.mrb[0].mxu0 %v3566
      %v3726 = vpop.f32.mrb[0].mxu0
      %v3727 = vadd.f32 0.0, %v3726
      %v3728 = vpop.f32.mrb[0].mxu0
      %3729 = vmatprep.mubr.f32.mxu0 0.0
      %3730 = vmatmul.mubr.f32.gmra.mrb[0].mxu0 %v3568
      %v3731 = vpop.f32.mrb[0].mxu0
      %v3732 = vadd.f32 0.0, %v3731
      %v3733 = vpop.f32.mrb[0].mxu0
      %3734 = vmatprep.mubr.f32.mxu0 0.0
      %3735 = vmatmul.mubr.f32.gmra.mrb[0].mxu0 %v3570
      %v3736 = vpop.f32.mrb[0].mxu0
      %v3737 = vadd.f32 0.0, %v3736
      %v3738 = vpop.f32.mrb[0].mxu0
      %3739 = vmatprep.mubr.f32.mxu0 0.0
      %3740 = vmatmul.mubr.f32.gmra.mrb[0].mxu0 %v3572
      %v3741 = vpop.f32.mrb[0].mxu0
      %v3742 = vadd.f32 0.0, %v3741
      %v3743 = vpop.f32.mrb[0].mxu0
      %3744 = vmatprep.mubr.f32.mxu0 0.0
      %3745 = vmatmul.mubr.f32.gmra.mrb[0].mxu0 %v3574
      %v3746 = vpop.f32.mrb[0].mxu0
      %v3747 = vadd.f32 0.0, %v3746
      %v3748 = vpop.f32.mrb[0].mxu0
      %3749 = vmatprep.mubr.f32.mxu0 0.0
      %3750 = vmatmul.mubr.f32.gmra.mrb[0].mxu0 %v3576
      %v3751 = vpop.f32.mrb[0].mxu0
      %v3752 = vadd.f32 0.0, %v3751
      %v3753 = vpop.f32.mrb[0].mxu0
      %3754 = vmatprep.mubr.f32.mxu0 0.0
      %3755 = vmatmul.mubr.f32.gmra.mrb[0].mxu0 %v3578
      %v3756 = vpop.f32.mrb[0].mxu0
      %v3757 = vadd.f32 0.0, %v3756
      %v3758 = vpop.f32.mrb[0].mxu0
      %3759 = vmatprep.mubr.f32.mxu0 0.0
      %3760 = vmatmul.mubr.f32.gmra.mrb[0].mxu0 %v3580
      %v3761 = vpop.f32.mrb[0].mxu0
      %v3762 = vadd.f32 0.0, %v3761
      %v3763 = vpop.f32.mrb[0].mxu0
      %3764 = vmatprep.mubr.f32.mxu0 0.0
      %3765 = vmatmul.mubr.f32.gmra.mrb[0].mxu0 %v3582
      %v3766 = vpop.f32.mrb[0].mxu0
      %v3767 = vadd.f32 0.0, %v3766
      %v3768 = vpop.f32.mrb[0].mxu0
      %3769 = vmatprep.mubr.f32.mxu0 0.0
      %3770 = vmatmul.mubr.f32.gmra.mrb[0].mxu0 %v3584
      %v3771 = vpop.f32.mrb[0].mxu0
      %v3772 = vadd.f32 0.0, %v3771
      %v3773 = vpop.f32.mrb[0].mxu0
      %3774 = vmatprep.mubr.f32.mxu0 0.0
      %3775 = vmatmul.mubr.f32.gmra.mrb[0].mxu0 %v3586
      %v3776 = vpop.f32.mrb[0].mxu0
      %v3777 = vadd.f32 0.0, %v3776
      %v3778 = vpop.f32.mrb[0].mxu0
      %3779 = vmatprep.mubr.f32.mxu0 0.0
      %3780 = vmatmul.mubr.f32.gmra.mrb[0].mxu0 %v3588
      %v3781 = vpop.f32.mrb[0].mxu0
      %v3782 = vadd.f32 0.0, %v3781
      %v3783 = vpop.f32.mrb[0].mxu0
      %3784 = vmatprep.mubr.f32.mxu0 0.0
      %3785 = vmatmul.mubr.f32.gmra.mrb[0].mxu0 %v3590
      %v3786 = vpop.f32.mrb[0].mxu0
      %v3787 = vadd.f32 0.0, %v3786
      %v3788 = vpop.f32.mrb[0].mxu0
      %3789 = vmatprep.mubr.f32.mxu0 0.0
      %3790 = vmatmul.mubr.f32.gmra.mrb[0].mxu0 %v3592
      %v3791 = vpop.f32.mrb[0].mxu0
      %v3792 = vadd.f32 0.0, %v3791
      %v3793 = vpop.f32.mrb[0].mxu0
      %3794 = vmatprep.mubr.f32.mxu0 0.0
      %3795 = vmatmul.mubr.f32.gmra.mrb[0].mxu0 %v3594
      %v3796 = vpop.f32.mrb[0].mxu0
      %v3797 = vadd.f32 0.0, %v3796
      %v3798 = vpop.f32.mrb[0].mxu0
      %3799 = vmatprep.mubr.f32.mxu0 0.0
      %3800 = vmatmul.mubr.f32.gmra.mrb[0].mxu0 %v3596
      %v3801 = vpop.f32.mrb[0].mxu0
      %v3802 = vadd.f32 0.0, %v3801
      %v3803 = vpop.f32.mrb[0].mxu0
      %3804 = vmatprep.mubr.f32.mxu0 0.0
      %3805 = vmatmul.mubr.f32.gmra.mrb[0].mxu0 %v3598
      %v3806 = vpop.f32.mrb[0].mxu0
      %v3807 = vadd.f32 0.0, %v3806
      %v3808 = vpop.f32.mrb[0].mxu0
      %3809 = vmatprep.mubr.f32.mxu0 0.0
      %3810 = vmatmul.mubr.f32.gmra.mrb[0].mxu0 %v3600
      %v3811 = vpop.f32.mrb[0].mxu0
      %v3812 = vadd.f32 0.0, %v3811
      %v3813 = vpop.f32.mrb[0].mxu0
      %3814 = vmatprep.mubr.f32.mxu0 0.0
      %3815 = vmatmul.mubr.f32.gmra.mrb[0].mxu0 %v3602
      %v3816 = vpop.f32.mrb[0].mxu0
      %v3817 = vadd.f32 0.0, %v3816
      %v3818 = vpop.f32.mrb[0].mxu0
      %3819 = vmatprep.mubr.f32.mxu0 0.0
      %3820 = vmatmul.mubr.f32.gmra.mrb[0].mxu0 %v3604
      %v3821 = vpop.f32.mrb[0].mxu0
      %v3822 = vadd.f32 0.0, %v3821
      %v3823 = vpop.f32.mrb[0].mxu0
      %3824 = vmatprep.mubr.f32.mxu0 0.0
      %3825 = vmatmul.mubr.f32.gmra.mrb[0].mxu0 %v3606
      %v3826 = vpop.f32.mrb[0].mxu0
      %v3827 = vadd.f32 0.0, %v3826
      %v3828 = vpop.f32.mrb[0].mxu0
      %3829 = vmatprep.mubr.f32.mxu0 0.0
      %3830 = vmatmul.mubr.f32.gmra.mrb[0].mxu0 %v3608
      %v3831 = vpop.f32.mrb[0].mxu0
      %v3832 = vadd.f32 0.0, %v3831
      %v3833 = vpop.f32.mrb[0].mxu0
      %3834 = vdwg.mxu0
      %v3835 = vadd.f32 %v3432, %v3677
      %v3836 = vadd.f32 %v3433, %v3682
      %v3837 = vadd.f32 %v3434, %v3687
      %v3838 = vadd.f32 %v3435, %v3692
      %v3839 = vadd.f32 %v3436, %v3697
      %v3840 = vadd.f32 %v3437, %v3702
      %v3841 = vadd.f32 %v3438, %v3707
      %v3842 = vadd.f32 %v3439, %v3712
      %v3843 = vadd.f32 %v3440, %v3717
      %v3844 = vadd.f32 %v3441, %v3722
      %v3845 = vadd.f32 %v3442, %v3727
      %v3846 = vadd.f32 %v3443, %v3732
      %v3847 = vadd.f32 %v3444, %v3737
      %v3848 = vadd.f32 %v3445, %v3742
      %v3849 = vadd.f32 %v3446, %v3747
      %v3850 = vadd.f32 %v3447, %v3752
      %v3851 = vadd.f32 %v3448, %v3757
      %v3852 = vadd.f32 %v3449, %v3762
      %v3853 = vadd.f32 %v3450, %v3767
      %v3854 = vadd.f32 %v3451, %v3772
      %v3855 = vadd.f32 %v3452, %v3777
      %v3856 = vadd.f32 %v3453, %v3782
      %v3857 = vadd.f32 %v3454, %v3787
      %v3858 = vadd.f32 %v3455, %v3792
      %v3859 = vadd.f32 %v3456, %v3797
      %v3860 = vadd.f32 %v3457, %v3802
      %v3861 = vadd.f32 %v3458, %v3807
      %v3862 = vadd.f32 %v3459, %v3812
      %v3863 = vadd.f32 %v3460, %v3817
      %v3864 = vadd.f32 %v3461, %v3822
      %v3865 = vadd.f32 %v3462, %v3827
      %v3866 = vadd.f32 %v3463, %v3832
      %v3867 = vld [vmem:[%s228] sm:$0x1]
      %v3869 = vlaneseq
      %v3870 = vshrl.u32 %v3869, 7
      %v3871 = vsub.s32 0, %v3870
      %v3872 = vrot.slane %v3867, %v3871
      %v3874 = vadd.f32 %v3835, %v3872
      %v3875 = vadd.f32 %v3836, %v3872
      %v3876 = vadd.f32 %v3837, %v3872
      %v3877 = vadd.f32 %v3838, %v3872
      %v3878 = vadd.f32 %v3839, %v3872
      %v3879 = vadd.f32 %v3840, %v3872
      %v3880 = vadd.f32 %v3841, %v3872
      %v3881 = vadd.f32 %v3842, %v3872
      %v3882 = vadd.f32 %v3843, %v3872
      %v3883 = vadd.f32 %v3844, %v3872
      %v3884 = vadd.f32 %v3845, %v3872
      %v3885 = vadd.f32 %v3846, %v3872
      %v3886 = vadd.f32 %v3847, %v3872
      %v3887 = vadd.f32 %v3848, %v3872
      %v3888 = vadd.f32 %v3849, %v3872
      %v3889 = vadd.f32 %v3850, %v3872
      %v3890 = vadd.f32 %v3851, %v3872
      %v3891 = vadd.f32 %v3852, %v3872
      %v3892 = vadd.f32 %v3853, %v3872
      %v3893 = vadd.f32 %v3854, %v3872
      %v3894 = vadd.f32 %v3855, %v3872
      %v3895 = vadd.f32 %v3856, %v3872
      %v3896 = vadd.f32 %v3857, %v3872
      %v3897 = vadd.f32 %v3858, %v3872
      %v3898 = vadd.f32 %v3859, %v3872
      %v3899 = vadd.f32 %v3860, %v3872
      %v3900 = vadd.f32 %v3861, %v3872
      %v3901 = vadd.f32 %v3862, %v3872
      %v3902 = vadd.f32 %v3863, %v3872
      %v3903 = vadd.f32 %v3864, %v3872
      %v3904 = vadd.f32 %v3865, %v3872
      %v3905 = vadd.f32 %v3866, %v3872
      %3906 = vxpose.xlu0.b32.start [1/16] %v3874, 128
      %3907 = vxpose.xlu0.b32.cont [2/16] %v3875, 128
      %3908 = vxpose.xlu0.b32.cont [3/16] %v3876, 128
      %3909 = vxpose.xlu0.b32.cont [4/16] %v3877, 128
      %3910 = vxpose.xlu0.b32.cont [5/16] %v3878, 128
      %3911 = vxpose.xlu0.b32.cont [6/16] %v3879, 128
      %3912 = vxpose.xlu0.b32.cont [7/16] %v3880, 128
      %3913 = vxpose.xlu0.b32.cont [8/16] %v3881, 128
      %3914 = vxpose.xlu0.b32.cont [9/16] %v3882, 128
      %3915 = vxpose.xlu0.b32.cont [10/16] %v3883, 128
      %3916 = vxpose.xlu0.b32.cont [11/16] %v3884, 128
      %3917 = vxpose.xlu0.b32.cont [12/16] %v3885, 128
      %3918 = vxpose.xlu0.b32.cont [13/16] %v3886, 128
      %3919 = vxpose.xlu0.b32.cont [14/16] %v3887, 128
      %3920 = vxpose.xlu0.b32.cont [15/16] %v3888, 128
      %3921 = vxpose.xlu0.b32.end [16/16] %v3889, 128
      %v3922 = vpop.trf.xlu0
      %v3923 = vpop.trf.xlu0
      %v3924 = vpop.trf.xlu0
      %v3925 = vpop.trf.xlu0
      %v3926 = vpop.trf.xlu0
      %v3927 = vpop.trf.xlu0
      %v3928 = vpop.trf.xlu0
      %v3929 = vpop.trf.xlu0
      %v3930 = vpop.trf.xlu0
      %v3931 = vpop.trf.xlu0
      %v3932 = vpop.trf.xlu0
      %v3933 = vpop.trf.xlu0
      %v3934 = vpop.trf.xlu0
      %v3935 = vpop.trf.xlu0
      %v3936 = vpop.trf.xlu0
      %v3937 = vpop.trf.xlu0
      %3938 = vxpose.xlu0.b32.start [1/16] %v3890, 128
      %3939 = vxpose.xlu0.b32.cont [2/16] %v3891, 128
      %3940 = vxpose.xlu0.b32.cont [3/16] %v3892, 128
      %3941 = vxpose.xlu0.b32.cont [4/16] %v3893, 128
      %3942 = vxpose.xlu0.b32.cont [5/16] %v3894, 128
      %3943 = vxpose.xlu0.b32.cont [6/16] %v3895, 128
      %3944 = vxpose.xlu0.b32.cont [7/16] %v3896, 128
      %3945 = vxpose.xlu0.b32.cont [8/16] %v3897, 128
      %3946 = vxpose.xlu0.b32.cont [9/16] %v3898, 128
      %3947 = vxpose.xlu0.b32.cont [10/16] %v3899, 128
      %3948 = vxpose.xlu0.b32.cont [11/16] %v3900, 128
      %3949 = vxpose.xlu0.b32.cont [12/16] %v3901, 128
      %3950 = vxpose.xlu0.b32.cont [13/16] %v3902, 128
      %3951 = vxpose.xlu0.b32.cont [14/16] %v3903, 128
      %3952 = vxpose.xlu0.b32.cont [15/16] %v3904, 128
      %3953 = vxpose.xlu0.b32.end [16/16] %v3905, 128
      %v3954 = vpop.trf.xlu0
      %v3955 = vpop.trf.xlu0
      %v3956 = vpop.trf.xlu0
      %v3957 = vpop.trf.xlu0
      %v3958 = vpop.trf.xlu0
      %v3959 = vpop.trf.xlu0
      %v3960 = vpop.trf.xlu0
      %v3961 = vpop.trf.xlu0
      %v3962 = vpop.trf.xlu0
      %v3963 = vpop.trf.xlu0
      %v3964 = vpop.trf.xlu0
      %v3965 = vpop.trf.xlu0
      %v3966 = vpop.trf.xlu0
      %v3967 = vpop.trf.xlu0
      %v3968 = vpop.trf.xlu0
      %v3969 = vpop.trf.xlu0
      %3970 = vst [vmem:[%s242] sm:$0xff] %v3922
      %3971 = vst [vmem:[%s242 + $0x8] sm:$0xff] %v3954
      %3972 = vst [vmem:[%s242 + $0x10] sm:$0xff] %v3923
      %3973 = vst [vmem:[%s242 + $0x18] sm:$0xff] %v3955
      %3974 = vst [vmem:[%s242 + $0x20] sm:$0xff] %v3924
      %3975 = vst [vmem:[%s242 + $0x28] sm:$0xff] %v3956
      %3976 = vst [vmem:[%s242 + $0x30] sm:$0xff] %v3925
      %3977 = vst [vmem:[%s242 + $0x38] sm:$0xff] %v3957
      %3978 = vst [vmem:[%s242 + $0x40] sm:$0xff] %v3926
      %3979 = vst [vmem:[%s242 + $0x48] sm:$0xff] %v3958
      %3980 = vst [vmem:[%s242 + $0x50] sm:$0xff] %v3927
      %3981 = vst [vmem:[%s242 + $0x58] sm:$0xff] %v3959
      %3982 = vst [vmem:[%s242 + $0x60] sm:$0xff] %v3928
      %3983 = vst [vmem:[%s242 + $0x68] sm:$0xff] %v3960
      %3984 = vst [vmem:[%s242 + $0x70] sm:$0xff] %v3929
      %3985 = vst [vmem:[%s242 + $0x78] sm:$0xff] %v3961
      %3986 = vst [vmem:[%s242 + $0x80] sm:$0xff] %v3930
      %3987 = vst [vmem:[%s242 + $0x88] sm:$0xff] %v3962
      %3988 = vst [vmem:[%s242 + $0x90] sm:$0xff] %v3931
      %3989 = vst [vmem:[%s242 + $0x98] sm:$0xff] %v3963
      %3990 = vst [vmem:[%s242 + $0xa0] sm:$0xff] %v3932
      %3991 = vst [vmem:[%s242 + $0xa8] sm:$0xff] %v3964
      %3992 = vst [vmem:[%s242 + $0xb0] sm:$0xff] %v3933
      %3993 = vst [vmem:[%s242 + $0xb8] sm:$0xff] %v3965
      %3994 = vst [vmem:[%s242 + $0xc0] sm:$0xff] %v3934
      %3995 = vst [vmem:[%s242 + $0xc8] sm:$0xff] %v3966
      %3996 = vst [vmem:[%s242 + $0xd0] sm:$0xff] %v3935
      %3997 = vst [vmem:[%s242 + $0xd8] sm:$0xff] %v3967
      %3998 = vst [vmem:[%s242 + $0xe0] sm:$0xff] %v3936
      %3999 = vst [vmem:[%s242 + $0xe8] sm:$0xff] %v3968
      %4000 = vst [vmem:[%s242 + $0xf0] sm:$0xff] %v3937
      %4001 = vst [vmem:[%s242 + $0xf8] sm:$0xff] %v3969
      %s4002 = smul.u32 16, %s20
      %s4003 = smul.u32 2, %s21
      %p4004 = scmp.lt.s32.totalorder %s19, 1
      %s4005 = scalar_select %p4004, %s19, 1
      %p4006 = scmp.lt.s32.totalorder %s4002, 15
      %s4007 = scalar_select %p4006, %s4002, 15
      %p4008 = scmp.lt.s32.totalorder %s4003, 1
      %s4009 = scalar_select %p4008, %s4003, 1
      %s4010 = smul.addr %s4007, 2
      %s4011 = sadd.s32 %s4009, %s4010
      %s4012 = smul.addr %s4005, 32
      %s4013 = sadd.s32 %s4011, %s4012
      %s4014 = smul.addr %s4013, 8
      %s4015 = scalar_lea.vmem %s3, %s4014
      // Predicated region
      $region33: #{conv2d_pallas.1} parent=31 // pred_check
        %p4016 = pneg %p133
      $region34: #{conv2d_pallas.1} parent=31 // pred_check_branch
        %4018 = sbr.rel (%p4016) target = $region36
      $region35: #{conv2d_pallas.1} parent=31 // pred_region
        %s4019 = smul.u32 16, %s20
        %s4020 = smul.u32 2, %s21
      $region36: #{conv2d_pallas.1} parent=31 // pred_fallthru
        _
    $region32: #{conv2d_pallas.1} parent=5 // pred_fallthru
      _
    %p4021 = scmp.le.s32.totalorder 2, %s9
    // Predicated region
    $region37: #{conv2d_pallas.1} parent=5 // pred_check
      %p4022 = pneg %p4021
    $region38: #{conv2d_pallas.1} parent=5 // pred_check_branch
      %4024 = sbr.rel (%p4022) target = $region40
    $region39: #{conv2d_pallas.1} parent=5 // pred_region
      %s4025 = ssub.s32 %s9, 2
      // Predicated region
      $region41: #{conv2d_pallas.1} parent=39 // pred_check
        %p4026 = pneg %p139
      $region42: #{conv2d_pallas.1} parent=39 // pred_check_branch
        %4028 = sbr.rel (%p4026) target = $region44
      $region43: #{conv2d_pallas.1} parent=39 // pred_region
        %s4029 = smul.u32 16, %s23
        %s4030 = smul.u32 2, %s24
        %p4031 = scmp.lt.s32.totalorder %s22, 1
        %s4032 = scalar_select %p4031, %s22, 1
        %p4033 = scmp.lt.s32.totalorder %s4029, 15
        %s4034 = scalar_select %p4033, %s4029, 15
        %p4035 = scmp.lt.s32.totalorder %s4030, 1
        %s4036 = scalar_select %p4035, %s4030, 1
        %s4037 = smul.addr %s4034, 2
        %s4038 = sadd.s32 %s4036, %s4037
        %s4039 = smul.addr %s4032, 32
        %s4040 = sadd.s32 %s4038, %s4039
        %s4041 = smul.addr %s4040, 8
        %s4042 = scalar_lea.vmem %s3, %s4041
      $region44: #{conv2d_pallas.1} parent=39 // pred_fallthru
        _
    $region40: #{conv2d_pallas.1} parent=5 // pred_fallthru
      _
  $region6: #{conv2d_pallas.1} parent=0 // loop_footer
    %s13 = sadd.s32 1, %s9
  $region7: #{conv2d_pallas.1} parent=0 // loop_footer_branch
    %8 = sbr.rel target = $region3
  $region8: #{conv2d_pallas.1} parent=0 // loop_exit
    _

</llo_original>
